<compile_context>
chip_gen: v5e
topology: v5e:2x2
jax: 0.10.0
libtpu: 0.0.40
codegen_flags: <defaults>
</compile_context>

<pallas_src>
import functools

import jax
import jax.numpy as jnp
from jax.experimental import pallas as pl
from jax.experimental.pallas import tpu as pltpu

# ----------------------------- config ---------------------------------------
NUM_LAYER = 3                 # args.num_layer (>= 2)
EMB_DIM = 32                  # args.emb_dim
HID_DIM = 2 * EMB_DIM         # GIN MLP hidden
NUM_TASKS = 8                 # num_tasks

D_PAD = 128                   # lane-padded feature dim
H_PAD = 128                   # lane-padded hidden dim
T_PAD = 128                   # lane-padded task dim (lane-dense output)

NODES_PER_GRAPH = 16
NODES_PER_BLOCK = 128         # block-diagonal adjacency tile (lane-dense)
NUM_GRAPHS = 32
NUM_NODES = NUM_GRAPHS * NODES_PER_GRAPH            # 512
NUM_BLOCKS = NUM_NODES // NODES_PER_BLOCK            # 4
NUM_EDGES = 1024

# grid: 2 steps -> one per TensorCore on v7x; only one extra ~0.35us step on
# the single-TC v5e/v6e chips (everything below is parametric in NUM_STEPS).
NUM_STEPS = 2
NODES_PER_STEP = NUM_NODES // NUM_STEPS              # 256
BLOCKS_PER_STEP = NUM_BLOCKS // NUM_STEPS            # 2
GRAPHS_PER_STEP = NUM_GRAPHS // NUM_STEPS            # 16

NUM_ATOM_TYPE = 120
NUM_CHIRALITY_TAG = 3
NUM_BOND_TYPE = 6             # index 4 reserved for the self-loop bond type
NUM_BOND_DIRECTION = 3
BN_EPS = 1e-5


# ----------------------------- Pallas kernel --------------------------------
def _gnn_kernel(h0_ref, a_ref, em_ref,
                w1a_ref, w1b_ref, w2_ref, vec_ref,
                p_ref, wp_ref,
                out_ref,
                *, num_layer):
    """One step-block of graphs per grid step (JK='last', mean pooling, eval)."""
    n = NODES_PER_BLOCK
    h = h0_ref[...].astype(jnp.float32)                  # (ns, 128) f32 activations

    for l in range(num_layer):                           # small static unroll
        hb = h.astype(jnp.bfloat16)
        # GIN 'add' aggregation over the block-diagonal adjacency (+ self loops)
        ah = jnp.concatenate(
            [jnp.dot(a_ref[b], hb[b * n:(b + 1) * n, :],
                     preferred_element_type=jnp.float32)
             for b in range(BLOCKS_PER_STEP)], axis=0)   # (ns, 128) f32
        # GIN MLP Linear(D, 2D) with the per-layer edge messages folded in via
        # matmul linearity: (A@h + msg_l) @ W1_l == (A@h)@W1a_l + packed@W1b_l.
        # W1b_l holds layer-l weights at row offset 32*l; other layers' packed
        # lanes hit zero rows, so no masking is needed.
        z = (jnp.dot(ah.astype(jnp.bfloat16), w1a_ref[l],
                     preferred_element_type=jnp.float32)
             + jnp.dot(em_ref[...], w1b_ref[l],
                       preferred_element_type=jnp.float32)
             + vec_ref[pl.ds(l, 1), :])
        z = jnp.maximum(z, 0.0)
        # Linear(2D, D) with eval-mode BatchNorm folded into W2 / b2
        h = (jnp.dot(z.astype(jnp.bfloat16), w2_ref[l],
                     preferred_element_type=jnp.float32)
             + vec_ref[pl.ds(num_layer + l, 1), :])
        # ReLU on every layer except the last (GraphMVP forward); dropout = id (eval)
        if l < num_layer - 1:
            h = jnp.maximum(h, 0.0)

    # global_mean_pool: (g, ns) @ (ns, 128) -> (g, 128)
    g = jnp.dot(p_ref[...], h.astype(jnp.bfloat16),
                preferred_element_type=jnp.float32)
    # graph_pred_linear: (g, 128) @ (128, 128) + bp   (lane-dense store)
    out_ref[...] = (jnp.dot(g.astype(jnp.bfloat16), wp_ref[...],
                            preferred_element_type=jnp.float32)
                    + vec_ref[pl.ds(2 * num_layer, 1), :])


def gnn_graphpred_forward(h0, A, em, W1a, W1b, W2f, vecs, P, Wp):
    n, ns, gs = NODES_PER_BLOCK, NODES_PER_STEP, GRAPHS_PER_STEP
    L = NUM_LAYER

    grid_spec = pltpu.PrefetchScalarGridSpec(
        num_scalar_prefetch=0,
        grid=(NUM_STEPS,),
        in_specs=[
            pl.BlockSpec((None, ns, D_PAD), lambda s: (s, 0, 0)),        # h0 (bf16)
            pl.BlockSpec((None, BLOCKS_PER_STEP, n, n),
                         lambda s: (s, 0, 0, 0)),                        # block-diag A
            pl.BlockSpec((None, ns, D_PAD), lambda s: (s, 0, 0)),        # packed emsg
            pl.BlockSpec((L, D_PAD, H_PAD), lambda s: (0, 0, 0)),        # W1 (rows 0:32)
            pl.BlockSpec((L, D_PAD, H_PAD), lambda s: (0, 0, 0)),        # W1 (rows 32l:)
            pl.BlockSpec((L, H_PAD, D_PAD), lambda s: (0, 0, 0)),        # W2 (BN folded)
            pl.BlockSpec((8, D_PAD), lambda s: (0, 0)),                  # packed biases
            pl.BlockSpec((None, gs, ns), lambda s: (s, 0, 0)),           # mean-pool matrix
            pl.BlockSpec((D_PAD, T_PAD), lambda s: (0, 0)),              # Wp (resident)
        ],
        out_specs=pl.BlockSpec((None, gs, T_PAD), lambda s: (s, 0, 0)),
    )
    out = pl.pallas_call(
        functools.partial(_gnn_kernel, num_layer=NUM_LAYER),
        out_shape=jax.ShapeDtypeStruct((NUM_STEPS, gs, T_PAD), jnp.float32),
        grid_spec=grid_spec,
        compiler_params=pltpu.CompilerParams(
            dimension_semantics=("parallel",)),
    )(h0, A, em, W1a, W1b, W2f, vecs, P, Wp)
    # slice the lane-padded output slab back to (num_graphs, num_tasks)
    return out.reshape(NUM_GRAPHS, T_PAD)[:, :NUM_TASKS]


# ----------------------------- params & inputs ------------------------------
def build_params(key):
    ks = jax.random.split(key, 16)
    D, H, L, T = EMB_DIM, HID_DIM, NUM_LAYER, NUM_TASKS
    scale = 0.1
    return {
        # atom embedding tables (x_embedding1 / x_embedding2)
        "xe1": jax.random.normal(ks[0], (NUM_ATOM_TYPE, D), jnp.float32) * scale,
        "xe2": jax.random.normal(ks[1], (NUM_CHIRALITY_TAG, D), jnp.float32) * scale,
        # per-layer bond embedding tables (edge_embedding1 / edge_embedding2)
        "ee1": jax.random.normal(ks[2], (L, NUM_BOND_TYPE, D), jnp.float32) * scale,
        "ee2": jax.random.normal(ks[3], (L, NUM_BOND_DIRECTION, D), jnp.float32) * scale,
        # per-layer GIN MLP: Linear(D, 2D) -> ReLU -> Linear(2D, D)
        "W1": jax.random.normal(ks[4], (L, D, H), jnp.float32) * scale,
        "b1": jax.random.normal(ks[5], (L, H), jnp.float32) * scale,
        "W2": jax.random.normal(ks[6], (L, H, D), jnp.float32) * scale,
        "b2": jax.random.normal(ks[7], (L, D), jnp.float32) * scale,
        # per-layer BatchNorm1d params / running stats (PyTorch defaults)
        "bn_gamma": jnp.ones((L, D), jnp.float32),
        "bn_beta": jnp.zeros((L, D), jnp.float32),
        "bn_mean": jnp.zeros((L, D), jnp.float32),
        "bn_var": jnp.ones((L, D), jnp.float32),
        # graph_pred_linear (JK != 'concat', mult = 1)
        "Wp": jax.random.normal(ks[8], (D, T), jnp.float32) * scale,
        "bp": jax.random.normal(ks[9], (T,), jnp.float32) * scale,
    }


def build_inputs(key):
    k1, k2, k3, k4, k5, k6 = jax.random.split(key, 6)
    # node features: [atom_type, chirality]
    x = jnp.stack([
        jax.random.randint(k1, (NUM_NODES,), 0, NUM_ATOM_TYPE),
        jax.random.randint(k2, (NUM_NODES,), 0, NUM_CHIRALITY_TAG),
    ], axis=1).astype(jnp.int32)                                   # (N, 2)
    # edges kept inside each graph (so the block-diagonal structure holds)
    src = jax.random.randint(k3, (NUM_EDGES,), 0, NUM_NODES).astype(jnp.int32)
    dst_off = jax.random.randint(k4, (NUM_EDGES,), 0, NODES_PER_GRAPH).astype(jnp.int32)
    dst = (src // NODES_PER_GRAPH) * NODES_PER_GRAPH + dst_off
    edge_index = jnp.stack([src, dst], axis=0)                     # (2, E)
    # edge features: [bond_type (0..3), bond_direction]
    edge_attr = jnp.stack([
        jax.random.randint(k5, (NUM_EDGES,), 0, 4),
        jax.random.randint(k6, (NUM_EDGES,), 0, NUM_BOND_DIRECTION),
    ], axis=1).astype(jnp.int32)                                   # (E, 2)
    batch = (jnp.arange(NUM_NODES, dtype=jnp.int32) // NODES_PER_GRAPH)  # (N,)
    return x, edge_index, edge_attr, batch


def prepare_operands(params, x, edge_index, edge_attr, batch):
    """Sparse -> dense glue + one-time param folding / packing / dtype prep."""
    D, H, L = EMB_DIM, HID_DIM, NUM_LAYER
    assert 2 * L + 1 <= 8, "packed bias slab has 8 rows; needs 2*num_layer + 1"
    assert L * D <= D_PAD, "packed edge-message slab needs num_layer*emb_dim <= 128"
    S, ns, nb, gs = NUM_STEPS, NODES_PER_STEP, NODES_PER_BLOCK, GRAPHS_PER_STEP
    src, dst = edge_index[0], edge_index[1]

    # initial node embeddings, lane-padded, bf16, split into per-step slabs
    h0 = params["xe1"][x[:, 0]] + params["xe2"][x[:, 1]]                    # (N, D)
    h0 = jnp.pad(h0, ((0, 0), (0, D_PAD - D)))
    h0 = h0.reshape(S, ns, D_PAD).astype(jnp.bfloat16)

    # block-diagonal adjacency with self loops: A[k, i, j] = #edges j -> i (+ I)
    blk = dst // nb
    di = dst % nb
    sj = src % nb
    A = jnp.zeros((NUM_BLOCKS, nb, nb), jnp.float32).at[blk, di, sj].add(1.0)
    A = A + jnp.eye(nb, dtype=jnp.float32)[None]
    A = A.reshape(S, BLOCKS_PER_STEP, nb, nb).astype(jnp.bfloat16)  # exact small ints

    # per-layer edge messages (incl. self-loop bond [4, 0]) packed side-by-side
    # along lanes: layer l occupies lanes [32*l, 32*l+32); lanes >= 96 stay zero
    em = jnp.zeros((NUM_NODES, D_PAD), jnp.float32)
    for l in range(L):
        e_emb = params["ee1"][l][edge_attr[:, 0]] + params["ee2"][l][edge_attr[:, 1]]
        m = jnp.zeros((NUM_NODES, D), jnp.float32).at[dst].add(e_emb)
        m = m + (params["ee1"][l][4] + params["ee2"][l][0])[None, :]
        em = em.at[:, l * D:(l + 1) * D].set(m)
    em = em.reshape(S, ns, D_PAD).astype(jnp.bfloat16)

    # fold eval-mode BatchNorm into the second GIN linear
    bn_scale = params["bn_gamma"] / jnp.sqrt(params["bn_var"] + BN_EPS)     # (L, D)
    bn_shift = params["bn_beta"] - params["bn_mean"] * bn_scale
    W2f = params["W2"] * bn_scale[:, None, :]                               # (L, H, D)
    b2f = params["b2"] * bn_scale + bn_shift                                # (L, D)

    # lane-padded bf16 weights.  W1a: real rows at [0:32] (multiplies A@h).
    # W1b: real rows at [32*l : 32*l+32] (picks layer l out of the packed emsg slab).
    W1a = jnp.zeros((L, D_PAD, H_PAD), jnp.float32).at[:, :D, :H].set(params["W1"])
    W1b = jnp.zeros((L, D_PAD, H_PAD), jnp.float32)
    for l in range(L):
        W1b = W1b.at[l, l * D:(l + 1) * D, :H].set(params["W1"][l])
    W2p = jnp.zeros((L, H_PAD, D_PAD), jnp.float32).at[:, :H, :D].set(W2f)
    Wpp = jnp.zeros((D_PAD, T_PAD), jnp.float32).at[:D, :NUM_TASKS].set(params["Wp"])
    W1a = W1a.astype(jnp.bfloat16)
    W1b = W1b.astype(jnp.bfloat16)
    W2p = W2p.astype(jnp.bfloat16)
    Wpp = Wpp.astype(jnp.bfloat16)

    # pack all small bias vectors into one (8, 128) f32 slab:
    #   rows [0, L)   -> b1 per layer       rows [L, 2L) -> BN-folded b2 per layer
    #   row  2L       -> graph_pred_linear bias
    vecs = jnp.zeros((8, D_PAD), jnp.float32)
    vecs = vecs.at[0:L, :H].set(params["b1"])
    vecs = vecs.at[L:2 * L, :D].set(b2f)
    vecs = vecs.at[2 * L, :NUM_TASKS].set(params["bp"])

    # per-step mean-pool matrix (1/count = 1/16 is a power of two -> exact in bf16)
    local_gid = batch.reshape(S, ns) - jnp.arange(S, dtype=jnp.int32)[:, None] * gs
    one_hot = (local_gid[:, None, :] ==
               jnp.arange(gs, dtype=jnp.int32)[None, :, None]).astype(jnp.float32)
    counts = jnp.maximum(one_hot.sum(axis=2, keepdims=True), 1.0)
    P = (one_hot / counts).astype(jnp.bfloat16)                             # (S, gs, ns)

    return h0, A, em, W1a, W1b, W2p, vecs, P, Wpp


# ----------------------------- pure-JAX reference ----------------------------
def reference_forward(params, x, edge_index, edge_attr, batch):
    """f32 reference directly from the raw graph data (flat N x N formulation)."""
    D, L = EMB_DIM, NUM_LAYER
    src, dst = edge_index[0], edge_index[1]
    h = params["xe1"][x[:, 0]] + params["xe2"][x[:, 1]]
    A = jnp.zeros((NUM_NODES, NUM_NODES), jnp.float32).at[dst, src].add(1.0)
    A = A + jnp.eye(NUM_NODES, dtype=jnp.float32)
    bn_scale = params["bn_gamma"] / jnp.sqrt(params["bn_var"] + BN_EPS)
    bn_shift = params["bn_beta"] - params["bn_mean"] * bn_scale
    for l in range(L):
        e_emb = params["ee1"][l][edge_attr[:, 0]] + params["ee2"][l][edge_attr[:, 1]]
        msg = jnp.zeros((NUM_NODES, D), jnp.float32).at[dst].add(e_emb)
        msg = msg + (params["ee1"][l][4] + params["ee2"][l][0])[None, :]
        aggr = A @ h + msg
        z = jnp.maximum(aggr @ params["W1"][l] + params["b1"][l][None, :], 0.0)
        h = z @ params["W2"][l] + params["b2"][l][None, :]
        h = h * bn_scale[l][None, :] + bn_shift[l][None, :]
        if l < L - 1:
            h = jnp.maximum(h, 0.0)
    one_hot = (batch[None, :] == jnp.arange(NUM_GRAPHS)[:, None]).astype(jnp.float32)
    counts = jnp.maximum(one_hot.sum(axis=1, keepdims=True), 1.0)
    g = (one_hot / counts) @ h
    return g @ params["Wp"] + params["bp"][None, :]


# ----------------------------- main ------------------------------------------
if __name__ == "__main__":
    key = jax.random.PRNGKey(0)
    kp, kx = jax.random.split(key)
    params = build_params(kp)
    x, edge_index, edge_attr, batch = build_inputs(kx)

    operands = prepare_operands(params, x, edge_index, edge_attr, batch)
    out = gnn_graphpred_forward(*operands)
    out = jax.block_until_ready(out)

    ref = reference_forward(params, x, edge_index, edge_attr, batch)
    assert out.shape == (NUM_GRAPHS, NUM_TASKS)
    # bf16 MXU operands / bf16 HBM streams (f32 accumulation) -> loose tolerance
    max_diff = float(jnp.max(jnp.abs(out - ref)))
    assert jnp.allclose(out, ref, atol=2e-2, rtol=2e-2), f"mismatch, max|diff|={max_diff}"

    print("KERNEL_OK")
</pallas_src>

<mosaic_0001>
module attributes {stable_mosaic.version = 11 : i64} {
  func.func @_gnn_kernel(%arg0: i32, %arg1: memref<1x256x128xbf16, #tpu.memory_space<vmem>>, %arg2: memref<1x2x128x128xbf16, #tpu.memory_space<vmem>>, %arg3: memref<1x256x128xbf16, #tpu.memory_space<vmem>>, %arg4: memref<3x128x128xbf16, #tpu.memory_space<vmem>>, %arg5: memref<3x128x128xbf16, #tpu.memory_space<vmem>>, %arg6: memref<3x128x128xbf16, #tpu.memory_space<vmem>>, %arg7: memref<8x128xf32, #tpu.memory_space<vmem>>, %arg8: memref<1x16x256xbf16, #tpu.memory_space<vmem>>, %arg9: memref<128x128xbf16, #tpu.memory_space<vmem>>, %arg10: memref<1x16x128xf32, #tpu.memory_space<vmem>>) attributes {dimension_semantics = [#tpu.dimension_semantics<parallel>], iteration_bounds = array<i64: 2>, scalar_prefetch = 0 : i64, scratch_operands = 0 : i64, tpu.core_type = #tpu.core_type<tc>, window_params = [{transform_indices = @transform_0, window_bounds = array<i64: 1, 256, 128>}, {transform_indices = @transform_1, window_bounds = array<i64: 1, 2, 128, 128>}, {transform_indices = @transform_2, window_bounds = array<i64: 1, 256, 128>}, {pipeline_mode = #tpu.pipeline_mode<synchronous>, transform_indices = @transform_3, window_bounds = array<i64: 3, 128, 128>}, {pipeline_mode = #tpu.pipeline_mode<synchronous>, transform_indices = @transform_4, window_bounds = array<i64: 3, 128, 128>}, {pipeline_mode = #tpu.pipeline_mode<synchronous>, transform_indices = @transform_5, window_bounds = array<i64: 3, 128, 128>}, {pipeline_mode = #tpu.pipeline_mode<synchronous>, transform_indices = @transform_6, window_bounds = array<i64: 8, 128>}, {transform_indices = @transform_7, window_bounds = array<i64: 1, 16, 256>}, {pipeline_mode = #tpu.pipeline_mode<synchronous>, transform_indices = @transform_8, window_bounds = array<i64: 128, 128>}, {transform_indices = @transform_9, window_bounds = array<i64: 1, 16, 128>}]} {
    %c0 = arith.constant 0 : index
    %c0_0 = arith.constant 0 : index
    %c0_1 = arith.constant 0 : index
    %0 = vector.load %arg1[%c0, %c0_0, %c0_1] : memref<1x256x128xbf16, #tpu.memory_space<vmem>>, vector<1x256x128xbf16>
    %1 = vector.shape_cast %0 : vector<1x256x128xbf16> to vector<256x128xbf16>
    %2 = arith.extf %1 : vector<256x128xbf16> to vector<256x128xf32>
    %3 = arith.truncf %2 : vector<256x128xf32> to vector<256x128xbf16>
    %c0_2 = arith.constant 0 : index
    %c0_3 = arith.constant 0 : index
    %c0_4 = arith.constant 0 : index
    %c0_5 = arith.constant 0 : index
    %4 = vector.load %arg2[%c0_2, %c0_3, %c0_4, %c0_5] : memref<1x2x128x128xbf16, #tpu.memory_space<vmem>>, vector<1x1x128x128xbf16>
    %5 = vector.shape_cast %4 : vector<1x1x128x128xbf16> to vector<128x128xbf16>
    %6 = vector.extract_strided_slice %3 {offsets = [0, 0], sizes = [128, 128], strides = [1, 1]} : vector<256x128xbf16> to vector<128x128xbf16>
    %cst = arith.constant dense<0.000000e+00> : vector<128x128xf32>
    %7 = tpu.matmul %5, %6, %cst {dimension_numbers = #tpu.dot_dimension_numbers<[1], [0], [0], [1], [0, 0, 1, 1], [], []>} : vector<128x128xbf16>, vector<128x128xbf16>, vector<128x128xf32> -> vector<128x128xf32>
    %c0_6 = arith.constant 0 : index
    %c1 = arith.constant 1 : index
    %c0_7 = arith.constant 0 : index
    %c0_8 = arith.constant 0 : index
    %8 = vector.load %arg2[%c0_6, %c1, %c0_7, %c0_8] : memref<1x2x128x128xbf16, #tpu.memory_space<vmem>>, vector<1x1x128x128xbf16>
    %9 = vector.shape_cast %8 : vector<1x1x128x128xbf16> to vector<128x128xbf16>
    %10 = vector.extract_strided_slice %3 {offsets = [128, 0], sizes = [128, 128], strides = [1, 1]} : vector<256x128xbf16> to vector<128x128xbf16>
    %cst_9 = arith.constant dense<0.000000e+00> : vector<128x128xf32>
    %11 = tpu.matmul %9, %10, %cst_9 {dimension_numbers = #tpu.dot_dimension_numbers<[1], [0], [0], [1], [0, 0, 1, 1], [], []>} : vector<128x128xbf16>, vector<128x128xbf16>, vector<128x128xf32> -> vector<128x128xf32>
    %12 = tpu.concatenate %7, %11 in 0 : vector<128x128xf32>, vector<128x128xf32> -> vector<256x128xf32>
    %13 = arith.truncf %12 : vector<256x128xf32> to vector<256x128xbf16>
    %c0_10 = arith.constant 0 : index
    %c0_11 = arith.constant 0 : index
    %c0_12 = arith.constant 0 : index
    %14 = vector.load %arg4[%c0_10, %c0_11, %c0_12] : memref<3x128x128xbf16, #tpu.memory_space<vmem>>, vector<1x128x128xbf16>
    %15 = vector.shape_cast %14 : vector<1x128x128xbf16> to vector<128x128xbf16>
    %cst_13 = arith.constant dense<0.000000e+00> : vector<256x128xf32>
    %16 = tpu.matmul %13, %15, %cst_13 {dimension_numbers = #tpu.dot_dimension_numbers<[1], [0], [0], [1], [0, 0, 1, 1], [], []>} : vector<256x128xbf16>, vector<128x128xbf16>, vector<256x128xf32> -> vector<256x128xf32>
    %c0_14 = arith.constant 0 : index
    %c0_15 = arith.constant 0 : index
    %c0_16 = arith.constant 0 : index
    %17 = vector.load %arg3[%c0_14, %c0_15, %c0_16] : memref<1x256x128xbf16, #tpu.memory_space<vmem>>, vector<1x256x128xbf16>
    %18 = vector.shape_cast %17 : vector<1x256x128xbf16> to vector<256x128xbf16>
    %c0_17 = arith.constant 0 : index
    %c0_18 = arith.constant 0 : index
    %c0_19 = arith.constant 0 : index
    %19 = vector.load %arg5[%c0_17, %c0_18, %c0_19] : memref<3x128x128xbf16, #tpu.memory_space<vmem>>, vector<1x128x128xbf16>
    %20 = vector.shape_cast %19 : vector<1x128x128xbf16> to vector<128x128xbf16>
    %cst_20 = arith.constant dense<0.000000e+00> : vector<256x128xf32>
    %21 = tpu.matmul %18, %20, %cst_20 {dimension_numbers = #tpu.dot_dimension_numbers<[1], [0], [0], [1], [0, 0, 1, 1], [], []>} : vector<256x128xbf16>, vector<128x128xbf16>, vector<256x128xf32> -> vector<256x128xf32>
    %22 = arith.addf %16, %21 : vector<256x128xf32>
    %c0_21 = arith.constant 0 : index
    %c0_22 = arith.constant 0 : index
    %23 = vector.load %arg7[%c0_21, %c0_22] : memref<8x128xf32, #tpu.memory_space<vmem>>, vector<1x128xf32>
    %24 = vector.broadcast %23 : vector<1x128xf32> to vector<256x128xf32>
    %25 = arith.addf %22, %24 : vector<256x128xf32>
    %cst_23 = arith.constant 0.000000e+00 : f32
    %26 = vector.broadcast %cst_23 : f32 to vector<256x128xf32>
    %27 = arith.maximumf %25, %26 : vector<256x128xf32>
    %28 = arith.truncf %27 : vector<256x128xf32> to vector<256x128xbf16>
    %c0_24 = arith.constant 0 : index
    %c0_25 = arith.constant 0 : index
    %c0_26 = arith.constant 0 : index
    %29 = vector.load %arg6[%c0_24, %c0_25, %c0_26] : memref<3x128x128xbf16, #tpu.memory_space<vmem>>, vector<1x128x128xbf16>
    %30 = vector.shape_cast %29 : vector<1x128x128xbf16> to vector<128x128xbf16>
    %cst_27 = arith.constant dense<0.000000e+00> : vector<256x128xf32>
    %31 = tpu.matmul %28, %30, %cst_27 {dimension_numbers = #tpu.dot_dimension_numbers<[1], [0], [0], [1], [0, 0, 1, 1], [], []>} : vector<256x128xbf16>, vector<128x128xbf16>, vector<256x128xf32> -> vector<256x128xf32>
    %c3 = arith.constant 3 : index
    %c0_28 = arith.constant 0 : index
    %32 = vector.load %arg7[%c3, %c0_28] : memref<8x128xf32, #tpu.memory_space<vmem>>, vector<1x128xf32>
    %33 = vector.broadcast %32 : vector<1x128xf32> to vector<256x128xf32>
    %34 = arith.addf %31, %33 : vector<256x128xf32>
    %cst_29 = arith.constant 0.000000e+00 : f32
    %35 = vector.broadcast %cst_29 : f32 to vector<256x128xf32>
    %36 = arith.maximumf %34, %35 : vector<256x128xf32>
    %37 = arith.truncf %36 : vector<256x128xf32> to vector<256x128xbf16>
    %c0_30 = arith.constant 0 : index
    %c0_31 = arith.constant 0 : index
    %c0_32 = arith.constant 0 : index
    %c0_33 = arith.constant 0 : index
    %38 = vector.load %arg2[%c0_30, %c0_31, %c0_32, %c0_33] : memref<1x2x128x128xbf16, #tpu.memory_space<vmem>>, vector<1x1x128x128xbf16>
    %39 = vector.shape_cast %38 : vector<1x1x128x128xbf16> to vector<128x128xbf16>
    %40 = vector.extract_strided_slice %37 {offsets = [0, 0], sizes = [128, 128], strides = [1, 1]} : vector<256x128xbf16> to vector<128x128xbf16>
    %cst_34 = arith.constant dense<0.000000e+00> : vector<128x128xf32>
    %41 = tpu.matmul %39, %40, %cst_34 {dimension_numbers = #tpu.dot_dimension_numbers<[1], [0], [0], [1], [0, 0, 1, 1], [], []>} : vector<128x128xbf16>, vector<128x128xbf16>, vector<128x128xf32> -> vector<128x128xf32>
    %c0_35 = arith.constant 0 : index
    %c1_36 = arith.constant 1 : index
    %c0_37 = arith.constant 0 : index
    %c0_38 = arith.constant 0 : index
    %42 = vector.load %arg2[%c0_35, %c1_36, %c0_37, %c0_38] : memref<1x2x128x128xbf16, #tpu.memory_space<vmem>>, vector<1x1x128x128xbf16>
    %43 = vector.shape_cast %42 : vector<1x1x128x128xbf16> to vector<128x128xbf16>
    %44 = vector.extract_strided_slice %37 {offsets = [128, 0], sizes = [128, 128], strides = [1, 1]} : vector<256x128xbf16> to vector<128x128xbf16>
    %cst_39 = arith.constant dense<0.000000e+00> : vector<128x128xf32>
    %45 = tpu.matmul %43, %44, %cst_39 {dimension_numbers = #tpu.dot_dimension_numbers<[1], [0], [0], [1], [0, 0, 1, 1], [], []>} : vector<128x128xbf16>, vector<128x128xbf16>, vector<128x128xf32> -> vector<128x128xf32>
    %46 = tpu.concatenate %41, %45 in 0 : vector<128x128xf32>, vector<128x128xf32> -> vector<256x128xf32>
    %47 = arith.truncf %46 : vector<256x128xf32> to vector<256x128xbf16>
    %c1_40 = arith.constant 1 : index
    %c0_41 = arith.constant 0 : index
    %c0_42 = arith.constant 0 : index
    %48 = vector.load %arg4[%c1_40, %c0_41, %c0_42] : memref<3x128x128xbf16, #tpu.memory_space<vmem>>, vector<1x128x128xbf16>
    %49 = vector.shape_cast %48 : vector<1x128x128xbf16> to vector<128x128xbf16>
    %cst_43 = arith.constant dense<0.000000e+00> : vector<256x128xf32>
    %50 = tpu.matmul %47, %49, %cst_43 {dimension_numbers = #tpu.dot_dimension_numbers<[1], [0], [0], [1], [0, 0, 1, 1], [], []>} : vector<256x128xbf16>, vector<128x128xbf16>, vector<256x128xf32> -> vector<256x128xf32>
    %c0_44 = arith.constant 0 : index
    %c0_45 = arith.constant 0 : index
    %c0_46 = arith.constant 0 : index
    %51 = vector.load %arg3[%c0_44, %c0_45, %c0_46] : memref<1x256x128xbf16, #tpu.memory_space<vmem>>, vector<1x256x128xbf16>
    %52 = vector.shape_cast %51 : vector<1x256x128xbf16> to vector<256x128xbf16>
    %c1_47 = arith.constant 1 : index
    %c0_48 = arith.constant 0 : index
    %c0_49 = arith.constant 0 : index
    %53 = vector.load %arg5[%c1_47, %c0_48, %c0_49] : memref<3x128x128xbf16, #tpu.memory_space<vmem>>, vector<1x128x128xbf16>
    %54 = vector.shape_cast %53 : vector<1x128x128xbf16> to vector<128x128xbf16>
    %cst_50 = arith.constant dense<0.000000e+00> : vector<256x128xf32>
    %55 = tpu.matmul %52, %54, %cst_50 {dimension_numbers = #tpu.dot_dimension_numbers<[1], [0], [0], [1], [0, 0, 1, 1], [], []>} : vector<256x128xbf16>, vector<128x128xbf16>, vector<256x128xf32> -> vector<256x128xf32>
    %56 = arith.addf %50, %55 : vector<256x128xf32>
    %c1_51 = arith.constant 1 : index
    %c0_52 = arith.constant 0 : index
    %57 = vector.load %arg7[%c1_51, %c0_52] : memref<8x128xf32, #tpu.memory_space<vmem>>, vector<1x128xf32>
    %58 = vector.broadcast %57 : vector<1x128xf32> to vector<256x128xf32>
    %59 = arith.addf %56, %58 : vector<256x128xf32>
    %cst_53 = arith.constant 0.000000e+00 : f32
    %60 = vector.broadcast %cst_53 : f32 to vector<256x128xf32>
    %61 = arith.maximumf %59, %60 : vector<256x128xf32>
    %62 = arith.truncf %61 : vector<256x128xf32> to vector<256x128xbf16>
    %c1_54 = arith.constant 1 : index
    %c0_55 = arith.constant 0 : index
    %c0_56 = arith.constant 0 : index
    %63 = vector.load %arg6[%c1_54, %c0_55, %c0_56] : memref<3x128x128xbf16, #tpu.memory_space<vmem>>, vector<1x128x128xbf16>
    %64 = vector.shape_cast %63 : vector<1x128x128xbf16> to vector<128x128xbf16>
    %cst_57 = arith.constant dense<0.000000e+00> : vector<256x128xf32>
    %65 = tpu.matmul %62, %64, %cst_57 {dimension_numbers = #tpu.dot_dimension_numbers<[1], [0], [0], [1], [0, 0, 1, 1], [], []>} : vector<256x128xbf16>, vector<128x128xbf16>, vector<256x128xf32> -> vector<256x128xf32>
    %c4 = arith.constant 4 : index
    %c0_58 = arith.constant 0 : index
    %66 = vector.load %arg7[%c4, %c0_58] : memref<8x128xf32, #tpu.memory_space<vmem>>, vector<1x128xf32>
    %67 = vector.broadcast %66 : vector<1x128xf32> to vector<256x128xf32>
    %68 = arith.addf %65, %67 : vector<256x128xf32>
    %cst_59 = arith.constant 0.000000e+00 : f32
    %69 = vector.broadcast %cst_59 : f32 to vector<256x128xf32>
    %70 = arith.maximumf %68, %69 : vector<256x128xf32>
    %71 = arith.truncf %70 : vector<256x128xf32> to vector<256x128xbf16>
    %c0_60 = arith.constant 0 : index
    %c0_61 = arith.constant 0 : index
    %c0_62 = arith.constant 0 : index
    %c0_63 = arith.constant 0 : index
    %72 = vector.load %arg2[%c0_60, %c0_61, %c0_62, %c0_63] : memref<1x2x128x128xbf16, #tpu.memory_space<vmem>>, vector<1x1x128x128xbf16>
    %73 = vector.shape_cast %72 : vector<1x1x128x128xbf16> to vector<128x128xbf16>
    %74 = vector.extract_strided_slice %71 {offsets = [0, 0], sizes = [128, 128], strides = [1, 1]} : vector<256x128xbf16> to vector<128x128xbf16>
    %cst_64 = arith.constant dense<0.000000e+00> : vector<128x128xf32>
    %75 = tpu.matmul %73, %74, %cst_64 {dimension_numbers = #tpu.dot_dimension_numbers<[1], [0], [0], [1], [0, 0, 1, 1], [], []>} : vector<128x128xbf16>, vector<128x128xbf16>, vector<128x128xf32> -> vector<128x128xf32>
    %c0_65 = arith.constant 0 : index
    %c1_66 = arith.constant 1 : index
    %c0_67 = arith.constant 0 : index
    %c0_68 = arith.constant 0 : index
    %76 = vector.load %arg2[%c0_65, %c1_66, %c0_67, %c0_68] : memref<1x2x128x128xbf16, #tpu.memory_space<vmem>>, vector<1x1x128x128xbf16>
    %77 = vector.shape_cast %76 : vector<1x1x128x128xbf16> to vector<128x128xbf16>
    %78 = vector.extract_strided_slice %71 {offsets = [128, 0], sizes = [128, 128], strides = [1, 1]} : vector<256x128xbf16> to vector<128x128xbf16>
    %cst_69 = arith.constant dense<0.000000e+00> : vector<128x128xf32>
    %79 = tpu.matmul %77, %78, %cst_69 {dimension_numbers = #tpu.dot_dimension_numbers<[1], [0], [0], [1], [0, 0, 1, 1], [], []>} : vector<128x128xbf16>, vector<128x128xbf16>, vector<128x128xf32> -> vector<128x128xf32>
    %80 = tpu.concatenate %75, %79 in 0 : vector<128x128xf32>, vector<128x128xf32> -> vector<256x128xf32>
    %81 = arith.truncf %80 : vector<256x128xf32> to vector<256x128xbf16>
    %c2 = arith.constant 2 : index
    %c0_70 = arith.constant 0 : index
    %c0_71 = arith.constant 0 : index
    %82 = vector.load %arg4[%c2, %c0_70, %c0_71] : memref<3x128x128xbf16, #tpu.memory_space<vmem>>, vector<1x128x128xbf16>
    %83 = vector.shape_cast %82 : vector<1x128x128xbf16> to vector<128x128xbf16>
    %cst_72 = arith.constant dense<0.000000e+00> : vector<256x128xf32>
    %84 = tpu.matmul %81, %83, %cst_72 {dimension_numbers = #tpu.dot_dimension_numbers<[1], [0], [0], [1], [0, 0, 1, 1], [], []>} : vector<256x128xbf16>, vector<128x128xbf16>, vector<256x128xf32> -> vector<256x128xf32>
    %c0_73 = arith.constant 0 : index
    %c0_74 = arith.constant 0 : index
    %c0_75 = arith.constant 0 : index
    %85 = vector.load %arg3[%c0_73, %c0_74, %c0_75] : memref<1x256x128xbf16, #tpu.memory_space<vmem>>, vector<1x256x128xbf16>
    %86 = vector.shape_cast %85 : vector<1x256x128xbf16> to vector<256x128xbf16>
    %c2_76 = arith.constant 2 : index
    %c0_77 = arith.constant 0 : index
    %c0_78 = arith.constant 0 : index
    %87 = vector.load %arg5[%c2_76, %c0_77, %c0_78] : memref<3x128x128xbf16, #tpu.memory_space<vmem>>, vector<1x128x128xbf16>
    %88 = vector.shape_cast %87 : vector<1x128x128xbf16> to vector<128x128xbf16>
    %cst_79 = arith.constant dense<0.000000e+00> : vector<256x128xf32>
    %89 = tpu.matmul %86, %88, %cst_79 {dimension_numbers = #tpu.dot_dimension_numbers<[1], [0], [0], [1], [0, 0, 1, 1], [], []>} : vector<256x128xbf16>, vector<128x128xbf16>, vector<256x128xf32> -> vector<256x128xf32>
    %90 = arith.addf %84, %89 : vector<256x128xf32>
    %c2_80 = arith.constant 2 : index
    %c0_81 = arith.constant 0 : index
    %91 = vector.load %arg7[%c2_80, %c0_81] : memref<8x128xf32, #tpu.memory_space<vmem>>, vector<1x128xf32>
    %92 = vector.broadcast %91 : vector<1x128xf32> to vector<256x128xf32>
    %93 = arith.addf %90, %92 : vector<256x128xf32>
    %cst_82 = arith.constant 0.000000e+00 : f32
    %94 = vector.broadcast %cst_82 : f32 to vector<256x128xf32>
    %95 = arith.maximumf %93, %94 : vector<256x128xf32>
    %96 = arith.truncf %95 : vector<256x128xf32> to vector<256x128xbf16>
    %c2_83 = arith.constant 2 : index
    %c0_84 = arith.constant 0 : index
    %c0_85 = arith.constant 0 : index
    %97 = vector.load %arg6[%c2_83, %c0_84, %c0_85] : memref<3x128x128xbf16, #tpu.memory_space<vmem>>, vector<1x128x128xbf16>
    %98 = vector.shape_cast %97 : vector<1x128x128xbf16> to vector<128x128xbf16>
    %cst_86 = arith.constant dense<0.000000e+00> : vector<256x128xf32>
    %99 = tpu.matmul %96, %98, %cst_86 {dimension_numbers = #tpu.dot_dimension_numbers<[1], [0], [0], [1], [0, 0, 1, 1], [], []>} : vector<256x128xbf16>, vector<128x128xbf16>, vector<256x128xf32> -> vector<256x128xf32>
    %c5 = arith.constant 5 : index
    %c0_87 = arith.constant 0 : index
    %100 = vector.load %arg7[%c5, %c0_87] : memref<8x128xf32, #tpu.memory_space<vmem>>, vector<1x128xf32>
    %101 = vector.broadcast %100 : vector<1x128xf32> to vector<256x128xf32>
    %102 = arith.addf %99, %101 : vector<256x128xf32>
    %c0_88 = arith.constant 0 : index
    %c0_89 = arith.constant 0 : index
    %c0_90 = arith.constant 0 : index
    %103 = vector.load %arg8[%c0_88, %c0_89, %c0_90] : memref<1x16x256xbf16, #tpu.memory_space<vmem>>, vector<1x16x256xbf16>
    %104 = vector.shape_cast %103 : vector<1x16x256xbf16> to vector<16x256xbf16>
    %105 = arith.truncf %102 : vector<256x128xf32> to vector<256x128xbf16>
    %cst_91 = arith.constant dense<0.000000e+00> : vector<16x128xf32>
    %106 = tpu.matmul %104, %105, %cst_91 {dimension_numbers = #tpu.dot_dimension_numbers<[1], [0], [0], [1], [0, 0, 1, 1], [], []>} : vector<16x256xbf16>, vector<256x128xbf16>, vector<16x128xf32> -> vector<16x128xf32>
    %107 = arith.truncf %106 : vector<16x128xf32> to vector<16x128xbf16>
    %c0_92 = arith.constant 0 : index
    %c0_93 = arith.constant 0 : index
    %108 = vector.load %arg9[%c0_92, %c0_93] : memref<128x128xbf16, #tpu.memory_space<vmem>>, vector<128x128xbf16>
    %cst_94 = arith.constant dense<0.000000e+00> : vector<16x128xf32>
    %109 = tpu.matmul %107, %108, %cst_94 {dimension_numbers = #tpu.dot_dimension_numbers<[1], [0], [0], [1], [0, 0, 1, 1], [], []>} : vector<16x128xbf16>, vector<128x128xbf16>, vector<16x128xf32> -> vector<16x128xf32>
    %c6 = arith.constant 6 : index
    %c0_95 = arith.constant 0 : index
    %110 = vector.load %arg7[%c6, %c0_95] : memref<8x128xf32, #tpu.memory_space<vmem>>, vector<1x128xf32>
    %111 = vector.broadcast %110 : vector<1x128xf32> to vector<16x128xf32>
    %112 = arith.addf %109, %111 : vector<16x128xf32>
    %c0_96 = arith.constant 0 : index
    %c0_97 = arith.constant 0 : index
    %c0_98 = arith.constant 0 : index
    %113 = vector.load %arg10[%c0_96, %c0_97, %c0_98] : memref<1x16x128xf32, #tpu.memory_space<vmem>>, vector<1x16x128xf32>
    %114 = vector.shape_cast %113 : vector<1x16x128xf32> to vector<16x128xf32>
    %115 = vector.shape_cast %112 : vector<16x128xf32> to vector<1x16x128xf32>
    tpu.vector_store %arg10[%c0_96, %c0_97, %c0_98], %115 {strides = array<i32>} : memref<1x16x128xf32, #tpu.memory_space<vmem>>, vector<1x16x128xf32>,
    return
  }
  func.func @transform_0(%arg0: i32) -> (i32, i32, i32) {
    %c0_i32 = arith.constant 0 : i32
    %c0_i32_0 = arith.constant 0 : i32
    %c0_i32_1 = arith.constant 0 : i32
    return %arg0, %c0_i32, %c0_i32_0 : i32, i32, i32
  }
  func.func @transform_1(%arg0: i32) -> (i32, i32, i32, i32) {
    %c0_i32 = arith.constant 0 : i32
    %c0_i32_0 = arith.constant 0 : i32
    %c0_i32_1 = arith.constant 0 : i32
    %c0_i32_2 = arith.constant 0 : i32
    return %arg0, %c0_i32, %c0_i32_0, %c0_i32_1 : i32, i32, i32, i32
  }
  func.func @transform_2(%arg0: i32) -> (i32, i32, i32) {
    %c0_i32 = arith.constant 0 : i32
    %c0_i32_0 = arith.constant 0 : i32
    %c0_i32_1 = arith.constant 0 : i32
    return %arg0, %c0_i32, %c0_i32_0 : i32, i32, i32
  }
  func.func @transform_3(%arg0: i32) -> (i32, i32, i32) {
    %c0_i32 = arith.constant 0 : i32
    %c0_i32_0 = arith.constant 0 : i32
    %c0_i32_1 = arith.constant 0 : i32
    %c0_i32_2 = arith.constant 0 : i32
    return %c0_i32, %c0_i32_0, %c0_i32_1 : i32, i32, i32
  }
  func.func @transform_4(%arg0: i32) -> (i32, i32, i32) {
    %c0_i32 = arith.constant 0 : i32
    %c0_i32_0 = arith.constant 0 : i32
    %c0_i32_1 = arith.constant 0 : i32
    %c0_i32_2 = arith.constant 0 : i32
    return %c0_i32, %c0_i32_0, %c0_i32_1 : i32, i32, i32
  }
  func.func @transform_5(%arg0: i32) -> (i32, i32, i32) {
    %c0_i32 = arith.constant 0 : i32
    %c0_i32_0 = arith.constant 0 : i32
    %c0_i32_1 = arith.constant 0 : i32
    %c0_i32_2 = arith.constant 0 : i32
    return %c0_i32, %c0_i32_0, %c0_i32_1 : i32, i32, i32
  }
  func.func @transform_6(%arg0: i32) -> (i32, i32) {
    %c0_i32 = arith.constant 0 : i32
    %c0_i32_0 = arith.constant 0 : i32
    %c0_i32_1 = arith.constant 0 : i32
    return %c0_i32, %c0_i32_0 : i32, i32
  }
  func.func @transform_7(%arg0: i32) -> (i32, i32, i32) {
    %c0_i32 = arith.constant 0 : i32
    %c0_i32_0 = arith.constant 0 : i32
    %c0_i32_1 = arith.constant 0 : i32
    return %arg0, %c0_i32, %c0_i32_0 : i32, i32, i32
  }
  func.func @transform_8(%arg0: i32) -> (i32, i32) {
    %c0_i32 = arith.constant 0 : i32
    %c0_i32_0 = arith.constant 0 : i32
    %c0_i32_1 = arith.constant 0 : i32
    return %c0_i32, %c0_i32_0 : i32, i32
  }
  func.func @transform_9(%arg0: i32) -> (i32, i32, i32) {
    %c0_i32 = arith.constant 0 : i32
    %c0_i32_0 = arith.constant 0 : i32
    %c0_i32_1 = arith.constant 0 : i32
    return %arg0, %c0_i32, %c0_i32_0 : i32, i32, i32
  }
}

</mosaic_0001>

<llo_original>
// kernel: tpu_custom_call.1
$region0: #{tpu_custom_call.1}
  #allocation0 [shape = 'u32[]', space=smem, size = 0x4, offset = 0x4, fixed_abs, tag = 'smem constant byte address 0x4 - core index']
  #allocation1 [shape = 'u32[72,128]{1,0:T(1,128)}', space=vmem, size = 0x9000, scoped, tag = 'internal scratch']
  %s0 = inlined_call_operand.hbm [shape: bf16[2,256,128], index: 0, kind: input, shape index: {}]
  %s1 = inlined_call_operand.hbm [shape: bf16[2,2,128,128], index: 1, kind: input, shape index: {}]
  %s2 = inlined_call_operand.hbm [shape: bf16[2,256,128], index: 2, kind: input, shape index: {}]
  %s3 = inlined_call_operand.hbm [shape: bf16[3,128,128], index: 3, kind: input, shape index: {}]
  %s4 = inlined_call_operand.hbm [shape: bf16[3,128,128], index: 4, kind: input, shape index: {}]
  %s5 = inlined_call_operand.hbm [shape: bf16[3,128,128], index: 5, kind: input, shape index: {}]
  %s6 = inlined_call_operand.hbm [shape: f32[8,128], index: 6, kind: input, shape index: {}]
  %s7 = inlined_call_operand.hbm [shape: bf16[2,16,256], index: 7, kind: input, shape index: {}]
  %s8 = inlined_call_operand.hbm [shape: bf16[128,128], index: 8, kind: input, shape index: {}]
  %s9 = inlined_call_operand.hbm [shape: f32[2,16,128], index: 9, kind: output, shape index: {}]
  %s10 = sld [smem:[#allocation0]]
  $region105: #{tpu_custom_call.1} parent=0
    _
  %s12 = ssub.s32 1, %s10
  %s13 = scalar_select 0, %s12, %s10
  $region1: #{tpu_custom_call.1} parent=0
    #allocation2 [shape = 'u8[131072]{0}', space=vmem, size = 0x20000, scoped, tag = 'input window, operand 0']
    #allocation3 [shape = 's32[2]{0}', space=sflag, size = 0x8, scoped, tag = 'scoped memory for tpu_custom_call.1']
    #allocation4 [shape = 's32[2]{0}', space=sflag, size = 0x8, scoped, tag = 'scoped memory for tpu_custom_call.1']
    #allocation5 [shape = 'u8[131072]{0}', space=vmem, size = 0x20000, scoped, tag = 'input window, operand 1']
    #allocation6 [shape = 's32[2]{0}', space=sflag, size = 0x8, scoped, tag = 'scoped memory for tpu_custom_call.1']
    #allocation7 [shape = 'u8[131072]{0}', space=vmem, size = 0x20000, scoped, tag = 'input window, operand 2']
    #allocation8 [shape = 'u8[98304]{0}', space=vmem, size = 0x18000, scoped, tag = 'input window, operand 3, single buffered']
    #allocation9 [shape = 's32[1]{0}', space=sflag, size = 0x4, scoped, tag = 'scoped memory for tpu_custom_call.1']
    #allocation10 [shape = 'u8[98304]{0}', space=vmem, size = 0x18000, scoped, tag = 'input window, operand 4, single buffered']
    #allocation11 [shape = 'u8[98304]{0}', space=vmem, size = 0x18000, scoped, tag = 'input window, operand 5, single buffered']
    #allocation12 [shape = 's32[1]{0}', space=sflag, size = 0x4, scoped, tag = 'scoped memory for tpu_custom_call.1']
    #allocation13 [shape = 'u8[4096]{0}', space=vmem, size = 0x1000, scoped, tag = 'input window, operand 6, single buffered']
    #allocation14 [shape = 'u8[16384]{0}', space=vmem, size = 0x4000, scoped, tag = 'input window, operand 7']
    #allocation15 [shape = 's32[2]{0}', space=sflag, size = 0x8, scoped, tag = 'scoped memory for tpu_custom_call.1']
    #allocation16 [shape = 'u8[32768]{0}', space=vmem, size = 0x8000, scoped, tag = 'input window, operand 8, single buffered']
    #allocation17 [shape = 'u8[16384]{0}', space=vmem, size = 0x4000, scoped, tag = 'output window, operand 0']
    %14 = vsyncpa [#allocation3], 0
    %s15 = scalar_lea.sflag [#allocation3], 1
    %16 = vsyncpa %s15, 0
    %17 = vsyncpa [#allocation6], 0
    %s18 = scalar_lea.sflag [#allocation6], 1
    %19 = vsyncpa %s18, 0
    %20 = vsyncpa [#allocation9], 0
    %21 = vsyncpa [#allocation12], 0
    %22 = vsyncpa [#allocation15], 0
    %s23 = scalar_lea.sflag [#allocation15], 1
    %24 = vsyncpa %s23, 0
    %25 = vsyncpa [#allocation4], 0
    %s26 = scalar_lea.sflag [#allocation4], 1
    %27 = vsyncpa %s26, 0
    loop: start=0, step=1, limit=4
    $region2: #{tpu_custom_call.1} parent=1 // loop_pre_header
      _
    $region3: #{tpu_custom_call.1} parent=1 // loop_header
      %s29 = sphi 0, %s33
      %p30 = scmp.ge.s32.totalorder %s29, 4
      %s39 = sphi 0, %s41
      %s42 = sphi 0, %s39
      %s43 = sphi 0, %s42
      %s59 = sphi 0, %s43
      %s65 = sphi 0, %s67
      %s68 = sphi 0, %s65
      %s69 = sphi 0, %s68
      %s85 = sphi 0, %s69
      %s91 = sphi 0, %s93
      %s94 = sphi 0, %s91
      %s95 = sphi 0, %s94
      %s111 = sphi 0, %s95
      %s115 = sphi 0, %s115
      %s117 = sphi 0, %s115
      %s118 = sphi 0, %s117
      %s132 = sphi 0, %s118
      %s136 = sphi 0, %s136
      %s138 = sphi 0, %s136
      %s139 = sphi 0, %s138
      %s153 = sphi 0, %s139
      %s157 = sphi 0, %s157
      %s159 = sphi 0, %s157
      %s160 = sphi 0, %s159
      %s174 = sphi 0, %s160
      %s178 = sphi 0, %s178
      %s180 = sphi 0, %s178
      %s181 = sphi 0, %s180
      %s195 = sphi 0, %s181
      %s201 = sphi 0, %s203
      %s204 = sphi 0, %s201
      %s205 = sphi 0, %s204
      %s221 = sphi 0, %s205
      %s225 = sphi 0, %s225
      %s227 = sphi 0, %s225
      %s228 = sphi 0, %s227
      %s242 = sphi 0, %s228
      %s248 = sphi 0, %s250
      %s251 = sphi 0, %s248
      %s252 = sphi 0, %s251
      %s268 = sphi 0, %s252
    $region4: #{tpu_custom_call.1} parent=1 // loop_header_branch
      %32 = sbr.rel (%p30) target = $region8
    $region5: #{tpu_custom_call.1} parent=1 // loop_body
      %s34 = ssub.s32 %s29, 1
      %s35 = ssub.s32 %s29, 2
      %s36 = sadd.s32 %s29, 1
      %s37 = ssub.s32 %s29, %s36
      %p38 = scmp.eq.s32.totalorder %s37, 0
      %s40 = sadd.s32 %s39, 1
      %s41 = scalar_select %p38, %s39, %s40
      %p44 = pneg %p38
      %p45 = scmp.eq.s32.totalorder %s29, 1
      %p46 = por %p44, %p45
      %p47 = scmp.ne.s32.totalorder %s39, %s42
      %p48 = scmp.eq.s32.totalorder %s29, 0
      %p49 = por %p47, %p48
      %p50 = scmp.ne.s32.totalorder %s39, %s42
      %p51 = scmp.eq.s32.totalorder %s34, 1
      %p52 = por %p50, %p51
      %p53 = scmp.ne.s32.totalorder %s42, %s43
      %p54 = scmp.eq.s32.totalorder %s34, 0
      %p55 = por %p53, %p54
      %p56 = scmp.ne.s32.totalorder %s42, %s43
      %p57 = scmp.eq.s32.totalorder %s35, 1
      %p58 = por %p56, %p57
      %p60 = scmp.ne.s32.totalorder %s43, %s59
      %p61 = scmp.eq.s32.totalorder %s35, 0
      %p62 = por %p60, %p61
      %s63 = ssub.s32 %s29, %s36
      %p64 = scmp.eq.s32.totalorder %s63, 0
      %s66 = sadd.s32 %s65, 1
      %s67 = scalar_select %p64, %s65, %s66
      %p70 = pneg %p64
      %p71 = scmp.eq.s32.totalorder %s29, 1
      %p72 = por %p70, %p71
      %p73 = scmp.ne.s32.totalorder %s65, %s68
      %p74 = scmp.eq.s32.totalorder %s29, 0
      %p75 = por %p73, %p74
      %p76 = scmp.ne.s32.totalorder %s65, %s68
      %p77 = scmp.eq.s32.totalorder %s34, 1
      %p78 = por %p76, %p77
      %p79 = scmp.ne.s32.totalorder %s68, %s69
      %p80 = scmp.eq.s32.totalorder %s34, 0
      %p81 = por %p79, %p80
      %p82 = scmp.ne.s32.totalorder %s68, %s69
      %p83 = scmp.eq.s32.totalorder %s35, 1
      %p84 = por %p82, %p83
      %p86 = scmp.ne.s32.totalorder %s69, %s85
      %p87 = scmp.eq.s32.totalorder %s35, 0
      %p88 = por %p86, %p87
      %s89 = ssub.s32 %s29, %s36
      %p90 = scmp.eq.s32.totalorder %s89, 0
      %s92 = sadd.s32 %s91, 1
      %s93 = scalar_select %p90, %s91, %s92
      %p96 = pneg %p90
      %p97 = scmp.eq.s32.totalorder %s29, 1
      %p98 = por %p96, %p97
      %p99 = scmp.ne.s32.totalorder %s91, %s94
      %p100 = scmp.eq.s32.totalorder %s29, 0
      %p101 = por %p99, %p100
      %p102 = scmp.ne.s32.totalorder %s91, %s94
      %p103 = scmp.eq.s32.totalorder %s34, 1
      %p104 = por %p102, %p103
      %p105 = scmp.ne.s32.totalorder %s94, %s95
      %p106 = scmp.eq.s32.totalorder %s34, 0
      %p107 = por %p105, %p106
      %p108 = scmp.ne.s32.totalorder %s94, %s95
      %p109 = scmp.eq.s32.totalorder %s35, 1
      %p110 = por %p108, %p109
      %p112 = scmp.ne.s32.totalorder %s95, %s111
      %p113 = scmp.eq.s32.totalorder %s35, 0
      %p114 = por %p112, %p113
      %s116 = sadd.s32 %s115, 1
      %p119 = scmp.eq.s32.totalorder %s29, 1
      %p120 = scmp.ne.s32.totalorder %s115, %s117
      %p121 = scmp.eq.s32.totalorder %s29, 0
      %p122 = por %p120, %p121
      %p123 = scmp.ne.s32.totalorder %s115, %s117
      %p124 = scmp.eq.s32.totalorder %s34, 1
      %p125 = por %p123, %p124
      %p126 = scmp.ne.s32.totalorder %s117, %s118
      %p127 = scmp.eq.s32.totalorder %s34, 0
      %p128 = por %p126, %p127
      %p129 = scmp.ne.s32.totalorder %s117, %s118
      %p130 = scmp.eq.s32.totalorder %s35, 1
      %p131 = por %p129, %p130
      %p133 = scmp.ne.s32.totalorder %s118, %s132
      %p134 = scmp.eq.s32.totalorder %s35, 0
      %p135 = por %p133, %p134
      %s137 = sadd.s32 %s136, 1
      %p140 = scmp.eq.s32.totalorder %s29, 1
      %p141 = scmp.ne.s32.totalorder %s136, %s138
      %p142 = scmp.eq.s32.totalorder %s29, 0
      %p143 = por %p141, %p142
      %p144 = scmp.ne.s32.totalorder %s136, %s138
      %p145 = scmp.eq.s32.totalorder %s34, 1
      %p146 = por %p144, %p145
      %p147 = scmp.ne.s32.totalorder %s138, %s139
      %p148 = scmp.eq.s32.totalorder %s34, 0
      %p149 = por %p147, %p148
      %p150 = scmp.ne.s32.totalorder %s138, %s139
      %p151 = scmp.eq.s32.totalorder %s35, 1
      %p152 = por %p150, %p151
      %p154 = scmp.ne.s32.totalorder %s139, %s153
      %p155 = scmp.eq.s32.totalorder %s35, 0
      %p156 = por %p154, %p155
      %s158 = sadd.s32 %s157, 1
      %p161 = scmp.eq.s32.totalorder %s29, 1
      %p162 = scmp.ne.s32.totalorder %s157, %s159
      %p163 = scmp.eq.s32.totalorder %s29, 0
      %p164 = por %p162, %p163
      %p165 = scmp.ne.s32.totalorder %s157, %s159
      %p166 = scmp.eq.s32.totalorder %s34, 1
      %p167 = por %p165, %p166
      %p168 = scmp.ne.s32.totalorder %s159, %s160
      %p169 = scmp.eq.s32.totalorder %s34, 0
      %p170 = por %p168, %p169
      %p171 = scmp.ne.s32.totalorder %s159, %s160
      %p172 = scmp.eq.s32.totalorder %s35, 1
      %p173 = por %p171, %p172
      %p175 = scmp.ne.s32.totalorder %s160, %s174
      %p176 = scmp.eq.s32.totalorder %s35, 0
      %p177 = por %p175, %p176
      %s179 = sadd.s32 %s178, 1
      %p182 = scmp.eq.s32.totalorder %s29, 1
      %p183 = scmp.ne.s32.totalorder %s178, %s180
      %p184 = scmp.eq.s32.totalorder %s29, 0
      %p185 = por %p183, %p184
      %p186 = scmp.ne.s32.totalorder %s178, %s180
      %p187 = scmp.eq.s32.totalorder %s34, 1
      %p188 = por %p186, %p187
      %p189 = scmp.ne.s32.totalorder %s180, %s181
      %p190 = scmp.eq.s32.totalorder %s34, 0
      %p191 = por %p189, %p190
      %p192 = scmp.ne.s32.totalorder %s180, %s181
      %p193 = scmp.eq.s32.totalorder %s35, 1
      %p194 = por %p192, %p193
      %p196 = scmp.ne.s32.totalorder %s181, %s195
      %p197 = scmp.eq.s32.totalorder %s35, 0
      %p198 = por %p196, %p197
      %s199 = ssub.s32 %s29, %s36
      %p200 = scmp.eq.s32.totalorder %s199, 0
      %s202 = sadd.s32 %s201, 1
      %s203 = scalar_select %p200, %s201, %s202
      %p206 = pneg %p200
      %p207 = scmp.eq.s32.totalorder %s29, 1
      %p208 = por %p206, %p207
      %p209 = scmp.ne.s32.totalorder %s201, %s204
      %p210 = scmp.eq.s32.totalorder %s29, 0
      %p211 = por %p209, %p210
      %p212 = scmp.ne.s32.totalorder %s201, %s204
      %p213 = scmp.eq.s32.totalorder %s34, 1
      %p214 = por %p212, %p213
      %p215 = scmp.ne.s32.totalorder %s204, %s205
      %p216 = scmp.eq.s32.totalorder %s34, 0
      %p217 = por %p215, %p216
      %p218 = scmp.ne.s32.totalorder %s204, %s205
      %p219 = scmp.eq.s32.totalorder %s35, 1
      %p220 = por %p218, %p219
      %p222 = scmp.ne.s32.totalorder %s205, %s221
      %p223 = scmp.eq.s32.totalorder %s35, 0
      %p224 = por %p222, %p223
      %s226 = sadd.s32 %s225, 1
      %p229 = scmp.eq.s32.totalorder %s29, 1
      %p230 = scmp.ne.s32.totalorder %s225, %s227
      %p231 = scmp.eq.s32.totalorder %s29, 0
      %p232 = por %p230, %p231
      %p233 = scmp.ne.s32.totalorder %s225, %s227
      %p234 = scmp.eq.s32.totalorder %s34, 1
      %p235 = por %p233, %p234
      %p236 = scmp.ne.s32.totalorder %s227, %s228
      %p237 = scmp.eq.s32.totalorder %s34, 0
      %p238 = por %p236, %p237
      %p239 = scmp.ne.s32.totalorder %s227, %s228
      %p240 = scmp.eq.s32.totalorder %s35, 1
      %p241 = por %p239, %p240
      %p243 = scmp.ne.s32.totalorder %s228, %s242
      %p244 = scmp.eq.s32.totalorder %s35, 0
      %p245 = por %p243, %p244
      %s246 = ssub.s32 %s29, %s36
      %p247 = scmp.eq.s32.totalorder %s246, 0
      %s249 = sadd.s32 %s248, 1
      %s250 = scalar_select %p247, %s248, %s249
      %p253 = pneg %p247
      %p254 = scmp.eq.s32.totalorder %s29, 1
      %p255 = por %p253, %p254
      %p256 = scmp.ne.s32.totalorder %s248, %s251
      %p257 = scmp.eq.s32.totalorder %s29, 0
      %p258 = por %p256, %p257
      %p259 = scmp.ne.s32.totalorder %s248, %s251
      %p260 = scmp.eq.s32.totalorder %s34, 1
      %p261 = por %p259, %p260
      %p262 = scmp.ne.s32.totalorder %s251, %s252
      %p263 = scmp.eq.s32.totalorder %s34, 0
      %p264 = por %p262, %p263
      %p265 = scmp.ne.s32.totalorder %s251, %s252
      %p266 = scmp.eq.s32.totalorder %s35, 1
      %p267 = por %p265, %p266
      %p269 = scmp.ne.s32.totalorder %s252, %s268
      %p270 = scmp.eq.s32.totalorder %s35, 0
      %p271 = por %p269, %p270
      %p272 = scmp.le.s32.totalorder 1, %s29
      %p273 = scmp.lt.s32.totalorder %s29, 3
      %p274 = pnand %p272, %p273
      %p275 = pneg %p274
      // Predicated region
      $region9: #{tpu_custom_call.1} parent=5 // pred_check
        _
      $region10: #{tpu_custom_call.1} parent=5 // pred_check_branch
        %277 = sbr.rel (%p274) target = $region12
      $region11: #{tpu_custom_call.1} parent=5 // pred_region
        %s278 = ssub.s32 %s29, 1
        // Predicated region
        $region13: #{tpu_custom_call.1} parent=11 // pred_check
          %p279 = pneg %p128
        $region14: #{tpu_custom_call.1} parent=11 // pred_check_branch
          %281 = sbr.rel (%p279) target = $region16
        $region15: #{tpu_custom_call.1} parent=11 // pred_region
          %283 = vsyncadd [#allocation9], 0
          %s284 = sshll.u32 %s3, 4
          %s285 = int_to_ptr.hbm [resolvable:$true] %s284
          %s286 = sshll.u32 [#allocation8], 4
          %s287 = int_to_ptr.vmem [resolvable:$true] %s286
          %292 = dma.hbm_to_vmem [thread:$0]  %s285, 3072, %s287, [#allocation9], 64, 64, 4
        $region16: #{tpu_custom_call.1} parent=11 // pred_fallthru
          _
        // Predicated region
        $region17: #{tpu_custom_call.1} parent=11 // pred_check
          %p293 = pneg %p149
        $region18: #{tpu_custom_call.1} parent=11 // pred_check_branch
          %295 = sbr.rel (%p293) target = $region20
        $region19: #{tpu_custom_call.1} parent=11 // pred_region
          %297 = vsyncadd [#allocation9], 0
          %s298 = sshll.u32 %s4, 4
          %s299 = int_to_ptr.hbm [resolvable:$true] %s298
          %s300 = sshll.u32 [#allocation10], 4
          %s301 = int_to_ptr.vmem [resolvable:$true] %s300
          %306 = dma.hbm_to_vmem [thread:$0]  %s299, 3072, %s301, [#allocation9], 64, 64, 4
        $region20: #{tpu_custom_call.1} parent=11 // pred_fallthru
          _
        // Predicated region
        $region21: #{tpu_custom_call.1} parent=11 // pred_check
          %p307 = pneg %p170
        $region22: #{tpu_custom_call.1} parent=11 // pred_check_branch
          %309 = sbr.rel (%p307) target = $region24
        $region23: #{tpu_custom_call.1} parent=11 // pred_region
          %311 = vsyncadd [#allocation12], 0
          %s312 = sshll.u32 %s5, 4
          %s313 = int_to_ptr.hbm [resolvable:$true] %s312
          %s314 = sshll.u32 [#allocation11], 4
          %s315 = int_to_ptr.vmem [resolvable:$true] %s314
          %320 = dma.hbm_to_vmem [thread:$0]  %s313, 3072, %s315, [#allocation12], 64, 64, 4
        $region24: #{tpu_custom_call.1} parent=11 // pred_fallthru
          _
        // Predicated region
        $region25: #{tpu_custom_call.1} parent=11 // pred_check
          %p321 = pneg %p191
        $region26: #{tpu_custom_call.1} parent=11 // pred_check_branch
          %323 = sbr.rel (%p321) target = $region28
        $region27: #{tpu_custom_call.1} parent=11 // pred_region
          %325 = vsyncadd [#allocation12], 0
          %s327 = sshll.u32 %s6, 4
          %s328 = int_to_ptr.hbm [resolvable:$true] %s327
          %s329 = sshll.u32 [#allocation13], 4
          %s330 = int_to_ptr.vmem [resolvable:$true] %s329
          %332 = dma.hbm_to_vmem [thread:$0]  %s328, 128, %s330, [#allocation12]
        $region28: #{tpu_custom_call.1} parent=11 // pred_fallthru
          _
        // Predicated region
        $region29: #{tpu_custom_call.1} parent=11 // pred_check
          %p333 = pneg %p238
        $region30: #{tpu_custom_call.1} parent=11 // pred_check_branch
          %335 = sbr.rel (%p333) target = $region32
        $region31: #{tpu_custom_call.1} parent=11 // pred_region
          %337 = vsyncadd [#allocation15], 0
          %s338 = sshll.u32 %s8, 4
          %s339 = int_to_ptr.hbm [resolvable:$true] %s338
          %s340 = sshll.u32 [#allocation16], 4
          %s341 = int_to_ptr.vmem [resolvable:$true] %s340
          %346 = dma.hbm_to_vmem [thread:$0]  %s339, 1024, %s341, [#allocation15], 64, 64, 4
        $region32: #{tpu_custom_call.1} parent=11 // pred_fallthru
          _
      $region12: #{tpu_custom_call.1} parent=5 // pred_fallthru
        _
      %p347 = scmp.lt.s32.totalorder %s29, 2
      // Predicated region
      $region33: #{tpu_custom_call.1} parent=5 // pred_check
        %p348 = pneg %p347
      $region34: #{tpu_custom_call.1} parent=5 // pred_check_branch
        %350 = sbr.rel (%p348) target = $region36
      $region35: #{tpu_custom_call.1} parent=5 // pred_region
        // Predicated region
        $region37: #{tpu_custom_call.1} parent=35 // pred_check
          %p351 = pneg %p49
        $region38: #{tpu_custom_call.1} parent=35 // pred_check_branch
          %353 = sbr.rel (%p351) target = $region40
        $region39: #{tpu_custom_call.1} parent=35 // pred_region
          %s354 = sand.u32 %s39, 1
          %s355 = scalar_lea.sflag [#allocation3], %s354
          %s356 = sand.u32 %s39, 1
          %s357 = smul.addr %s356, 128
          %s358 = scalar_lea.vmem [#allocation2], %s357
          %360 = vsyncadd %s355, 0
          %s361 = smul.addr %s29, 32
          %s362 = smul.addr %s361, 4
          %s363 = scalar_lea.hbm %s0, %s362
          %s364 = sshll.u32 %s363, 4
          %s365 = int_to_ptr.hbm [resolvable:$true] %s364
          %s366 = sshll.u32 %s358, 4
          %s367 = int_to_ptr.vmem [resolvable:$true] %s366
          %372 = dma.hbm_to_vmem [thread:$0]  %s365, 2048, %s367, %s355, 64, 64, 4
        $region40: #{tpu_custom_call.1} parent=35 // pred_fallthru
          _
        // Predicated region
        $region41: #{tpu_custom_call.1} parent=35 // pred_check
          %p373 = pneg %p75
        $region42: #{tpu_custom_call.1} parent=35 // pred_check_branch
          %375 = sbr.rel (%p373) target = $region44
        $region43: #{tpu_custom_call.1} parent=35 // pred_region
          %s376 = sand.u32 %s29, 1
          %s377 = scalar_lea.sflag [#allocation6], %s376
          %s378 = sand.u32 %s65, 1
          %s379 = smul.addr %s378, 128
          %s380 = scalar_lea.vmem [#allocation5], %s379
          %382 = vsyncadd %s377, 0
          %s383 = smul.addr %s29, 32
          %s384 = smul.addr %s383, 4
          %s385 = scalar_lea.hbm %s1, %s384
          %s386 = sshll.u32 %s385, 4
          %s387 = int_to_ptr.hbm [resolvable:$true] %s386
          %s388 = sshll.u32 %s380, 4
          %s389 = int_to_ptr.vmem [resolvable:$true] %s388
          %394 = dma.hbm_to_vmem [thread:$0]  %s387, 2048, %s389, %s377, 64, 64, 4
        $region44: #{tpu_custom_call.1} parent=35 // pred_fallthru
          _
        // Predicated region
        $region45: #{tpu_custom_call.1} parent=35 // pred_check
          %p395 = pneg %p101
        $region46: #{tpu_custom_call.1} parent=35 // pred_check_branch
          %397 = sbr.rel (%p395) target = $region48
        $region47: #{tpu_custom_call.1} parent=35 // pred_region
          %s398 = sand.u32 %s29, 1
          %s399 = scalar_lea.sflag [#allocation6], %s398
          %s400 = sand.u32 %s91, 1
          %s401 = smul.addr %s400, 128
          %s402 = scalar_lea.vmem [#allocation7], %s401
          %404 = vsyncadd %s399, 0
          %s405 = smul.addr %s29, 32
          %s406 = smul.addr %s405, 4
          %s407 = scalar_lea.hbm %s2, %s406
          %s408 = sshll.u32 %s407, 4
          %s409 = int_to_ptr.hbm [resolvable:$true] %s408
          %s410 = sshll.u32 %s402, 4
          %s411 = int_to_ptr.vmem [resolvable:$true] %s410
          %416 = dma.hbm_to_vmem [thread:$0]  %s409, 2048, %s411, %s399, 64, 64, 4
        $region48: #{tpu_custom_call.1} parent=35 // pred_fallthru
          _
        // Predicated region
        $region49: #{tpu_custom_call.1} parent=35 // pred_check
          %p417 = pneg %p211
        $region50: #{tpu_custom_call.1} parent=35 // pred_check_branch
          %419 = sbr.rel (%p417) target = $region52
        $region51: #{tpu_custom_call.1} parent=35 // pred_region
          %s420 = sand.u32 %s29, 1
          %s421 = scalar_lea.sflag [#allocation15], %s420
          %s422 = sand.u32 %s201, 1
          %s423 = smul.addr %s422, 16
          %s424 = scalar_lea.vmem [#allocation14], %s423
          %426 = vsyncadd %s421, 0
          %s427 = smul.addr %s29, 4
          %s428 = smul.addr %s427, 4
          %s429 = scalar_lea.hbm %s7, %s428
          %s430 = sshll.u32 %s429, 4
          %s431 = int_to_ptr.hbm [resolvable:$true] %s430
          %s432 = sshll.u32 %s424, 4
          %s433 = int_to_ptr.vmem [resolvable:$true] %s432
          %438 = dma.hbm_to_vmem [thread:$0]  %s431, 256, %s433, %s421, 128, 128, 8
        $region52: #{tpu_custom_call.1} parent=35 // pred_fallthru
          _
      $region36: #{tpu_custom_call.1} parent=5 // pred_fallthru
        _
      %p439 = scmp.le.s32.totalorder 1, %s29
      %p440 = scmp.lt.s32.totalorder %s29, 3
      %p441 = pnand %p439, %p440
      %p442 = pneg %p441
      // Predicated region
      $region53: #{tpu_custom_call.1} parent=5 // pred_check
        _
      $region54: #{tpu_custom_call.1} parent=5 // pred_check_branch
        %444 = sbr.rel (%p441) target = $region56
      $region55: #{tpu_custom_call.1} parent=5 // pred_region
        %s445 = ssub.s32 %s29, 1
        %s446 = sand.u32 %s42, 1
        %s447 = scalar_lea.sflag [#allocation3], %s446
        %s448 = sand.u32 %s42, 1
        %s449 = smul.addr %s448, 128
        %s450 = scalar_lea.vmem [#allocation2], %s449
        // Predicated region
        $region57: #{tpu_custom_call.1} parent=55 // pred_check
          %p451 = pneg %p55
        $region58: #{tpu_custom_call.1} parent=55 // pred_check_branch
          %453 = sbr.rel (%p451) target = $region60
        $region59: #{tpu_custom_call.1} parent=55 // pred_region
          %455 = dma.done %s447, 2048
        $region60: #{tpu_custom_call.1} parent=55 // pred_fallthru
          _
        %s456 = sand.u32 %s34, 1
        %s457 = scalar_lea.sflag [#allocation6], %s456
        %s458 = sand.u32 %s68, 1
        %s459 = smul.addr %s458, 128
        %s460 = scalar_lea.vmem [#allocation5], %s459
        // Predicated region
        $region61: #{tpu_custom_call.1} parent=55 // pred_check
          %p461 = pneg %p81
        $region62: #{tpu_custom_call.1} parent=55 // pred_check_branch
          %463 = sbr.rel (%p461) target = $region64
        $region63: #{tpu_custom_call.1} parent=55 // pred_region
          %465 = dma.done %s457, 2048
        $region64: #{tpu_custom_call.1} parent=55 // pred_fallthru
          _
        %s466 = sand.u32 %s34, 1
        %s467 = scalar_lea.sflag [#allocation6], %s466
        %s468 = sand.u32 %s94, 1
        %s469 = smul.addr %s468, 128
        %s470 = scalar_lea.vmem [#allocation7], %s469
        // Predicated region
        $region65: #{tpu_custom_call.1} parent=55 // pred_check
          %p471 = pneg %p107
        $region66: #{tpu_custom_call.1} parent=55 // pred_check_branch
          %473 = sbr.rel (%p471) target = $region68
        $region67: #{tpu_custom_call.1} parent=55 // pred_region
          %475 = dma.done %s467, 2048
        $region68: #{tpu_custom_call.1} parent=55 // pred_fallthru
          _
        // Predicated region
        $region69: #{tpu_custom_call.1} parent=55 // pred_check
          %p476 = pneg %p128
        $region70: #{tpu_custom_call.1} parent=55 // pred_check_branch
          %478 = sbr.rel (%p476) target = $region72
        $region71: #{tpu_custom_call.1} parent=55 // pred_region
          %480 = dma.done [#allocation9], 3072
        $region72: #{tpu_custom_call.1} parent=55 // pred_fallthru
          _
        // Predicated region
        $region73: #{tpu_custom_call.1} parent=55 // pred_check
          %p481 = pneg %p149
        $region74: #{tpu_custom_call.1} parent=55 // pred_check_branch
          %483 = sbr.rel (%p481) target = $region76
        $region75: #{tpu_custom_call.1} parent=55 // pred_region
          %485 = dma.done [#allocation9], 3072
        $region76: #{tpu_custom_call.1} parent=55 // pred_fallthru
          _
        // Predicated region
        $region77: #{tpu_custom_call.1} parent=55 // pred_check
          %p486 = pneg %p170
        $region78: #{tpu_custom_call.1} parent=55 // pred_check_branch
          %488 = sbr.rel (%p486) target = $region80
        $region79: #{tpu_custom_call.1} parent=55 // pred_region
          %490 = dma.done [#allocation12], 3072
        $region80: #{tpu_custom_call.1} parent=55 // pred_fallthru
          _
        // Predicated region
        $region81: #{tpu_custom_call.1} parent=55 // pred_check
          %p491 = pneg %p191
        $region82: #{tpu_custom_call.1} parent=55 // pred_check_branch
          %493 = sbr.rel (%p491) target = $region84
        $region83: #{tpu_custom_call.1} parent=55 // pred_region
          %495 = dma.done [#allocation12], 128
        $region84: #{tpu_custom_call.1} parent=55 // pred_fallthru
          _
        %s496 = sand.u32 %s34, 1
        %s497 = scalar_lea.sflag [#allocation15], %s496
        %s498 = sand.u32 %s204, 1
        %s499 = smul.addr %s498, 16
        %s500 = scalar_lea.vmem [#allocation14], %s499
        // Predicated region
        $region85: #{tpu_custom_call.1} parent=55 // pred_check
          %p501 = pneg %p217
        $region86: #{tpu_custom_call.1} parent=55 // pred_check_branch
          %503 = sbr.rel (%p501) target = $region88
        $region87: #{tpu_custom_call.1} parent=55 // pred_region
          %505 = dma.done %s497, 256
        $region88: #{tpu_custom_call.1} parent=55 // pred_fallthru
          _
        // Predicated region
        $region89: #{tpu_custom_call.1} parent=55 // pred_check
          %p506 = pneg %p238
        $region90: #{tpu_custom_call.1} parent=55 // pred_check_branch
          %508 = sbr.rel (%p506) target = $region92
        $region91: #{tpu_custom_call.1} parent=55 // pred_region
          %510 = dma.done [#allocation15], 1024
        $region92: #{tpu_custom_call.1} parent=55 // pred_fallthru
          _
        %s511 = sand.u32 %s42, 1
        %s512 = scalar_lea.sflag [#allocation3], %s511
        %s513 = sand.u32 %s42, 1
        %s514 = smul.addr %s513, 128
        %s515 = scalar_lea.vmem [#allocation2], %s514
        %p516 = pneg %p55
        %p517 = pneg %p52
        %s518 = sand.u32 %s34, 1
        %s519 = scalar_lea.sflag [#allocation6], %s518
        %s520 = sand.u32 %s68, 1
        %s521 = smul.addr %s520, 128
        %s522 = scalar_lea.vmem [#allocation5], %s521
        %p523 = pneg %p81
        %p524 = pneg %p78
        %s525 = sand.u32 %s34, 1
        %s526 = scalar_lea.sflag [#allocation6], %s525
        %s527 = sand.u32 %s94, 1
        %s528 = smul.addr %s527, 128
        %s529 = scalar_lea.vmem [#allocation7], %s528
        %p530 = pneg %p107
        %p531 = pneg %p104
        %p532 = pneg %p128
        %p533 = pneg %p125
        %p534 = pneg %p149
        %p535 = pneg %p146
        %p536 = pneg %p170
        %p537 = pneg %p167
        %p538 = pneg %p191
        %p539 = pneg %p188
        %s540 = sand.u32 %s34, 1
        %s541 = scalar_lea.sflag [#allocation15], %s540
        %s542 = sand.u32 %s204, 1
        %s543 = smul.addr %s542, 16
        %s544 = scalar_lea.vmem [#allocation14], %s543
        %p545 = pneg %p217
        %p546 = pneg %p214
        %p547 = pneg %p238
        %p548 = pneg %p235
        %p549 = pneg %p264
        %p550 = pneg %p261
        %s551 = sand.u32 %s251, 1
        %s552 = scalar_lea.sflag [#allocation4], %s551
        %s553 = sand.u32 %s251, 1
        %s554 = smul.addr %s553, 16
        %s555 = scalar_lea.vmem [#allocation17], %s554
        %v556 = vld [vmem:[%s450] sm:$0xf]
        %v557 = vld [vmem:[%s450 + $0x4] sm:$0xf]
        %v558 = vld [vmem:[%s450 + $0x8] sm:$0xf]
        %v559 = vld [vmem:[%s450 + $0xc] sm:$0xf]
        %v560 = vld [vmem:[%s450 + $0x10] sm:$0xf]
        %v561 = vld [vmem:[%s450 + $0x14] sm:$0xf]
        %v562 = vld [vmem:[%s450 + $0x18] sm:$0xf]
        %v563 = vld [vmem:[%s450 + $0x1c] sm:$0xf]
        %v564 = vld [vmem:[%s450 + $0x20] sm:$0xf]
        %v565 = vld [vmem:[%s450 + $0x24] sm:$0xf]
        %v566 = vld [vmem:[%s450 + $0x28] sm:$0xf]
        %v567 = vld [vmem:[%s450 + $0x2c] sm:$0xf]
        %v568 = vld [vmem:[%s450 + $0x30] sm:$0xf]
        %v569 = vld [vmem:[%s450 + $0x34] sm:$0xf]
        %v570 = vld [vmem:[%s450 + $0x38] sm:$0xf]
        %v571 = vld [vmem:[%s450 + $0x3c] sm:$0xf]
        %v572 = vld [vmem:[%s450 + $0x40] sm:$0xf]
        %v573 = vld [vmem:[%s450 + $0x44] sm:$0xf]
        %v574 = vld [vmem:[%s450 + $0x48] sm:$0xf]
        %v575 = vld [vmem:[%s450 + $0x4c] sm:$0xf]
        %v576 = vld [vmem:[%s450 + $0x50] sm:$0xf]
        %v577 = vld [vmem:[%s450 + $0x54] sm:$0xf]
        %v578 = vld [vmem:[%s450 + $0x58] sm:$0xf]
        %v579 = vld [vmem:[%s450 + $0x5c] sm:$0xf]
        %v580 = vld [vmem:[%s450 + $0x60] sm:$0xf]
        %v581 = vld [vmem:[%s450 + $0x64] sm:$0xf]
        %v582 = vld [vmem:[%s450 + $0x68] sm:$0xf]
        %v583 = vld [vmem:[%s450 + $0x6c] sm:$0xf]
        %v584 = vld [vmem:[%s450 + $0x70] sm:$0xf]
        %v585 = vld [vmem:[%s450 + $0x74] sm:$0xf]
        %v586 = vld [vmem:[%s450 + $0x78] sm:$0xf]
        %v587 = vld [vmem:[%s450 + $0x7c] sm:$0xf]
        %v588 = vld [vmem:[%s460] sm:$0xf]
        %v589 = vld [vmem:[%s460 + $0x4] sm:$0xf]
        %v590 = vld [vmem:[%s460 + $0x8] sm:$0xf]
        %v591 = vld [vmem:[%s460 + $0xc] sm:$0xf]
        %v592 = vld [vmem:[%s460 + $0x10] sm:$0xf]
        %v593 = vld [vmem:[%s460 + $0x14] sm:$0xf]
        %v594 = vld [vmem:[%s460 + $0x18] sm:$0xf]
        %v595 = vld [vmem:[%s460 + $0x1c] sm:$0xf]
        %v596 = vld [vmem:[%s460 + $0x20] sm:$0xf]
        %v597 = vld [vmem:[%s460 + $0x24] sm:$0xf]
        %v598 = vld [vmem:[%s460 + $0x28] sm:$0xf]
        %v599 = vld [vmem:[%s460 + $0x2c] sm:$0xf]
        %v600 = vld [vmem:[%s460 + $0x30] sm:$0xf]
        %v601 = vld [vmem:[%s460 + $0x34] sm:$0xf]
        %v602 = vld [vmem:[%s460 + $0x38] sm:$0xf]
        %v603 = vld [vmem:[%s460 + $0x3c] sm:$0xf]
        %v620 = vunpack.c.l.b16 %v588
        %v621 = vunpack.c.l.b16 %v589
        %v622 = vunpack.c.l.b16 %v590
        %v623 = vunpack.c.l.b16 %v591
        %v624 = vunpack.c.l.b16 %v592
        %v625 = vunpack.c.l.b16 %v593
        %v626 = vunpack.c.l.b16 %v594
        %v627 = vunpack.c.l.b16 %v595
        %v628 = vunpack.c.l.b16 %v596
        %v629 = vunpack.c.l.b16 %v597
        %v630 = vunpack.c.l.b16 %v598
        %v631 = vunpack.c.l.b16 %v599
        %v632 = vunpack.c.l.b16 %v600
        %v633 = vunpack.c.l.b16 %v601
        %v634 = vunpack.c.l.b16 %v602
        %v635 = vunpack.c.l.b16 %v603
        %v636 = vpack.c.b16 %v621, %v620
        %v637 = vpack.c.b16 %v623, %v622
        %v638 = vpack.c.b16 %v625, %v624
        %v639 = vpack.c.b16 %v627, %v626
        %v640 = vpack.c.b16 %v629, %v628
        %v641 = vpack.c.b16 %v631, %v630
        %v642 = vpack.c.b16 %v633, %v632
        %v643 = vpack.c.b16 %v635, %v634
        %v668 = vunpack.c.l.b16 %v556
        %v669 = vunpack.c.l.b16 %v557
        %v670 = vunpack.c.l.b16 %v558
        %v671 = vunpack.c.l.b16 %v559
        %v672 = vunpack.c.l.b16 %v560
        %v673 = vunpack.c.l.b16 %v561
        %v674 = vunpack.c.l.b16 %v562
        %v675 = vunpack.c.l.b16 %v563
        %v676 = vunpack.c.l.b16 %v564
        %v677 = vunpack.c.l.b16 %v565
        %v678 = vunpack.c.l.b16 %v566
        %v679 = vunpack.c.l.b16 %v567
        %v680 = vunpack.c.l.b16 %v568
        %v681 = vunpack.c.l.b16 %v569
        %v682 = vunpack.c.l.b16 %v570
        %v683 = vunpack.c.l.b16 %v571
        %v684 = vpack.c.b16 %v669, %v668
        %v685 = vpack.c.b16 %v671, %v670
        %v686 = vpack.c.b16 %v673, %v672
        %v687 = vpack.c.b16 %v675, %v674
        %v688 = vpack.c.b16 %v677, %v676
        %v689 = vpack.c.b16 %v679, %v678
        %v690 = vpack.c.b16 %v681, %v680
        %v691 = vpack.c.b16 %v683, %v682
        %700 = vmatpush.bf16.msra.mxu0 %v691
        %701 = vmatpush.bf16.msra.mxu0 %v690
        %702 = vmatpush.bf16.msra.mxu0 %v689
        %703 = vmatpush.bf16.msra.mxu0 %v688
        %704 = vmatpush.bf16.msra.mxu0 %v687
        %705 = vmatpush.bf16.msra.mxu0 %v686
        %706 = vmatpush.bf16.msra.mxu0 %v685
        %707 = vmatpush.bf16.msra.mxu0 %v684
        %708 = vmatmul.bf16.gmra.mxu0 %v636
        %v709 = vpop.f32.mrf.mxu0
        %v710 = vadd.f32 0.0, %v709
        %v711 = vpop.f32.mrf.mxu0
        %v712 = vadd.f32 0.0, %v711
        %713 = vmatmul.bf16.gmra.mxu0 %v637
        %v714 = vpop.f32.mrf.mxu0
        %v715 = vadd.f32 0.0, %v714
        %v716 = vpop.f32.mrf.mxu0
        %v717 = vadd.f32 0.0, %v716
        %718 = vmatmul.bf16.gmra.mxu0 %v638
        %v719 = vpop.f32.mrf.mxu0
        %v720 = vadd.f32 0.0, %v719
        %v721 = vpop.f32.mrf.mxu0
        %v722 = vadd.f32 0.0, %v721
        %723 = vmatmul.bf16.gmra.mxu0 %v639
        %v724 = vpop.f32.mrf.mxu0
        %v725 = vadd.f32 0.0, %v724
        %v726 = vpop.f32.mrf.mxu0
        %v727 = vadd.f32 0.0, %v726
        %728 = vmatmul.bf16.gmra.mxu0 %v640
        %v729 = vpop.f32.mrf.mxu0
        %v730 = vadd.f32 0.0, %v729
        %v731 = vpop.f32.mrf.mxu0
        %v732 = vadd.f32 0.0, %v731
        %733 = vmatmul.bf16.gmra.mxu0 %v641
        %v734 = vpop.f32.mrf.mxu0
        %v735 = vadd.f32 0.0, %v734
        %v736 = vpop.f32.mrf.mxu0
        %v737 = vadd.f32 0.0, %v736
        %738 = vmatmul.bf16.gmra.mxu0 %v642
        %v739 = vpop.f32.mrf.mxu0
        %v740 = vadd.f32 0.0, %v739
        %v741 = vpop.f32.mrf.mxu0
        %v742 = vadd.f32 0.0, %v741
        %743 = vmatmul.bf16.gmra.mxu0 %v643
        %v744 = vpop.f32.mrf.mxu0
        %v745 = vadd.f32 0.0, %v744
        %v746 = vpop.f32.mrf.mxu0
        %v747 = vadd.f32 0.0, %v746
        %748 = vdwg.mxu0
        %s749 = scalar_lea.vmem %s460, 64 [#allocation5]
        %v750 = vld [vmem:[%s749] sm:$0xf]
        %v751 = vld [vmem:[%s749 + $0x4] sm:$0xf]
        %v752 = vld [vmem:[%s749 + $0x8] sm:$0xf]
        %v753 = vld [vmem:[%s749 + $0xc] sm:$0xf]
        %v754 = vld [vmem:[%s749 + $0x10] sm:$0xf]
        %v755 = vld [vmem:[%s749 + $0x14] sm:$0xf]
        %v756 = vld [vmem:[%s749 + $0x18] sm:$0xf]
        %v757 = vld [vmem:[%s749 + $0x1c] sm:$0xf]
        %v758 = vld [vmem:[%s749 + $0x20] sm:$0xf]
        %v759 = vld [vmem:[%s749 + $0x24] sm:$0xf]
        %v760 = vld [vmem:[%s749 + $0x28] sm:$0xf]
        %v761 = vld [vmem:[%s749 + $0x2c] sm:$0xf]
        %v762 = vld [vmem:[%s749 + $0x30] sm:$0xf]
        %v763 = vld [vmem:[%s749 + $0x34] sm:$0xf]
        %v764 = vld [vmem:[%s749 + $0x38] sm:$0xf]
        %v765 = vld [vmem:[%s749 + $0x3c] sm:$0xf]
        %v782 = vunpack.c.l.b16 %v750
        %v783 = vunpack.c.l.b16 %v751
        %v784 = vunpack.c.l.b16 %v752
        %v785 = vunpack.c.l.b16 %v753
        %v786 = vunpack.c.l.b16 %v754
        %v787 = vunpack.c.l.b16 %v755
        %v788 = vunpack.c.l.b16 %v756
        %v789 = vunpack.c.l.b16 %v757
        %v790 = vunpack.c.l.b16 %v758
        %v791 = vunpack.c.l.b16 %v759
        %v792 = vunpack.c.l.b16 %v760
        %v793 = vunpack.c.l.b16 %v761
        %v794 = vunpack.c.l.b16 %v762
        %v795 = vunpack.c.l.b16 %v763
        %v796 = vunpack.c.l.b16 %v764
        %v797 = vunpack.c.l.b16 %v765
        %v798 = vpack.c.b16 %v783, %v782
        %v799 = vpack.c.b16 %v785, %v784
        %v800 = vpack.c.b16 %v787, %v786
        %v801 = vpack.c.b16 %v789, %v788
        %v802 = vpack.c.b16 %v791, %v790
        %v803 = vpack.c.b16 %v793, %v792
        %v804 = vpack.c.b16 %v795, %v794
        %v805 = vpack.c.b16 %v797, %v796
        %v830 = vunpack.c.l.b16 %v572
        %v831 = vunpack.c.l.b16 %v573
        %v832 = vunpack.c.l.b16 %v574
        %v833 = vunpack.c.l.b16 %v575
        %v834 = vunpack.c.l.b16 %v576
        %v835 = vunpack.c.l.b16 %v577
        %v836 = vunpack.c.l.b16 %v578
        %v837 = vunpack.c.l.b16 %v579
        %v838 = vunpack.c.l.b16 %v580
        %v839 = vunpack.c.l.b16 %v581
        %v840 = vunpack.c.l.b16 %v582
        %v841 = vunpack.c.l.b16 %v583
        %v842 = vunpack.c.l.b16 %v584
        %v843 = vunpack.c.l.b16 %v585
        %v844 = vunpack.c.l.b16 %v586
        %v845 = vunpack.c.l.b16 %v587
        %v846 = vpack.c.b16 %v831, %v830
        %v847 = vpack.c.b16 %v833, %v832
        %v848 = vpack.c.b16 %v835, %v834
        %v849 = vpack.c.b16 %v837, %v836
        %v850 = vpack.c.b16 %v839, %v838
        %v851 = vpack.c.b16 %v841, %v840
        %v852 = vpack.c.b16 %v843, %v842
        %v853 = vpack.c.b16 %v845, %v844
        %862 = vmatpush.bf16.msra.mxu0 %v853
        %863 = vmatpush.bf16.msra.mxu0 %v852
        %864 = vmatpush.bf16.msra.mxu0 %v851
        %865 = vmatpush.bf16.msra.mxu0 %v850
        %866 = vmatpush.bf16.msra.mxu0 %v849
        %867 = vmatpush.bf16.msra.mxu0 %v848
        %868 = vmatpush.bf16.msra.mxu0 %v847
        %869 = vmatpush.bf16.msra.mxu0 %v846
        %870 = vmatmul.bf16.gmra.mxu0 %v798
        %v871 = vpop.f32.mrf.mxu0
        %v872 = vadd.f32 0.0, %v871
        %v873 = vpop.f32.mrf.mxu0
        %v874 = vadd.f32 0.0, %v873
        %875 = vmatmul.bf16.gmra.mxu0 %v799
        %v876 = vpop.f32.mrf.mxu0
        %v877 = vadd.f32 0.0, %v876
        %v878 = vpop.f32.mrf.mxu0
        %v879 = vadd.f32 0.0, %v878
        %880 = vmatmul.bf16.gmra.mxu0 %v800
        %v881 = vpop.f32.mrf.mxu0
        %v882 = vadd.f32 0.0, %v881
        %v883 = vpop.f32.mrf.mxu0
        %v884 = vadd.f32 0.0, %v883
        %885 = vmatmul.bf16.gmra.mxu0 %v801
        %v886 = vpop.f32.mrf.mxu0
        %v887 = vadd.f32 0.0, %v886
        %v888 = vpop.f32.mrf.mxu0
        %v889 = vadd.f32 0.0, %v888
        %890 = vmatmul.bf16.gmra.mxu0 %v802
        %v891 = vpop.f32.mrf.mxu0
        %v892 = vadd.f32 0.0, %v891
        %v893 = vpop.f32.mrf.mxu0
        %v894 = vadd.f32 0.0, %v893
        %895 = vmatmul.bf16.gmra.mxu0 %v803
        %v896 = vpop.f32.mrf.mxu0
        %v897 = vadd.f32 0.0, %v896
        %v898 = vpop.f32.mrf.mxu0
        %v899 = vadd.f32 0.0, %v898
        %900 = vmatmul.bf16.gmra.mxu0 %v804
        %v901 = vpop.f32.mrf.mxu0
        %v902 = vadd.f32 0.0, %v901
        %v903 = vpop.f32.mrf.mxu0
        %v904 = vadd.f32 0.0, %v903
        %905 = vmatmul.bf16.gmra.mxu0 %v805
        %v906 = vpop.f32.mrf.mxu0
        %v907 = vadd.f32 0.0, %v906
        %v908 = vpop.f32.mrf.mxu0
        %v909 = vadd.f32 0.0, %v908
        %910 = vdwg.mxu0
        %v911 = vpack.c.bf16 %v712, %v710
        %v912 = vpack.c.bf16 %v717, %v715
        %v913 = vpack.c.bf16 %v722, %v720
        %v914 = vpack.c.bf16 %v727, %v725
        %v915 = vpack.c.bf16 %v732, %v730
        %v916 = vpack.c.bf16 %v737, %v735
        %v917 = vpack.c.bf16 %v742, %v740
        %v918 = vpack.c.bf16 %v747, %v745
        %v919 = vpack.c.bf16 %v874, %v872
        %v920 = vpack.c.bf16 %v879, %v877
        %v921 = vpack.c.bf16 %v884, %v882
        %v922 = vpack.c.bf16 %v889, %v887
        %v923 = vpack.c.bf16 %v894, %v892
        %v924 = vpack.c.bf16 %v899, %v897
        %v925 = vpack.c.bf16 %v904, %v902
        %v926 = vpack.c.bf16 %v909, %v907
        %v927 = vld [vmem:[#allocation8] sm:$0xf]
        %v928 = vld [vmem:[#allocation8 + $0x4] sm:$0xf]
        %v929 = vld [vmem:[#allocation8 + $0x8] sm:$0xf]
        %v930 = vld [vmem:[#allocation8 + $0xc] sm:$0xf]
        %v931 = vld [vmem:[#allocation8 + $0x10] sm:$0xf]
        %v932 = vld [vmem:[#allocation8 + $0x14] sm:$0xf]
        %v933 = vld [vmem:[#allocation8 + $0x18] sm:$0xf]
        %v934 = vld [vmem:[#allocation8 + $0x1c] sm:$0xf]
        %v935 = vld [vmem:[#allocation8 + $0x20] sm:$0xf]
        %v936 = vld [vmem:[#allocation8 + $0x24] sm:$0xf]
        %v937 = vld [vmem:[#allocation8 + $0x28] sm:$0xf]
        %v938 = vld [vmem:[#allocation8 + $0x2c] sm:$0xf]
        %v939 = vld [vmem:[#allocation8 + $0x30] sm:$0xf]
        %v940 = vld [vmem:[#allocation8 + $0x34] sm:$0xf]
        %v941 = vld [vmem:[#allocation8 + $0x38] sm:$0xf]
        %v942 = vld [vmem:[#allocation8 + $0x3c] sm:$0xf]
        %v943 = vld [vmem:[%s470] sm:$0xf]
        %v944 = vld [vmem:[%s470 + $0x4] sm:$0xf]
        %v945 = vld [vmem:[%s470 + $0x8] sm:$0xf]
        %v946 = vld [vmem:[%s470 + $0xc] sm:$0xf]
        %v947 = vld [vmem:[%s470 + $0x10] sm:$0xf]
        %v948 = vld [vmem:[%s470 + $0x14] sm:$0xf]
        %v949 = vld [vmem:[%s470 + $0x18] sm:$0xf]
        %v950 = vld [vmem:[%s470 + $0x1c] sm:$0xf]
        %v951 = vld [vmem:[%s470 + $0x20] sm:$0xf]
        %v952 = vld [vmem:[%s470 + $0x24] sm:$0xf]
        %v953 = vld [vmem:[%s470 + $0x28] sm:$0xf]
        %v954 = vld [vmem:[%s470 + $0x2c] sm:$0xf]
        %v955 = vld [vmem:[%s470 + $0x30] sm:$0xf]
        %v956 = vld [vmem:[%s470 + $0x34] sm:$0xf]
        %v957 = vld [vmem:[%s470 + $0x38] sm:$0xf]
        %v958 = vld [vmem:[%s470 + $0x3c] sm:$0xf]
        %v959 = vld [vmem:[%s470 + $0x40] sm:$0xf]
        %v960 = vld [vmem:[%s470 + $0x44] sm:$0xf]
        %v961 = vld [vmem:[%s470 + $0x48] sm:$0xf]
        %v962 = vld [vmem:[%s470 + $0x4c] sm:$0xf]
        %v963 = vld [vmem:[%s470 + $0x50] sm:$0xf]
        %v964 = vld [vmem:[%s470 + $0x54] sm:$0xf]
        %v965 = vld [vmem:[%s470 + $0x58] sm:$0xf]
        %v966 = vld [vmem:[%s470 + $0x5c] sm:$0xf]
        %v967 = vld [vmem:[%s470 + $0x60] sm:$0xf]
        %v968 = vld [vmem:[%s470 + $0x64] sm:$0xf]
        %v969 = vld [vmem:[%s470 + $0x68] sm:$0xf]
        %v970 = vld [vmem:[%s470 + $0x6c] sm:$0xf]
        %v971 = vld [vmem:[%s470 + $0x70] sm:$0xf]
        %v972 = vld [vmem:[%s470 + $0x74] sm:$0xf]
        %v973 = vld [vmem:[%s470 + $0x78] sm:$0xf]
        %v974 = vld [vmem:[%s470 + $0x7c] sm:$0xf]
        %v975 = vld [vmem:[#allocation10] sm:$0xf]
        %v976 = vld [vmem:[#allocation10 + $0x4] sm:$0xf]
        %v977 = vld [vmem:[#allocation10 + $0x8] sm:$0xf]
        %v978 = vld [vmem:[#allocation10 + $0xc] sm:$0xf]
        %v979 = vld [vmem:[#allocation10 + $0x10] sm:$0xf]
        %v980 = vld [vmem:[#allocation10 + $0x14] sm:$0xf]
        %v981 = vld [vmem:[#allocation10 + $0x18] sm:$0xf]
        %v982 = vld [vmem:[#allocation10 + $0x1c] sm:$0xf]
        %v983 = vld [vmem:[#allocation10 + $0x20] sm:$0xf]
        %v984 = vld [vmem:[#allocation10 + $0x24] sm:$0xf]
        %v985 = vld [vmem:[#allocation10 + $0x28] sm:$0xf]
        %v986 = vld [vmem:[#allocation10 + $0x2c] sm:$0xf]
        %v987 = vld [vmem:[#allocation10 + $0x30] sm:$0xf]
        %v988 = vld [vmem:[#allocation10 + $0x34] sm:$0xf]
        %v989 = vld [vmem:[#allocation10 + $0x38] sm:$0xf]
        %v990 = vld [vmem:[#allocation10 + $0x3c] sm:$0xf]
        %v1023 = vunpack.c.l.b16 %v943
        %v1024 = vunpack.c.l.b16 %v944
        %v1025 = vunpack.c.l.b16 %v945
        %v1026 = vunpack.c.l.b16 %v946
        %v1027 = vunpack.c.l.b16 %v947
        %v1028 = vunpack.c.l.b16 %v948
        %v1029 = vunpack.c.l.b16 %v949
        %v1030 = vunpack.c.l.b16 %v950
        %v1031 = vunpack.c.l.b16 %v951
        %v1032 = vunpack.c.l.b16 %v952
        %v1033 = vunpack.c.l.b16 %v953
        %v1034 = vunpack.c.l.b16 %v954
        %v1035 = vunpack.c.l.b16 %v955
        %v1036 = vunpack.c.l.b16 %v956
        %v1037 = vunpack.c.l.b16 %v957
        %v1038 = vunpack.c.l.b16 %v958
        %v1039 = vunpack.c.l.b16 %v959
        %v1040 = vunpack.c.l.b16 %v960
        %v1041 = vunpack.c.l.b16 %v961
        %v1042 = vunpack.c.l.b16 %v962
        %v1043 = vunpack.c.l.b16 %v963
        %v1044 = vunpack.c.l.b16 %v964
        %v1045 = vunpack.c.l.b16 %v965
        %v1046 = vunpack.c.l.b16 %v966
        %v1047 = vunpack.c.l.b16 %v967
        %v1048 = vunpack.c.l.b16 %v968
        %v1049 = vunpack.c.l.b16 %v969
        %v1050 = vunpack.c.l.b16 %v970
        %v1051 = vunpack.c.l.b16 %v971
        %v1052 = vunpack.c.l.b16 %v972
        %v1053 = vunpack.c.l.b16 %v973
        %v1054 = vunpack.c.l.b16 %v974
        %v1055 = vpack.c.b16 %v1024, %v1023
        %v1056 = vpack.c.b16 %v1026, %v1025
        %v1057 = vpack.c.b16 %v1028, %v1027
        %v1058 = vpack.c.b16 %v1030, %v1029
        %v1059 = vpack.c.b16 %v1032, %v1031
        %v1060 = vpack.c.b16 %v1034, %v1033
        %v1061 = vpack.c.b16 %v1036, %v1035
        %v1062 = vpack.c.b16 %v1038, %v1037
        %v1063 = vpack.c.b16 %v1040, %v1039
        %v1064 = vpack.c.b16 %v1042, %v1041
        %v1065 = vpack.c.b16 %v1044, %v1043
        %v1066 = vpack.c.b16 %v1046, %v1045
        %v1067 = vpack.c.b16 %v1048, %v1047
        %v1068 = vpack.c.b16 %v1050, %v1049
        %v1069 = vpack.c.b16 %v1052, %v1051
        %v1070 = vpack.c.b16 %v1054, %v1053
        %v1103 = vunpack.c.l.b16 %v975
        %v1104 = vunpack.c.l.b16 %v976
        %v1105 = vunpack.c.l.b16 %v977
        %v1106 = vunpack.c.l.b16 %v978
        %v1107 = vunpack.c.l.b16 %v979
        %v1108 = vunpack.c.l.b16 %v980
        %v1109 = vunpack.c.l.b16 %v981
        %v1110 = vunpack.c.l.b16 %v982
        %v1111 = vunpack.c.l.b16 %v983
        %v1112 = vunpack.c.l.b16 %v984
        %v1113 = vunpack.c.l.b16 %v985
        %v1114 = vunpack.c.l.b16 %v986
        %v1115 = vunpack.c.l.b16 %v987
        %v1116 = vunpack.c.l.b16 %v988
        %v1117 = vunpack.c.l.b16 %v989
        %v1118 = vunpack.c.l.b16 %v990
        %v1119 = vpack.c.b16 %v1104, %v1103
        %v1120 = vpack.c.b16 %v1106, %v1105
        %v1121 = vpack.c.b16 %v1108, %v1107
        %v1122 = vpack.c.b16 %v1110, %v1109
        %v1123 = vpack.c.b16 %v1112, %v1111
        %v1124 = vpack.c.b16 %v1114, %v1113
        %v1125 = vpack.c.b16 %v1116, %v1115
        %v1126 = vpack.c.b16 %v1118, %v1117
        %1135 = vmatpush.bf16.msra.mxu0 %v1126
        %1136 = vmatpush.bf16.msra.mxu0 %v1125
        %1137 = vmatpush.bf16.msra.mxu0 %v1124
        %1138 = vmatpush.bf16.msra.mxu0 %v1123
        %1139 = vmatpush.bf16.msra.mxu0 %v1122
        %1140 = vmatpush.bf16.msra.mxu0 %v1121
        %1141 = vmatpush.bf16.msra.mxu0 %v1120
        %1142 = vmatpush.bf16.msra.mxu0 %v1119
        %1143 = vmatmul.bf16.gmra.mxu0 %v1055
        %v1144 = vpop.f32.mrf.mxu0
        %v1145 = vadd.f32 0.0, %v1144
        %v1146 = vpop.f32.mrf.mxu0
        %v1147 = vadd.f32 0.0, %v1146
        %1148 = vmatmul.bf16.gmra.mxu0 %v1056
        %v1149 = vpop.f32.mrf.mxu0
        %v1150 = vadd.f32 0.0, %v1149
        %v1151 = vpop.f32.mrf.mxu0
        %v1152 = vadd.f32 0.0, %v1151
        %1153 = vmatmul.bf16.gmra.mxu0 %v1057
        %v1154 = vpop.f32.mrf.mxu0
        %v1155 = vadd.f32 0.0, %v1154
        %v1156 = vpop.f32.mrf.mxu0
        %v1157 = vadd.f32 0.0, %v1156
        %1158 = vmatmul.bf16.gmra.mxu0 %v1058
        %v1159 = vpop.f32.mrf.mxu0
        %v1160 = vadd.f32 0.0, %v1159
        %v1161 = vpop.f32.mrf.mxu0
        %v1162 = vadd.f32 0.0, %v1161
        %1163 = vmatmul.bf16.gmra.mxu0 %v1059
        %v1164 = vpop.f32.mrf.mxu0
        %v1165 = vadd.f32 0.0, %v1164
        %v1166 = vpop.f32.mrf.mxu0
        %v1167 = vadd.f32 0.0, %v1166
        %1168 = vmatmul.bf16.gmra.mxu0 %v1060
        %v1169 = vpop.f32.mrf.mxu0
        %v1170 = vadd.f32 0.0, %v1169
        %v1171 = vpop.f32.mrf.mxu0
        %v1172 = vadd.f32 0.0, %v1171
        %1173 = vmatmul.bf16.gmra.mxu0 %v1061
        %v1174 = vpop.f32.mrf.mxu0
        %v1175 = vadd.f32 0.0, %v1174
        %v1176 = vpop.f32.mrf.mxu0
        %v1177 = vadd.f32 0.0, %v1176
        %1178 = vmatmul.bf16.gmra.mxu0 %v1062
        %v1179 = vpop.f32.mrf.mxu0
        %v1180 = vadd.f32 0.0, %v1179
        %v1181 = vpop.f32.mrf.mxu0
        %v1182 = vadd.f32 0.0, %v1181
        %1183 = vmatmul.bf16.gmra.mxu0 %v1063
        %v1184 = vpop.f32.mrf.mxu0
        %v1185 = vadd.f32 0.0, %v1184
        %v1186 = vpop.f32.mrf.mxu0
        %v1187 = vadd.f32 0.0, %v1186
        %1188 = vmatmul.bf16.gmra.mxu0 %v1064
        %v1189 = vpop.f32.mrf.mxu0
        %v1190 = vadd.f32 0.0, %v1189
        %v1191 = vpop.f32.mrf.mxu0
        %v1192 = vadd.f32 0.0, %v1191
        %1193 = vmatmul.bf16.gmra.mxu0 %v1065
        %v1194 = vpop.f32.mrf.mxu0
        %v1195 = vadd.f32 0.0, %v1194
        %v1196 = vpop.f32.mrf.mxu0
        %v1197 = vadd.f32 0.0, %v1196
        %1198 = vmatmul.bf16.gmra.mxu0 %v1066
        %v1199 = vpop.f32.mrf.mxu0
        %v1200 = vadd.f32 0.0, %v1199
        %v1201 = vpop.f32.mrf.mxu0
        %v1202 = vadd.f32 0.0, %v1201
        %1203 = vmatmul.bf16.gmra.mxu0 %v1067
        %v1204 = vpop.f32.mrf.mxu0
        %v1205 = vadd.f32 0.0, %v1204
        %v1206 = vpop.f32.mrf.mxu0
        %v1207 = vadd.f32 0.0, %v1206
        %1208 = vmatmul.bf16.gmra.mxu0 %v1068
        %v1209 = vpop.f32.mrf.mxu0
        %v1210 = vadd.f32 0.0, %v1209
        %v1211 = vpop.f32.mrf.mxu0
        %v1212 = vadd.f32 0.0, %v1211
        %1213 = vmatmul.bf16.gmra.mxu0 %v1069
        %v1214 = vpop.f32.mrf.mxu0
        %v1215 = vadd.f32 0.0, %v1214
        %v1216 = vpop.f32.mrf.mxu0
        %v1217 = vadd.f32 0.0, %v1216
        %1218 = vmatmul.bf16.gmra.mxu0 %v1070
        %v1219 = vpop.f32.mrf.mxu0
        %v1220 = vadd.f32 0.0, %v1219
        %v1221 = vpop.f32.mrf.mxu0
        %v1222 = vadd.f32 0.0, %v1221
        %1223 = vdwg.mxu0
        %v1240 = vunpack.c.l.b16 %v927
        %v1241 = vunpack.c.l.b16 %v928
        %v1242 = vunpack.c.l.b16 %v929
        %v1243 = vunpack.c.l.b16 %v930
        %v1244 = vunpack.c.l.b16 %v931
        %v1245 = vunpack.c.l.b16 %v932
        %v1246 = vunpack.c.l.b16 %v933
        %v1247 = vunpack.c.l.b16 %v934
        %v1248 = vunpack.c.l.b16 %v935
        %v1249 = vunpack.c.l.b16 %v936
        %v1250 = vunpack.c.l.b16 %v937
        %v1251 = vunpack.c.l.b16 %v938
        %v1252 = vunpack.c.l.b16 %v939
        %v1253 = vunpack.c.l.b16 %v940
        %v1254 = vunpack.c.l.b16 %v941
        %v1255 = vunpack.c.l.b16 %v942
        %v1256 = vpack.c.b16 %v1241, %v1240
        %v1257 = vpack.c.b16 %v1243, %v1242
        %v1258 = vpack.c.b16 %v1245, %v1244
        %v1259 = vpack.c.b16 %v1247, %v1246
        %v1260 = vpack.c.b16 %v1249, %v1248
        %v1261 = vpack.c.b16 %v1251, %v1250
        %v1262 = vpack.c.b16 %v1253, %v1252
        %v1263 = vpack.c.b16 %v1255, %v1254
        %1272 = vmatpush.bf16.msra.mxu0 %v1263
        %1273 = vmatpush.bf16.msra.mxu0 %v1262
        %1274 = vmatpush.bf16.msra.mxu0 %v1261
        %1275 = vmatpush.bf16.msra.mxu0 %v1260
        %1276 = vmatpush.bf16.msra.mxu0 %v1259
        %1277 = vmatpush.bf16.msra.mxu0 %v1258
        %1278 = vmatpush.bf16.msra.mxu0 %v1257
        %1279 = vmatpush.bf16.msra.mxu0 %v1256
        %1280 = vmatmul.bf16.gmra.mxu0 %v911
        %v1281 = vpop.f32.mrf.mxu0
        %v1282 = vadd.f32 %v1145, %v1281
        %v1283 = vpop.f32.mrf.mxu0
        %v1284 = vadd.f32 %v1147, %v1283
        %1285 = vmatmul.bf16.gmra.mxu0 %v912
        %v1286 = vpop.f32.mrf.mxu0
        %v1287 = vadd.f32 %v1150, %v1286
        %v1288 = vpop.f32.mrf.mxu0
        %v1289 = vadd.f32 %v1152, %v1288
        %1290 = vmatmul.bf16.gmra.mxu0 %v913
        %v1291 = vpop.f32.mrf.mxu0
        %v1292 = vadd.f32 %v1155, %v1291
        %v1293 = vpop.f32.mrf.mxu0
        %v1294 = vadd.f32 %v1157, %v1293
        %1295 = vmatmul.bf16.gmra.mxu0 %v914
        %v1296 = vpop.f32.mrf.mxu0
        %v1297 = vadd.f32 %v1160, %v1296
        %v1298 = vpop.f32.mrf.mxu0
        %v1299 = vadd.f32 %v1162, %v1298
        %1300 = vmatmul.bf16.gmra.mxu0 %v915
        %v1301 = vpop.f32.mrf.mxu0
        %v1302 = vadd.f32 %v1165, %v1301
        %v1303 = vpop.f32.mrf.mxu0
        %v1304 = vadd.f32 %v1167, %v1303
        %1305 = vmatmul.bf16.gmra.mxu0 %v916
        %v1306 = vpop.f32.mrf.mxu0
        %v1307 = vadd.f32 %v1170, %v1306
        %v1308 = vpop.f32.mrf.mxu0
        %v1309 = vadd.f32 %v1172, %v1308
        %1310 = vmatmul.bf16.gmra.mxu0 %v917
        %v1311 = vpop.f32.mrf.mxu0
        %v1312 = vadd.f32 %v1175, %v1311
        %v1313 = vpop.f32.mrf.mxu0
        %v1314 = vadd.f32 %v1177, %v1313
        %1315 = vmatmul.bf16.gmra.mxu0 %v918
        %v1316 = vpop.f32.mrf.mxu0
        %v1317 = vadd.f32 %v1180, %v1316
        %v1318 = vpop.f32.mrf.mxu0
        %v1319 = vadd.f32 %v1182, %v1318
        %1320 = vmatmul.bf16.gmra.mxu0 %v919
        %v1321 = vpop.f32.mrf.mxu0
        %v1322 = vadd.f32 %v1185, %v1321
        %v1323 = vpop.f32.mrf.mxu0
        %v1324 = vadd.f32 %v1187, %v1323
        %1325 = vmatmul.bf16.gmra.mxu0 %v920
        %v1326 = vpop.f32.mrf.mxu0
        %v1327 = vadd.f32 %v1190, %v1326
        %v1328 = vpop.f32.mrf.mxu0
        %v1329 = vadd.f32 %v1192, %v1328
        %1330 = vmatmul.bf16.gmra.mxu0 %v921
        %v1331 = vpop.f32.mrf.mxu0
        %v1332 = vadd.f32 %v1195, %v1331
        %v1333 = vpop.f32.mrf.mxu0
        %v1334 = vadd.f32 %v1197, %v1333
        %1335 = vmatmul.bf16.gmra.mxu0 %v922
        %v1336 = vpop.f32.mrf.mxu0
        %v1337 = vadd.f32 %v1200, %v1336
        %v1338 = vpop.f32.mrf.mxu0
        %v1339 = vadd.f32 %v1202, %v1338
        %1340 = vmatmul.bf16.gmra.mxu0 %v923
        %v1341 = vpop.f32.mrf.mxu0
        %v1342 = vadd.f32 %v1205, %v1341
        %v1343 = vpop.f32.mrf.mxu0
        %v1344 = vadd.f32 %v1207, %v1343
        %1345 = vmatmul.bf16.gmra.mxu0 %v924
        %v1346 = vpop.f32.mrf.mxu0
        %v1347 = vadd.f32 %v1210, %v1346
        %v1348 = vpop.f32.mrf.mxu0
        %v1349 = vadd.f32 %v1212, %v1348
        %1350 = vmatmul.bf16.gmra.mxu0 %v925
        %v1351 = vpop.f32.mrf.mxu0
        %v1352 = vadd.f32 %v1215, %v1351
        %v1353 = vpop.f32.mrf.mxu0
        %v1354 = vadd.f32 %v1217, %v1353
        %1355 = vmatmul.bf16.gmra.mxu0 %v926
        %v1356 = vpop.f32.mrf.mxu0
        %v1357 = vadd.f32 %v1220, %v1356
        %v1358 = vpop.f32.mrf.mxu0
        %v1359 = vadd.f32 %v1222, %v1358
        %1360 = vdwg.mxu0
        %v1361 = vld [vmem:[#allocation13] sm:$0x1]
        %v1362 = vperm.slane %v1361, 0
        %v1363 = vadd.f32 %v1282, %v1362
        %v1364 = vadd.f32 %v1284, %v1362
        %v1365 = vadd.f32 %v1287, %v1362
        %v1366 = vadd.f32 %v1289, %v1362
        %v1367 = vadd.f32 %v1292, %v1362
        %v1368 = vadd.f32 %v1294, %v1362
        %v1369 = vadd.f32 %v1297, %v1362
        %v1370 = vadd.f32 %v1299, %v1362
        %v1371 = vadd.f32 %v1302, %v1362
        %v1372 = vadd.f32 %v1304, %v1362
        %v1373 = vadd.f32 %v1307, %v1362
        %v1374 = vadd.f32 %v1309, %v1362
        %v1375 = vadd.f32 %v1312, %v1362
        %v1376 = vadd.f32 %v1314, %v1362
        %v1377 = vadd.f32 %v1317, %v1362
        %v1378 = vadd.f32 %v1319, %v1362
        %v1379 = vadd.f32 %v1322, %v1362
        %v1380 = vadd.f32 %v1324, %v1362
        %v1381 = vadd.f32 %v1327, %v1362
        %v1382 = vadd.f32 %v1329, %v1362
        %v1383 = vadd.f32 %v1332, %v1362
        %v1384 = vadd.f32 %v1334, %v1362
        %v1385 = vadd.f32 %v1337, %v1362
        %v1386 = vadd.f32 %v1339, %v1362
        %v1387 = vadd.f32 %v1342, %v1362
        %v1388 = vadd.f32 %v1344, %v1362
        %v1389 = vadd.f32 %v1347, %v1362
        %v1390 = vadd.f32 %v1349, %v1362
        %v1391 = vadd.f32 %v1352, %v1362
        %v1392 = vadd.f32 %v1354, %v1362
        %v1393 = vadd.f32 %v1357, %v1362
        %v1394 = vadd.f32 %v1359, %v1362
        %v1395 = vmax.f32 %v1363, 0.0
        %v1396 = vmax.f32 %v1364, 0.0
        %v1397 = vmax.f32 %v1365, 0.0
        %v1398 = vmax.f32 %v1366, 0.0
        %v1399 = vmax.f32 %v1367, 0.0
        %v1400 = vmax.f32 %v1368, 0.0
        %v1401 = vmax.f32 %v1369, 0.0
        %v1402 = vmax.f32 %v1370, 0.0
        %v1403 = vmax.f32 %v1371, 0.0
        %v1404 = vmax.f32 %v1372, 0.0
        %v1405 = vmax.f32 %v1373, 0.0
        %v1406 = vmax.f32 %v1374, 0.0
        %v1407 = vmax.f32 %v1375, 0.0
        %v1408 = vmax.f32 %v1376, 0.0
        %v1409 = vmax.f32 %v1377, 0.0
        %v1410 = vmax.f32 %v1378, 0.0
        %v1411 = vmax.f32 %v1379, 0.0
        %v1412 = vmax.f32 %v1380, 0.0
        %v1413 = vmax.f32 %v1381, 0.0
        %v1414 = vmax.f32 %v1382, 0.0
        %v1415 = vmax.f32 %v1383, 0.0
        %v1416 = vmax.f32 %v1384, 0.0
        %v1417 = vmax.f32 %v1385, 0.0
        %v1418 = vmax.f32 %v1386, 0.0
        %v1419 = vmax.f32 %v1387, 0.0
        %v1420 = vmax.f32 %v1388, 0.0
        %v1421 = vmax.f32 %v1389, 0.0
        %v1422 = vmax.f32 %v1390, 0.0
        %v1423 = vmax.f32 %v1391, 0.0
        %v1424 = vmax.f32 %v1392, 0.0
        %v1425 = vmax.f32 %v1393, 0.0
        %v1426 = vmax.f32 %v1394, 0.0
        %v1427 = vpack.c.bf16 %v1396, %v1395
        %v1428 = vpack.c.bf16 %v1398, %v1397
        %v1429 = vpack.c.bf16 %v1400, %v1399
        %v1430 = vpack.c.bf16 %v1402, %v1401
        %v1431 = vpack.c.bf16 %v1404, %v1403
        %v1432 = vpack.c.bf16 %v1406, %v1405
        %v1433 = vpack.c.bf16 %v1408, %v1407
        %v1434 = vpack.c.bf16 %v1410, %v1409
        %v1435 = vpack.c.bf16 %v1412, %v1411
        %v1436 = vpack.c.bf16 %v1414, %v1413
        %v1437 = vpack.c.bf16 %v1416, %v1415
        %v1438 = vpack.c.bf16 %v1418, %v1417
        %v1439 = vpack.c.bf16 %v1420, %v1419
        %v1440 = vpack.c.bf16 %v1422, %v1421
        %v1441 = vpack.c.bf16 %v1424, %v1423
        %v1442 = vpack.c.bf16 %v1426, %v1425
        %v1443 = vld [vmem:[#allocation11] sm:$0xf]
        %v1444 = vld [vmem:[#allocation11 + $0x4] sm:$0xf]
        %v1445 = vld [vmem:[#allocation11 + $0x8] sm:$0xf]
        %v1446 = vld [vmem:[#allocation11 + $0xc] sm:$0xf]
        %v1447 = vld [vmem:[#allocation11 + $0x10] sm:$0xf]
        %v1448 = vld [vmem:[#allocation11 + $0x14] sm:$0xf]
        %v1449 = vld [vmem:[#allocation11 + $0x18] sm:$0xf]
        %v1450 = vld [vmem:[#allocation11 + $0x1c] sm:$0xf]
        %v1451 = vld [vmem:[#allocation11 + $0x20] sm:$0xf]
        %v1452 = vld [vmem:[#allocation11 + $0x24] sm:$0xf]
        %v1453 = vld [vmem:[#allocation11 + $0x28] sm:$0xf]
        %v1454 = vld [vmem:[#allocation11 + $0x2c] sm:$0xf]
        %v1455 = vld [vmem:[#allocation11 + $0x30] sm:$0xf]
        %v1456 = vld [vmem:[#allocation11 + $0x34] sm:$0xf]
        %v1457 = vld [vmem:[#allocation11 + $0x38] sm:$0xf]
        %v1458 = vld [vmem:[#allocation11 + $0x3c] sm:$0xf]
        %v1459 = vld [vmem:[#allocation13 + $0x3] sm:$0x1]
        %v1460 = vperm.slane %v1459, 0
        %v1477 = vunpack.c.l.b16 %v1443
        %v1478 = vunpack.c.l.b16 %v1444
        %v1479 = vunpack.c.l.b16 %v1445
        %v1480 = vunpack.c.l.b16 %v1446
        %v1481 = vunpack.c.l.b16 %v1447
        %v1482 = vunpack.c.l.b16 %v1448
        %v1483 = vunpack.c.l.b16 %v1449
        %v1484 = vunpack.c.l.b16 %v1450
        %v1485 = vunpack.c.l.b16 %v1451
        %v1486 = vunpack.c.l.b16 %v1452
        %v1487 = vunpack.c.l.b16 %v1453
        %v1488 = vunpack.c.l.b16 %v1454
        %v1489 = vunpack.c.l.b16 %v1455
        %v1490 = vunpack.c.l.b16 %v1456
        %v1491 = vunpack.c.l.b16 %v1457
        %v1492 = vunpack.c.l.b16 %v1458
        %v1493 = vpack.c.b16 %v1478, %v1477
        %v1494 = vpack.c.b16 %v1480, %v1479
        %v1495 = vpack.c.b16 %v1482, %v1481
        %v1496 = vpack.c.b16 %v1484, %v1483
        %v1497 = vpack.c.b16 %v1486, %v1485
        %v1498 = vpack.c.b16 %v1488, %v1487
        %v1499 = vpack.c.b16 %v1490, %v1489
        %v1500 = vpack.c.b16 %v1492, %v1491
        %1509 = vmatpush.bf16.msra.mxu0 %v1500
        %1510 = vmatpush.bf16.msra.mxu0 %v1499
        %1511 = vmatpush.bf16.msra.mxu0 %v1498
        %1512 = vmatpush.bf16.msra.mxu0 %v1497
        %1513 = vmatpush.bf16.msra.mxu0 %v1496
        %1514 = vmatpush.bf16.msra.mxu0 %v1495
        %1515 = vmatpush.bf16.msra.mxu0 %v1494
        %1516 = vmatpush.bf16.msra.mxu0 %v1493
        %1517 = vmatmul.bf16.gmra.mxu0 %v1427
        %v1518 = vpop.f32.mrf.mxu0
        %v1519 = vadd.f32 %v1460, %v1518
        %v1520 = vpop.f32.mrf.mxu0
        %v1521 = vadd.f32 %v1460, %v1520
        %1522 = vmatmul.bf16.gmra.mxu0 %v1428
        %v1523 = vpop.f32.mrf.mxu0
        %v1524 = vadd.f32 %v1460, %v1523
        %v1525 = vpop.f32.mrf.mxu0
        %v1526 = vadd.f32 %v1460, %v1525
        %1527 = vmatmul.bf16.gmra.mxu0 %v1429
        %v1528 = vpop.f32.mrf.mxu0
        %v1529 = vadd.f32 %v1460, %v1528
        %v1530 = vpop.f32.mrf.mxu0
        %v1531 = vadd.f32 %v1460, %v1530
        %1532 = vmatmul.bf16.gmra.mxu0 %v1430
        %v1533 = vpop.f32.mrf.mxu0
        %v1534 = vadd.f32 %v1460, %v1533
        %v1535 = vpop.f32.mrf.mxu0
        %v1536 = vadd.f32 %v1460, %v1535
        %1537 = vmatmul.bf16.gmra.mxu0 %v1431
        %v1538 = vpop.f32.mrf.mxu0
        %v1539 = vadd.f32 %v1460, %v1538
        %v1540 = vpop.f32.mrf.mxu0
        %v1541 = vadd.f32 %v1460, %v1540
        %1542 = vmatmul.bf16.gmra.mxu0 %v1432
        %v1543 = vpop.f32.mrf.mxu0
        %v1544 = vadd.f32 %v1460, %v1543
        %v1545 = vpop.f32.mrf.mxu0
        %v1546 = vadd.f32 %v1460, %v1545
        %1547 = vmatmul.bf16.gmra.mxu0 %v1433
        %v1548 = vpop.f32.mrf.mxu0
        %v1549 = vadd.f32 %v1460, %v1548
        %v1550 = vpop.f32.mrf.mxu0
        %v1551 = vadd.f32 %v1460, %v1550
        %1552 = vmatmul.bf16.gmra.mxu0 %v1434
        %v1553 = vpop.f32.mrf.mxu0
        %v1554 = vadd.f32 %v1460, %v1553
        %v1555 = vpop.f32.mrf.mxu0
        %v1556 = vadd.f32 %v1460, %v1555
        %1557 = vmatmul.bf16.gmra.mxu0 %v1435
        %v1558 = vpop.f32.mrf.mxu0
        %v1559 = vadd.f32 %v1460, %v1558
        %v1560 = vpop.f32.mrf.mxu0
        %v1561 = vadd.f32 %v1460, %v1560
        %1562 = vmatmul.bf16.gmra.mxu0 %v1436
        %v1563 = vpop.f32.mrf.mxu0
        %v1564 = vadd.f32 %v1460, %v1563
        %v1565 = vpop.f32.mrf.mxu0
        %v1566 = vadd.f32 %v1460, %v1565
        %1567 = vmatmul.bf16.gmra.mxu0 %v1437
        %v1568 = vpop.f32.mrf.mxu0
        %v1569 = vadd.f32 %v1460, %v1568
        %v1570 = vpop.f32.mrf.mxu0
        %v1571 = vadd.f32 %v1460, %v1570
        %1572 = vmatmul.bf16.gmra.mxu0 %v1438
        %v1573 = vpop.f32.mrf.mxu0
        %v1574 = vadd.f32 %v1460, %v1573
        %v1575 = vpop.f32.mrf.mxu0
        %v1576 = vadd.f32 %v1460, %v1575
        %1577 = vmatmul.bf16.gmra.mxu0 %v1439
        %v1578 = vpop.f32.mrf.mxu0
        %v1579 = vadd.f32 %v1460, %v1578
        %v1580 = vpop.f32.mrf.mxu0
        %v1581 = vadd.f32 %v1460, %v1580
        %1582 = vmatmul.bf16.gmra.mxu0 %v1440
        %v1583 = vpop.f32.mrf.mxu0
        %v1584 = vadd.f32 %v1460, %v1583
        %v1585 = vpop.f32.mrf.mxu0
        %v1586 = vadd.f32 %v1460, %v1585
        %1587 = vmatmul.bf16.gmra.mxu0 %v1441
        %v1588 = vpop.f32.mrf.mxu0
        %v1589 = vadd.f32 %v1460, %v1588
        %v1590 = vpop.f32.mrf.mxu0
        %v1591 = vadd.f32 %v1460, %v1590
        %1592 = vmatmul.bf16.gmra.mxu0 %v1442
        %v1593 = vpop.f32.mrf.mxu0
        %v1594 = vadd.f32 %v1460, %v1593
        %v1595 = vpop.f32.mrf.mxu0
        %v1596 = vadd.f32 %v1460, %v1595
        %1597 = vdwg.mxu0
        %v1598 = vmax.f32 %v1519, 0.0
        %v1599 = vmax.f32 %v1521, 0.0
        %v1600 = vmax.f32 %v1524, 0.0
        %v1601 = vmax.f32 %v1526, 0.0
        %v1602 = vmax.f32 %v1529, 0.0
        %v1603 = vmax.f32 %v1531, 0.0
        %v1604 = vmax.f32 %v1534, 0.0
        %v1605 = vmax.f32 %v1536, 0.0
        %v1606 = vmax.f32 %v1539, 0.0
        %v1607 = vmax.f32 %v1541, 0.0
        %v1608 = vmax.f32 %v1544, 0.0
        %v1609 = vmax.f32 %v1546, 0.0
        %v1610 = vmax.f32 %v1549, 0.0
        %v1611 = vmax.f32 %v1551, 0.0
        %v1612 = vmax.f32 %v1554, 0.0
        %v1613 = vmax.f32 %v1556, 0.0
        %v1614 = vmax.f32 %v1559, 0.0
        %v1615 = vmax.f32 %v1561, 0.0
        %v1616 = vmax.f32 %v1564, 0.0
        %v1617 = vmax.f32 %v1566, 0.0
        %v1618 = vmax.f32 %v1569, 0.0
        %v1619 = vmax.f32 %v1571, 0.0
        %v1620 = vmax.f32 %v1574, 0.0
        %v1621 = vmax.f32 %v1576, 0.0
        %v1622 = vmax.f32 %v1579, 0.0
        %v1623 = vmax.f32 %v1581, 0.0
        %v1624 = vmax.f32 %v1584, 0.0
        %v1625 = vmax.f32 %v1586, 0.0
        %v1626 = vmax.f32 %v1589, 0.0
        %v1627 = vmax.f32 %v1591, 0.0
        %v1628 = vmax.f32 %v1594, 0.0
        %v1629 = vmax.f32 %v1596, 0.0
        %v1630 = vpack.c.bf16 %v1598, %v1598
        %v1631 = vpack.c.bf16 %v1599, %v1599
        %v1632 = vpack.c.bf16 %v1600, %v1600
        %v1633 = vpack.c.bf16 %v1601, %v1601
        %v1634 = vpack.c.bf16 %v1602, %v1602
        %v1635 = vpack.c.bf16 %v1603, %v1603
        %v1636 = vpack.c.bf16 %v1604, %v1604
        %v1637 = vpack.c.bf16 %v1605, %v1605
        %v1638 = vpack.c.bf16 %v1606, %v1606
        %v1639 = vpack.c.bf16 %v1607, %v1607
        %v1640 = vpack.c.bf16 %v1608, %v1608
        %v1641 = vpack.c.bf16 %v1609, %v1609
        %v1642 = vpack.c.bf16 %v1610, %v1610
        %v1643 = vpack.c.bf16 %v1611, %v1611
        %v1644 = vpack.c.bf16 %v1612, %v1612
        %v1645 = vpack.c.bf16 %v1613, %v1613
        %v1646 = vpack.c.bf16 %v1614, %v1614
        %v1647 = vpack.c.bf16 %v1615, %v1615
        %v1648 = vpack.c.bf16 %v1616, %v1616
        %v1649 = vpack.c.bf16 %v1617, %v1617
        %v1650 = vpack.c.bf16 %v1618, %v1618
        %v1651 = vpack.c.bf16 %v1619, %v1619
        %v1652 = vpack.c.bf16 %v1620, %v1620
        %v1653 = vpack.c.bf16 %v1621, %v1621
        %v1654 = vpack.c.bf16 %v1622, %v1622
        %v1655 = vpack.c.bf16 %v1623, %v1623
        %v1656 = vpack.c.bf16 %v1624, %v1624
        %v1657 = vpack.c.bf16 %v1625, %v1625
        %v1658 = vpack.c.bf16 %v1626, %v1626
        %v1659 = vpack.c.bf16 %v1627, %v1627
        %v1660 = vpack.c.bf16 %v1628, %v1628
        %v1661 = vpack.c.bf16 %v1629, %v1629
        %v1678 = vunpack.c.l.b16 %v1630
        %v1679 = vunpack.c.l.b16 %v1631
        %v1680 = vunpack.c.l.b16 %v1632
        %v1681 = vunpack.c.l.b16 %v1633
        %v1682 = vunpack.c.l.b16 %v1634
        %v1683 = vunpack.c.l.b16 %v1635
        %v1684 = vunpack.c.l.b16 %v1636
        %v1685 = vunpack.c.l.b16 %v1637
        %v1686 = vunpack.c.l.b16 %v1638
        %v1687 = vunpack.c.l.b16 %v1639
        %v1688 = vunpack.c.l.b16 %v1640
        %v1689 = vunpack.c.l.b16 %v1641
        %v1690 = vunpack.c.l.b16 %v1642
        %v1691 = vunpack.c.l.b16 %v1643
        %v1692 = vunpack.c.l.b16 %v1644
        %v1693 = vunpack.c.l.b16 %v1645
        %v1694 = vpack.c.b16 %v1679, %v1678
        %v1695 = vpack.c.b16 %v1681, %v1680
        %v1696 = vpack.c.b16 %v1683, %v1682
        %v1697 = vpack.c.b16 %v1685, %v1684
        %v1698 = vpack.c.b16 %v1687, %v1686
        %v1699 = vpack.c.b16 %v1689, %v1688
        %v1700 = vpack.c.b16 %v1691, %v1690
        %v1701 = vpack.c.b16 %v1693, %v1692
        %1710 = vmatpush.bf16.msra.mxu0 %v1701
        %1711 = vmatpush.bf16.msra.mxu0 %v1700
        %1712 = vmatpush.bf16.msra.mxu0 %v1699
        %1713 = vmatpush.bf16.msra.mxu0 %v1698
        %1714 = vmatpush.bf16.msra.mxu0 %v1697
        %1715 = vmatpush.bf16.msra.mxu0 %v1696
        %1716 = vmatpush.bf16.msra.mxu0 %v1695
        %1717 = vmatpush.bf16.msra.mxu0 %v1694
        %1718 = vmatmul.bf16.gmra.mxu0 %v636
        %v1719 = vpop.f32.mrf.mxu0
        %v1720 = vadd.f32 0.0, %v1719
        %v1721 = vpop.f32.mrf.mxu0
        %v1722 = vadd.f32 0.0, %v1721
        %1723 = vmatmul.bf16.gmra.mxu0 %v637
        %v1724 = vpop.f32.mrf.mxu0
        %v1725 = vadd.f32 0.0, %v1724
        %v1726 = vpop.f32.mrf.mxu0
        %v1727 = vadd.f32 0.0, %v1726
        %1728 = vmatmul.bf16.gmra.mxu0 %v638
        %v1729 = vpop.f32.mrf.mxu0
        %v1730 = vadd.f32 0.0, %v1729
        %v1731 = vpop.f32.mrf.mxu0
        %v1732 = vadd.f32 0.0, %v1731
        %1733 = vmatmul.bf16.gmra.mxu0 %v639
        %v1734 = vpop.f32.mrf.mxu0
        %v1735 = vadd.f32 0.0, %v1734
        %v1736 = vpop.f32.mrf.mxu0
        %v1737 = vadd.f32 0.0, %v1736
        %1738 = vmatmul.bf16.gmra.mxu0 %v640
        %v1739 = vpop.f32.mrf.mxu0
        %v1740 = vadd.f32 0.0, %v1739
        %v1741 = vpop.f32.mrf.mxu0
        %v1742 = vadd.f32 0.0, %v1741
        %1743 = vmatmul.bf16.gmra.mxu0 %v641
        %v1744 = vpop.f32.mrf.mxu0
        %v1745 = vadd.f32 0.0, %v1744
        %v1746 = vpop.f32.mrf.mxu0
        %v1747 = vadd.f32 0.0, %v1746
        %1748 = vmatmul.bf16.gmra.mxu0 %v642
        %v1749 = vpop.f32.mrf.mxu0
        %v1750 = vadd.f32 0.0, %v1749
        %v1751 = vpop.f32.mrf.mxu0
        %v1752 = vadd.f32 0.0, %v1751
        %1753 = vmatmul.bf16.gmra.mxu0 %v643
        %v1754 = vpop.f32.mrf.mxu0
        %v1755 = vadd.f32 0.0, %v1754
        %v1756 = vpop.f32.mrf.mxu0
        %v1757 = vadd.f32 0.0, %v1756
        %1758 = vdwg.mxu0
        %v1775 = vunpack.c.l.b16 %v1646
        %v1776 = vunpack.c.l.b16 %v1647
        %v1777 = vunpack.c.l.b16 %v1648
        %v1778 = vunpack.c.l.b16 %v1649
        %v1779 = vunpack.c.l.b16 %v1650
        %v1780 = vunpack.c.l.b16 %v1651
        %v1781 = vunpack.c.l.b16 %v1652
        %v1782 = vunpack.c.l.b16 %v1653
        %v1783 = vunpack.c.l.b16 %v1654
        %v1784 = vunpack.c.l.b16 %v1655
        %v1785 = vunpack.c.l.b16 %v1656
        %v1786 = vunpack.c.l.b16 %v1657
        %v1787 = vunpack.c.l.b16 %v1658
        %v1788 = vunpack.c.l.b16 %v1659
        %v1789 = vunpack.c.l.b16 %v1660
        %v1790 = vunpack.c.l.b16 %v1661
        %v1791 = vpack.c.b16 %v1776, %v1775
        %v1792 = vpack.c.b16 %v1778, %v1777
        %v1793 = vpack.c.b16 %v1780, %v1779
        %v1794 = vpack.c.b16 %v1782, %v1781
        %v1795 = vpack.c.b16 %v1784, %v1783
        %v1796 = vpack.c.b16 %v1786, %v1785
        %v1797 = vpack.c.b16 %v1788, %v1787
        %v1798 = vpack.c.b16 %v1790, %v1789
        %1807 = vmatpush.bf16.msra.mxu0 %v1798
        %1808 = vmatpush.bf16.msra.mxu0 %v1797
        %1809 = vmatpush.bf16.msra.mxu0 %v1796
        %1810 = vmatpush.bf16.msra.mxu0 %v1795
        %1811 = vmatpush.bf16.msra.mxu0 %v1794
        %1812 = vmatpush.bf16.msra.mxu0 %v1793
        %1813 = vmatpush.bf16.msra.mxu0 %v1792
        %1814 = vmatpush.bf16.msra.mxu0 %v1791
        %1815 = vmatmul.bf16.gmra.mxu0 %v798
        %v1816 = vpop.f32.mrf.mxu0
        %v1817 = vadd.f32 0.0, %v1816
        %v1818 = vpop.f32.mrf.mxu0
        %v1819 = vadd.f32 0.0, %v1818
        %1820 = vmatmul.bf16.gmra.mxu0 %v799
        %v1821 = vpop.f32.mrf.mxu0
        %v1822 = vadd.f32 0.0, %v1821
        %v1823 = vpop.f32.mrf.mxu0
        %v1824 = vadd.f32 0.0, %v1823
        %1825 = vmatmul.bf16.gmra.mxu0 %v800
        %v1826 = vpop.f32.mrf.mxu0
        %v1827 = vadd.f32 0.0, %v1826
        %v1828 = vpop.f32.mrf.mxu0
        %v1829 = vadd.f32 0.0, %v1828
        %1830 = vmatmul.bf16.gmra.mxu0 %v801
        %v1831 = vpop.f32.mrf.mxu0
        %v1832 = vadd.f32 0.0, %v1831
        %v1833 = vpop.f32.mrf.mxu0
        %v1834 = vadd.f32 0.0, %v1833
        %1835 = vmatmul.bf16.gmra.mxu0 %v802
        %v1836 = vpop.f32.mrf.mxu0
        %v1837 = vadd.f32 0.0, %v1836
        %v1838 = vpop.f32.mrf.mxu0
        %v1839 = vadd.f32 0.0, %v1838
        %1840 = vmatmul.bf16.gmra.mxu0 %v803
        %v1841 = vpop.f32.mrf.mxu0
        %v1842 = vadd.f32 0.0, %v1841
        %v1843 = vpop.f32.mrf.mxu0
        %v1844 = vadd.f32 0.0, %v1843
        %1845 = vmatmul.bf16.gmra.mxu0 %v804
        %v1846 = vpop.f32.mrf.mxu0
        %v1847 = vadd.f32 0.0, %v1846
        %v1848 = vpop.f32.mrf.mxu0
        %v1849 = vadd.f32 0.0, %v1848
        %1850 = vmatmul.bf16.gmra.mxu0 %v805
        %v1851 = vpop.f32.mrf.mxu0
        %v1852 = vadd.f32 0.0, %v1851
        %v1853 = vpop.f32.mrf.mxu0
        %v1854 = vadd.f32 0.0, %v1853
        %1855 = vdwg.mxu0
        %v1856 = vpack.c.bf16 %v1722, %v1720
        %v1857 = vpack.c.bf16 %v1727, %v1725
        %v1858 = vpack.c.bf16 %v1732, %v1730
        %v1859 = vpack.c.bf16 %v1737, %v1735
        %v1860 = vpack.c.bf16 %v1742, %v1740
        %v1861 = vpack.c.bf16 %v1747, %v1745
        %v1862 = vpack.c.bf16 %v1752, %v1750
        %v1863 = vpack.c.bf16 %v1757, %v1755
        %v1864 = vpack.c.bf16 %v1819, %v1817
        %v1865 = vpack.c.bf16 %v1824, %v1822
        %v1866 = vpack.c.bf16 %v1829, %v1827
        %v1867 = vpack.c.bf16 %v1834, %v1832
        %v1868 = vpack.c.bf16 %v1839, %v1837
        %v1869 = vpack.c.bf16 %v1844, %v1842
        %v1870 = vpack.c.bf16 %v1849, %v1847
        %v1871 = vpack.c.bf16 %v1854, %v1852
        %s1872 = scalar_lea.vmem [#allocation8], 64
        %v1873 = vld [vmem:[%s1872] sm:$0xf]
        %v1874 = vld [vmem:[%s1872 + $0x4] sm:$0xf]
        %v1875 = vld [vmem:[%s1872 + $0x8] sm:$0xf]
        %v1876 = vld [vmem:[%s1872 + $0xc] sm:$0xf]
        %v1877 = vld [vmem:[%s1872 + $0x10] sm:$0xf]
        %v1878 = vld [vmem:[%s1872 + $0x14] sm:$0xf]
        %v1879 = vld [vmem:[%s1872 + $0x18] sm:$0xf]
        %v1880 = vld [vmem:[%s1872 + $0x1c] sm:$0xf]
        %v1881 = vld [vmem:[%s1872 + $0x20] sm:$0xf]
        %v1882 = vld [vmem:[%s1872 + $0x24] sm:$0xf]
        %v1883 = vld [vmem:[%s1872 + $0x28] sm:$0xf]
        %v1884 = vld [vmem:[%s1872 + $0x2c] sm:$0xf]
        %v1885 = vld [vmem:[%s1872 + $0x30] sm:$0xf]
        %v1886 = vld [vmem:[%s1872 + $0x34] sm:$0xf]
        %v1887 = vld [vmem:[%s1872 + $0x38] sm:$0xf]
        %v1888 = vld [vmem:[%s1872 + $0x3c] sm:$0xf]
        %s1889 = scalar_lea.vmem [#allocation10], 64
        %v1890 = vld [vmem:[%s1889] sm:$0xf]
        %v1891 = vld [vmem:[%s1889 + $0x4] sm:$0xf]
        %v1892 = vld [vmem:[%s1889 + $0x8] sm:$0xf]
        %v1893 = vld [vmem:[%s1889 + $0xc] sm:$0xf]
        %v1894 = vld [vmem:[%s1889 + $0x10] sm:$0xf]
        %v1895 = vld [vmem:[%s1889 + $0x14] sm:$0xf]
        %v1896 = vld [vmem:[%s1889 + $0x18] sm:$0xf]
        %v1897 = vld [vmem:[%s1889 + $0x1c] sm:$0xf]
        %v1898 = vld [vmem:[%s1889 + $0x20] sm:$0xf]
        %v1899 = vld [vmem:[%s1889 + $0x24] sm:$0xf]
        %v1900 = vld [vmem:[%s1889 + $0x28] sm:$0xf]
        %v1901 = vld [vmem:[%s1889 + $0x2c] sm:$0xf]
        %v1902 = vld [vmem:[%s1889 + $0x30] sm:$0xf]
        %v1903 = vld [vmem:[%s1889 + $0x34] sm:$0xf]
        %v1904 = vld [vmem:[%s1889 + $0x38] sm:$0xf]
        %v1905 = vld [vmem:[%s1889 + $0x3c] sm:$0xf]
        %v1922 = vunpack.c.l.b16 %v1890
        %v1923 = vunpack.c.l.b16 %v1891
        %v1924 = vunpack.c.l.b16 %v1892
        %v1925 = vunpack.c.l.b16 %v1893
        %v1926 = vunpack.c.l.b16 %v1894
        %v1927 = vunpack.c.l.b16 %v1895
        %v1928 = vunpack.c.l.b16 %v1896
        %v1929 = vunpack.c.l.b16 %v1897
        %v1930 = vunpack.c.l.b16 %v1898
        %v1931 = vunpack.c.l.b16 %v1899
        %v1932 = vunpack.c.l.b16 %v1900
        %v1933 = vunpack.c.l.b16 %v1901
        %v1934 = vunpack.c.l.b16 %v1902
        %v1935 = vunpack.c.l.b16 %v1903
        %v1936 = vunpack.c.l.b16 %v1904
        %v1937 = vunpack.c.l.b16 %v1905
        %v1938 = vpack.c.b16 %v1923, %v1922
        %v1939 = vpack.c.b16 %v1925, %v1924
        %v1940 = vpack.c.b16 %v1927, %v1926
        %v1941 = vpack.c.b16 %v1929, %v1928
        %v1942 = vpack.c.b16 %v1931, %v1930
        %v1943 = vpack.c.b16 %v1933, %v1932
        %v1944 = vpack.c.b16 %v1935, %v1934
        %v1945 = vpack.c.b16 %v1937, %v1936
        %1954 = vmatpush.bf16.msra.mxu0 %v1945
        %1955 = vmatpush.bf16.msra.mxu0 %v1944
        %1956 = vmatpush.bf16.msra.mxu0 %v1943
        %1957 = vmatpush.bf16.msra.mxu0 %v1942
        %1958 = vmatpush.bf16.msra.mxu0 %v1941
        %1959 = vmatpush.bf16.msra.mxu0 %v1940
        %1960 = vmatpush.bf16.msra.mxu0 %v1939
        %1961 = vmatpush.bf16.msra.mxu0 %v1938
        %1962 = vmatmul.bf16.gmra.mxu0 %v1055
        %v1963 = vpop.f32.mrf.mxu0
        %v1964 = vadd.f32 0.0, %v1963
        %v1965 = vpop.f32.mrf.mxu0
        %v1966 = vadd.f32 0.0, %v1965
        %1967 = vmatmul.bf16.gmra.mxu0 %v1056
        %v1968 = vpop.f32.mrf.mxu0
        %v1969 = vadd.f32 0.0, %v1968
        %v1970 = vpop.f32.mrf.mxu0
        %v1971 = vadd.f32 0.0, %v1970
        %1972 = vmatmul.bf16.gmra.mxu0 %v1057
        %v1973 = vpop.f32.mrf.mxu0
        %v1974 = vadd.f32 0.0, %v1973
        %v1975 = vpop.f32.mrf.mxu0
        %v1976 = vadd.f32 0.0, %v1975
        %1977 = vmatmul.bf16.gmra.mxu0 %v1058
        %v1978 = vpop.f32.mrf.mxu0
        %v1979 = vadd.f32 0.0, %v1978
        %v1980 = vpop.f32.mrf.mxu0
        %v1981 = vadd.f32 0.0, %v1980
        %1982 = vmatmul.bf16.gmra.mxu0 %v1059
        %v1983 = vpop.f32.mrf.mxu0
        %v1984 = vadd.f32 0.0, %v1983
        %v1985 = vpop.f32.mrf.mxu0
        %v1986 = vadd.f32 0.0, %v1985
        %1987 = vmatmul.bf16.gmra.mxu0 %v1060
        %v1988 = vpop.f32.mrf.mxu0
        %v1989 = vadd.f32 0.0, %v1988
        %v1990 = vpop.f32.mrf.mxu0
        %v1991 = vadd.f32 0.0, %v1990
        %1992 = vmatmul.bf16.gmra.mxu0 %v1061
        %v1993 = vpop.f32.mrf.mxu0
        %v1994 = vadd.f32 0.0, %v1993
        %v1995 = vpop.f32.mrf.mxu0
        %v1996 = vadd.f32 0.0, %v1995
        %1997 = vmatmul.bf16.gmra.mxu0 %v1062
        %v1998 = vpop.f32.mrf.mxu0
        %v1999 = vadd.f32 0.0, %v1998
        %v2000 = vpop.f32.mrf.mxu0
        %v2001 = vadd.f32 0.0, %v2000
        %2002 = vmatmul.bf16.gmra.mxu0 %v1063
        %v2003 = vpop.f32.mrf.mxu0
        %v2004 = vadd.f32 0.0, %v2003
        %v2005 = vpop.f32.mrf.mxu0
        %v2006 = vadd.f32 0.0, %v2005
        %2007 = vmatmul.bf16.gmra.mxu0 %v1064
        %v2008 = vpop.f32.mrf.mxu0
        %v2009 = vadd.f32 0.0, %v2008
        %v2010 = vpop.f32.mrf.mxu0
        %v2011 = vadd.f32 0.0, %v2010
        %2012 = vmatmul.bf16.gmra.mxu0 %v1065
        %v2013 = vpop.f32.mrf.mxu0
        %v2014 = vadd.f32 0.0, %v2013
        %v2015 = vpop.f32.mrf.mxu0
        %v2016 = vadd.f32 0.0, %v2015
        %2017 = vmatmul.bf16.gmra.mxu0 %v1066
        %v2018 = vpop.f32.mrf.mxu0
        %v2019 = vadd.f32 0.0, %v2018
        %v2020 = vpop.f32.mrf.mxu0
        %v2021 = vadd.f32 0.0, %v2020
        %2022 = vmatmul.bf16.gmra.mxu0 %v1067
        %v2023 = vpop.f32.mrf.mxu0
        %v2024 = vadd.f32 0.0, %v2023
        %v2025 = vpop.f32.mrf.mxu0
        %v2026 = vadd.f32 0.0, %v2025
        %2027 = vmatmul.bf16.gmra.mxu0 %v1068
        %v2028 = vpop.f32.mrf.mxu0
        %v2029 = vadd.f32 0.0, %v2028
        %v2030 = vpop.f32.mrf.mxu0
        %v2031 = vadd.f32 0.0, %v2030
        %2032 = vmatmul.bf16.gmra.mxu0 %v1069
        %v2033 = vpop.f32.mrf.mxu0
        %v2034 = vadd.f32 0.0, %v2033
        %v2035 = vpop.f32.mrf.mxu0
        %v2036 = vadd.f32 0.0, %v2035
        %2037 = vmatmul.bf16.gmra.mxu0 %v1070
        %v2038 = vpop.f32.mrf.mxu0
        %v2039 = vadd.f32 0.0, %v2038
        %v2040 = vpop.f32.mrf.mxu0
        %v2041 = vadd.f32 0.0, %v2040
        %2042 = vdwg.mxu0
        %v2059 = vunpack.c.l.b16 %v1873
        %v2060 = vunpack.c.l.b16 %v1874
        %v2061 = vunpack.c.l.b16 %v1875
        %v2062 = vunpack.c.l.b16 %v1876
        %v2063 = vunpack.c.l.b16 %v1877
        %v2064 = vunpack.c.l.b16 %v1878
        %v2065 = vunpack.c.l.b16 %v1879
        %v2066 = vunpack.c.l.b16 %v1880
        %v2067 = vunpack.c.l.b16 %v1881
        %v2068 = vunpack.c.l.b16 %v1882
        %v2069 = vunpack.c.l.b16 %v1883
        %v2070 = vunpack.c.l.b16 %v1884
        %v2071 = vunpack.c.l.b16 %v1885
        %v2072 = vunpack.c.l.b16 %v1886
        %v2073 = vunpack.c.l.b16 %v1887
        %v2074 = vunpack.c.l.b16 %v1888
        %v2075 = vpack.c.b16 %v2060, %v2059
        %v2076 = vpack.c.b16 %v2062, %v2061
        %v2077 = vpack.c.b16 %v2064, %v2063
        %v2078 = vpack.c.b16 %v2066, %v2065
        %v2079 = vpack.c.b16 %v2068, %v2067
        %v2080 = vpack.c.b16 %v2070, %v2069
        %v2081 = vpack.c.b16 %v2072, %v2071
        %v2082 = vpack.c.b16 %v2074, %v2073
        %2091 = vmatpush.bf16.msra.mxu0 %v2082
        %2092 = vmatpush.bf16.msra.mxu0 %v2081
        %2093 = vmatpush.bf16.msra.mxu0 %v2080
        %2094 = vmatpush.bf16.msra.mxu0 %v2079
        %2095 = vmatpush.bf16.msra.mxu0 %v2078
        %2096 = vmatpush.bf16.msra.mxu0 %v2077
        %2097 = vmatpush.bf16.msra.mxu0 %v2076
        %2098 = vmatpush.bf16.msra.mxu0 %v2075
        %2099 = vmatmul.bf16.gmra.mxu0 %v1856
        %v2100 = vpop.f32.mrf.mxu0
        %v2101 = vadd.f32 %v1964, %v2100
        %v2102 = vpop.f32.mrf.mxu0
        %v2103 = vadd.f32 %v1966, %v2102
        %2104 = vmatmul.bf16.gmra.mxu0 %v1857
        %v2105 = vpop.f32.mrf.mxu0
        %v2106 = vadd.f32 %v1969, %v2105
        %v2107 = vpop.f32.mrf.mxu0
        %v2108 = vadd.f32 %v1971, %v2107
        %2109 = vmatmul.bf16.gmra.mxu0 %v1858
        %v2110 = vpop.f32.mrf.mxu0
        %v2111 = vadd.f32 %v1974, %v2110
        %v2112 = vpop.f32.mrf.mxu0
        %v2113 = vadd.f32 %v1976, %v2112
        %2114 = vmatmul.bf16.gmra.mxu0 %v1859
        %v2115 = vpop.f32.mrf.mxu0
        %v2116 = vadd.f32 %v1979, %v2115
        %v2117 = vpop.f32.mrf.mxu0
        %v2118 = vadd.f32 %v1981, %v2117
        %2119 = vmatmul.bf16.gmra.mxu0 %v1860
        %v2120 = vpop.f32.mrf.mxu0
        %v2121 = vadd.f32 %v1984, %v2120
        %v2122 = vpop.f32.mrf.mxu0
        %v2123 = vadd.f32 %v1986, %v2122
        %2124 = vmatmul.bf16.gmra.mxu0 %v1861
        %v2125 = vpop.f32.mrf.mxu0
        %v2126 = vadd.f32 %v1989, %v2125
        %v2127 = vpop.f32.mrf.mxu0
        %v2128 = vadd.f32 %v1991, %v2127
        %2129 = vmatmul.bf16.gmra.mxu0 %v1862
        %v2130 = vpop.f32.mrf.mxu0
        %v2131 = vadd.f32 %v1994, %v2130
        %v2132 = vpop.f32.mrf.mxu0
        %v2133 = vadd.f32 %v1996, %v2132
        %2134 = vmatmul.bf16.gmra.mxu0 %v1863
        %v2135 = vpop.f32.mrf.mxu0
        %v2136 = vadd.f32 %v1999, %v2135
        %v2137 = vpop.f32.mrf.mxu0
        %v2138 = vadd.f32 %v2001, %v2137
        %2139 = vmatmul.bf16.gmra.mxu0 %v1864
        %v2140 = vpop.f32.mrf.mxu0
        %v2141 = vadd.f32 %v2004, %v2140
        %v2142 = vpop.f32.mrf.mxu0
        %v2143 = vadd.f32 %v2006, %v2142
        %2144 = vmatmul.bf16.gmra.mxu0 %v1865
        %v2145 = vpop.f32.mrf.mxu0
        %v2146 = vadd.f32 %v2009, %v2145
        %v2147 = vpop.f32.mrf.mxu0
        %v2148 = vadd.f32 %v2011, %v2147
        %2149 = vmatmul.bf16.gmra.mxu0 %v1866
        %v2150 = vpop.f32.mrf.mxu0
        %v2151 = vadd.f32 %v2014, %v2150
        %v2152 = vpop.f32.mrf.mxu0
        %v2153 = vadd.f32 %v2016, %v2152
        %2154 = vmatmul.bf16.gmra.mxu0 %v1867
        %v2155 = vpop.f32.mrf.mxu0
        %v2156 = vadd.f32 %v2019, %v2155
        %v2157 = vpop.f32.mrf.mxu0
        %v2158 = vadd.f32 %v2021, %v2157
        %2159 = vmatmul.bf16.gmra.mxu0 %v1868
        %v2160 = vpop.f32.mrf.mxu0
        %v2161 = vadd.f32 %v2024, %v2160
        %v2162 = vpop.f32.mrf.mxu0
        %v2163 = vadd.f32 %v2026, %v2162
        %2164 = vmatmul.bf16.gmra.mxu0 %v1869
        %v2165 = vpop.f32.mrf.mxu0
        %v2166 = vadd.f32 %v2029, %v2165
        %v2167 = vpop.f32.mrf.mxu0
        %v2168 = vadd.f32 %v2031, %v2167
        %2169 = vmatmul.bf16.gmra.mxu0 %v1870
        %v2170 = vpop.f32.mrf.mxu0
        %v2171 = vadd.f32 %v2034, %v2170
        %v2172 = vpop.f32.mrf.mxu0
        %v2173 = vadd.f32 %v2036, %v2172
        %2174 = vmatmul.bf16.gmra.mxu0 %v1871
        %v2175 = vpop.f32.mrf.mxu0
        %v2176 = vadd.f32 %v2039, %v2175
        %v2177 = vpop.f32.mrf.mxu0
        %v2178 = vadd.f32 %v2041, %v2177
        %2179 = vdwg.mxu0
        %v2180 = vld [vmem:[#allocation13 + $0x1] sm:$0x1]
        %v2181 = vperm.slane %v2180, 0
        %v2182 = vadd.f32 %v2101, %v2181
        %v2183 = vadd.f32 %v2103, %v2181
        %v2184 = vadd.f32 %v2106, %v2181
        %v2185 = vadd.f32 %v2108, %v2181
        %v2186 = vadd.f32 %v2111, %v2181
        %v2187 = vadd.f32 %v2113, %v2181
        %v2188 = vadd.f32 %v2116, %v2181
        %v2189 = vadd.f32 %v2118, %v2181
        %v2190 = vadd.f32 %v2121, %v2181
        %v2191 = vadd.f32 %v2123, %v2181
        %v2192 = vadd.f32 %v2126, %v2181
        %v2193 = vadd.f32 %v2128, %v2181
        %v2194 = vadd.f32 %v2131, %v2181
        %v2195 = vadd.f32 %v2133, %v2181
        %v2196 = vadd.f32 %v2136, %v2181
        %v2197 = vadd.f32 %v2138, %v2181
        %v2198 = vadd.f32 %v2141, %v2181
        %v2199 = vadd.f32 %v2143, %v2181
        %v2200 = vadd.f32 %v2146, %v2181
        %v2201 = vadd.f32 %v2148, %v2181
        %v2202 = vadd.f32 %v2151, %v2181
        %v2203 = vadd.f32 %v2153, %v2181
        %v2204 = vadd.f32 %v2156, %v2181
        %v2205 = vadd.f32 %v2158, %v2181
        %v2206 = vadd.f32 %v2161, %v2181
        %v2207 = vadd.f32 %v2163, %v2181
        %v2208 = vadd.f32 %v2166, %v2181
        %v2209 = vadd.f32 %v2168, %v2181
        %v2210 = vadd.f32 %v2171, %v2181
        %v2211 = vadd.f32 %v2173, %v2181
        %v2212 = vadd.f32 %v2176, %v2181
        %v2213 = vadd.f32 %v2178, %v2181
        %v2214 = vmax.f32 %v2182, 0.0
        %v2215 = vmax.f32 %v2183, 0.0
        %v2216 = vmax.f32 %v2184, 0.0
        %v2217 = vmax.f32 %v2185, 0.0
        %v2218 = vmax.f32 %v2186, 0.0
        %v2219 = vmax.f32 %v2187, 0.0
        %v2220 = vmax.f32 %v2188, 0.0
        %v2221 = vmax.f32 %v2189, 0.0
        %v2222 = vmax.f32 %v2190, 0.0
        %v2223 = vmax.f32 %v2191, 0.0
        %v2224 = vmax.f32 %v2192, 0.0
        %v2225 = vmax.f32 %v2193, 0.0
        %v2226 = vmax.f32 %v2194, 0.0
        %v2227 = vmax.f32 %v2195, 0.0
        %v2228 = vmax.f32 %v2196, 0.0
        %v2229 = vmax.f32 %v2197, 0.0
        %v2230 = vmax.f32 %v2198, 0.0
        %v2231 = vmax.f32 %v2199, 0.0
        %v2232 = vmax.f32 %v2200, 0.0
        %v2233 = vmax.f32 %v2201, 0.0
        %v2234 = vmax.f32 %v2202, 0.0
        %v2235 = vmax.f32 %v2203, 0.0
        %v2236 = vmax.f32 %v2204, 0.0
        %v2237 = vmax.f32 %v2205, 0.0
        %v2238 = vmax.f32 %v2206, 0.0
        %v2239 = vmax.f32 %v2207, 0.0
        %v2240 = vmax.f32 %v2208, 0.0
        %v2241 = vmax.f32 %v2209, 0.0
        %v2242 = vmax.f32 %v2210, 0.0
        %v2243 = vmax.f32 %v2211, 0.0
        %v2244 = vmax.f32 %v2212, 0.0
        %v2245 = vmax.f32 %v2213, 0.0
        %v2246 = vpack.c.bf16 %v2215, %v2214
        %v2247 = vpack.c.bf16 %v2217, %v2216
        %v2248 = vpack.c.bf16 %v2219, %v2218
        %v2249 = vpack.c.bf16 %v2221, %v2220
        %v2250 = vpack.c.bf16 %v2223, %v2222
        %v2251 = vpack.c.bf16 %v2225, %v2224
        %v2252 = vpack.c.bf16 %v2227, %v2226
        %v2253 = vpack.c.bf16 %v2229, %v2228
        %v2254 = vpack.c.bf16 %v2231, %v2230
        %v2255 = vpack.c.bf16 %v2233, %v2232
        %v2256 = vpack.c.bf16 %v2235, %v2234
        %v2257 = vpack.c.bf16 %v2237, %v2236
        %v2258 = vpack.c.bf16 %v2239, %v2238
        %v2259 = vpack.c.bf16 %v2241, %v2240
        %v2260 = vpack.c.bf16 %v2243, %v2242
        %v2261 = vpack.c.bf16 %v2245, %v2244
        %s2262 = scalar_lea.vmem [#allocation11], 64
        %v2263 = vld [vmem:[%s2262] sm:$0xf]
        %v2264 = vld [vmem:[%s2262 + $0x4] sm:$0xf]
        %v2265 = vld [vmem:[%s2262 + $0x8] sm:$0xf]
        %v2266 = vld [vmem:[%s2262 + $0xc] sm:$0xf]
        %v2267 = vld [vmem:[%s2262 + $0x10] sm:$0xf]
        %v2268 = vld [vmem:[%s2262 + $0x14] sm:$0xf]
        %v2269 = vld [vmem:[%s2262 + $0x18] sm:$0xf]
        %v2270 = vld [vmem:[%s2262 + $0x1c] sm:$0xf]
        %v2271 = vld [vmem:[%s2262 + $0x20] sm:$0xf]
        %v2272 = vld [vmem:[%s2262 + $0x24] sm:$0xf]
        %v2273 = vld [vmem:[%s2262 + $0x28] sm:$0xf]
        %v2274 = vld [vmem:[%s2262 + $0x2c] sm:$0xf]
        %v2275 = vld [vmem:[%s2262 + $0x30] sm:$0xf]
        %v2276 = vld [vmem:[%s2262 + $0x34] sm:$0xf]
        %v2277 = vld [vmem:[%s2262 + $0x38] sm:$0xf]
        %v2278 = vld [vmem:[%s2262 + $0x3c] sm:$0xf]
        %v2279 = vld [vmem:[#allocation13 + $0x4] sm:$0x1]
        %v2280 = vperm.slane %v2279, 0
        %v2297 = vunpack.c.l.b16 %v2263
        %v2298 = vunpack.c.l.b16 %v2264
        %v2299 = vunpack.c.l.b16 %v2265
        %v2300 = vunpack.c.l.b16 %v2266
        %v2301 = vunpack.c.l.b16 %v2267
        %v2302 = vunpack.c.l.b16 %v2268
        %v2303 = vunpack.c.l.b16 %v2269
        %v2304 = vunpack.c.l.b16 %v2270
        %v2305 = vunpack.c.l.b16 %v2271
        %v2306 = vunpack.c.l.b16 %v2272
        %v2307 = vunpack.c.l.b16 %v2273
        %v2308 = vunpack.c.l.b16 %v2274
        %v2309 = vunpack.c.l.b16 %v2275
        %v2310 = vunpack.c.l.b16 %v2276
        %v2311 = vunpack.c.l.b16 %v2277
        %v2312 = vunpack.c.l.b16 %v2278
        %v2313 = vpack.c.b16 %v2298, %v2297
        %v2314 = vpack.c.b16 %v2300, %v2299
        %v2315 = vpack.c.b16 %v2302, %v2301
        %v2316 = vpack.c.b16 %v2304, %v2303
        %v2317 = vpack.c.b16 %v2306, %v2305
        %v2318 = vpack.c.b16 %v2308, %v2307
        %v2319 = vpack.c.b16 %v2310, %v2309
        %v2320 = vpack.c.b16 %v2312, %v2311
        %2329 = vmatpush.bf16.msra.mxu0 %v2320
        %2330 = vmatpush.bf16.msra.mxu0 %v2319
        %2331 = vmatpush.bf16.msra.mxu0 %v2318
        %2332 = vmatpush.bf16.msra.mxu0 %v2317
        %2333 = vmatpush.bf16.msra.mxu0 %v2316
        %2334 = vmatpush.bf16.msra.mxu0 %v2315
        %2335 = vmatpush.bf16.msra.mxu0 %v2314
        %2336 = vmatpush.bf16.msra.mxu0 %v2313
        %2337 = vmatmul.bf16.gmra.mxu0 %v2246
        %v2338 = vpop.f32.mrf.mxu0
        %v2339 = vadd.f32 %v2280, %v2338
        %v2340 = vpop.f32.mrf.mxu0
        %v2341 = vadd.f32 %v2280, %v2340
        %2342 = vmatmul.bf16.gmra.mxu0 %v2247
        %v2343 = vpop.f32.mrf.mxu0
        %v2344 = vadd.f32 %v2280, %v2343
        %v2345 = vpop.f32.mrf.mxu0
        %v2346 = vadd.f32 %v2280, %v2345
        %2347 = vmatmul.bf16.gmra.mxu0 %v2248
        %v2348 = vpop.f32.mrf.mxu0
        %v2349 = vadd.f32 %v2280, %v2348
        %v2350 = vpop.f32.mrf.mxu0
        %v2351 = vadd.f32 %v2280, %v2350
        %2352 = vmatmul.bf16.gmra.mxu0 %v2249
        %v2353 = vpop.f32.mrf.mxu0
        %v2354 = vadd.f32 %v2280, %v2353
        %v2355 = vpop.f32.mrf.mxu0
        %v2356 = vadd.f32 %v2280, %v2355
        %2357 = vmatmul.bf16.gmra.mxu0 %v2250
        %v2358 = vpop.f32.mrf.mxu0
        %v2359 = vadd.f32 %v2280, %v2358
        %v2360 = vpop.f32.mrf.mxu0
        %v2361 = vadd.f32 %v2280, %v2360
        %2362 = vmatmul.bf16.gmra.mxu0 %v2251
        %v2363 = vpop.f32.mrf.mxu0
        %v2364 = vadd.f32 %v2280, %v2363
        %v2365 = vpop.f32.mrf.mxu0
        %v2366 = vadd.f32 %v2280, %v2365
        %2367 = vmatmul.bf16.gmra.mxu0 %v2252
        %v2368 = vpop.f32.mrf.mxu0
        %v2369 = vadd.f32 %v2280, %v2368
        %v2370 = vpop.f32.mrf.mxu0
        %v2371 = vadd.f32 %v2280, %v2370
        %2372 = vmatmul.bf16.gmra.mxu0 %v2253
        %v2373 = vpop.f32.mrf.mxu0
        %v2374 = vadd.f32 %v2280, %v2373
        %v2375 = vpop.f32.mrf.mxu0
        %v2376 = vadd.f32 %v2280, %v2375
        %2377 = vmatmul.bf16.gmra.mxu0 %v2254
        %v2378 = vpop.f32.mrf.mxu0
        %v2379 = vadd.f32 %v2280, %v2378
        %v2380 = vpop.f32.mrf.mxu0
        %v2381 = vadd.f32 %v2280, %v2380
        %2382 = vmatmul.bf16.gmra.mxu0 %v2255
        %v2383 = vpop.f32.mrf.mxu0
        %v2384 = vadd.f32 %v2280, %v2383
        %v2385 = vpop.f32.mrf.mxu0
        %v2386 = vadd.f32 %v2280, %v2385
        %2387 = vmatmul.bf16.gmra.mxu0 %v2256
        %v2388 = vpop.f32.mrf.mxu0
        %v2389 = vadd.f32 %v2280, %v2388
        %v2390 = vpop.f32.mrf.mxu0
        %v2391 = vadd.f32 %v2280, %v2390
        %2392 = vmatmul.bf16.gmra.mxu0 %v2257
        %v2393 = vpop.f32.mrf.mxu0
        %v2394 = vadd.f32 %v2280, %v2393
        %v2395 = vpop.f32.mrf.mxu0
        %v2396 = vadd.f32 %v2280, %v2395
        %2397 = vmatmul.bf16.gmra.mxu0 %v2258
        %v2398 = vpop.f32.mrf.mxu0
        %v2399 = vadd.f32 %v2280, %v2398
        %v2400 = vpop.f32.mrf.mxu0
        %v2401 = vadd.f32 %v2280, %v2400
        %2402 = vmatmul.bf16.gmra.mxu0 %v2259
        %v2403 = vpop.f32.mrf.mxu0
        %v2404 = vadd.f32 %v2280, %v2403
        %v2405 = vpop.f32.mrf.mxu0
        %v2406 = vadd.f32 %v2280, %v2405
        %2407 = vmatmul.bf16.gmra.mxu0 %v2260
        %v2408 = vpop.f32.mrf.mxu0
        %v2409 = vadd.f32 %v2280, %v2408
        %v2410 = vpop.f32.mrf.mxu0
        %v2411 = vadd.f32 %v2280, %v2410
        %2412 = vmatmul.bf16.gmra.mxu0 %v2261
        %v2413 = vpop.f32.mrf.mxu0
        %v2414 = vadd.f32 %v2280, %v2413
        %v2415 = vpop.f32.mrf.mxu0
        %v2416 = vadd.f32 %v2280, %v2415
        %2417 = vdwg.mxu0
        %v2418 = vmax.f32 %v2339, 0.0
        %v2419 = vmax.f32 %v2341, 0.0
        %v2420 = vmax.f32 %v2344, 0.0
        %v2421 = vmax.f32 %v2346, 0.0
        %v2422 = vmax.f32 %v2349, 0.0
        %v2423 = vmax.f32 %v2351, 0.0
        %v2424 = vmax.f32 %v2354, 0.0
        %v2425 = vmax.f32 %v2356, 0.0
        %v2426 = vmax.f32 %v2359, 0.0
        %v2427 = vmax.f32 %v2361, 0.0
        %v2428 = vmax.f32 %v2364, 0.0
        %v2429 = vmax.f32 %v2366, 0.0
        %v2430 = vmax.f32 %v2369, 0.0
        %v2431 = vmax.f32 %v2371, 0.0
        %v2432 = vmax.f32 %v2374, 0.0
        %v2433 = vmax.f32 %v2376, 0.0
        %v2434 = vmax.f32 %v2379, 0.0
        %v2435 = vmax.f32 %v2381, 0.0
        %v2436 = vmax.f32 %v2384, 0.0
        %v2437 = vmax.f32 %v2386, 0.0
        %v2438 = vmax.f32 %v2389, 0.0
        %v2439 = vmax.f32 %v2391, 0.0
        %v2440 = vmax.f32 %v2394, 0.0
        %v2441 = vmax.f32 %v2396, 0.0
        %v2442 = vmax.f32 %v2399, 0.0
        %v2443 = vmax.f32 %v2401, 0.0
        %v2444 = vmax.f32 %v2404, 0.0
        %v2445 = vmax.f32 %v2406, 0.0
        %v2446 = vmax.f32 %v2409, 0.0
        %v2447 = vmax.f32 %v2411, 0.0
        %v2448 = vmax.f32 %v2414, 0.0
        %v2449 = vmax.f32 %v2416, 0.0
        %v2450 = vpack.c.bf16 %v2418, %v2418
        %v2451 = vpack.c.bf16 %v2419, %v2419
        %v2452 = vpack.c.bf16 %v2420, %v2420
        %v2453 = vpack.c.bf16 %v2421, %v2421
        %v2454 = vpack.c.bf16 %v2422, %v2422
        %v2455 = vpack.c.bf16 %v2423, %v2423
        %v2456 = vpack.c.bf16 %v2424, %v2424
        %v2457 = vpack.c.bf16 %v2425, %v2425
        %v2458 = vpack.c.bf16 %v2426, %v2426
        %v2459 = vpack.c.bf16 %v2427, %v2427
        %v2460 = vpack.c.bf16 %v2428, %v2428
        %v2461 = vpack.c.bf16 %v2429, %v2429
        %v2462 = vpack.c.bf16 %v2430, %v2430
        %v2463 = vpack.c.bf16 %v2431, %v2431
        %v2464 = vpack.c.bf16 %v2432, %v2432
        %v2465 = vpack.c.bf16 %v2433, %v2433
        %v2466 = vpack.c.bf16 %v2434, %v2434
        %v2467 = vpack.c.bf16 %v2435, %v2435
        %v2468 = vpack.c.bf16 %v2436, %v2436
        %v2469 = vpack.c.bf16 %v2437, %v2437
        %v2470 = vpack.c.bf16 %v2438, %v2438
        %v2471 = vpack.c.bf16 %v2439, %v2439
        %v2472 = vpack.c.bf16 %v2440, %v2440
        %v2473 = vpack.c.bf16 %v2441, %v2441
        %v2474 = vpack.c.bf16 %v2442, %v2442
        %v2475 = vpack.c.bf16 %v2443, %v2443
        %v2476 = vpack.c.bf16 %v2444, %v2444
        %v2477 = vpack.c.bf16 %v2445, %v2445
        %v2478 = vpack.c.bf16 %v2446, %v2446
        %v2479 = vpack.c.bf16 %v2447, %v2447
        %v2480 = vpack.c.bf16 %v2448, %v2448
        %v2481 = vpack.c.bf16 %v2449, %v2449
        %v2498 = vunpack.c.l.b16 %v2450
        %v2499 = vunpack.c.l.b16 %v2451
        %v2500 = vunpack.c.l.b16 %v2452
        %v2501 = vunpack.c.l.b16 %v2453
        %v2502 = vunpack.c.l.b16 %v2454
        %v2503 = vunpack.c.l.b16 %v2455
        %v2504 = vunpack.c.l.b16 %v2456
        %v2505 = vunpack.c.l.b16 %v2457
        %v2506 = vunpack.c.l.b16 %v2458
        %v2507 = vunpack.c.l.b16 %v2459
        %v2508 = vunpack.c.l.b16 %v2460
        %v2509 = vunpack.c.l.b16 %v2461
        %v2510 = vunpack.c.l.b16 %v2462
        %v2511 = vunpack.c.l.b16 %v2463
        %v2512 = vunpack.c.l.b16 %v2464
        %v2513 = vunpack.c.l.b16 %v2465
        %v2514 = vpack.c.b16 %v2499, %v2498
        %v2515 = vpack.c.b16 %v2501, %v2500
        %v2516 = vpack.c.b16 %v2503, %v2502
        %v2517 = vpack.c.b16 %v2505, %v2504
        %v2518 = vpack.c.b16 %v2507, %v2506
        %v2519 = vpack.c.b16 %v2509, %v2508
        %v2520 = vpack.c.b16 %v2511, %v2510
        %v2521 = vpack.c.b16 %v2513, %v2512
        %2530 = vmatpush.bf16.msra.mxu0 %v2521
        %2531 = vmatpush.bf16.msra.mxu0 %v2520
        %2532 = vmatpush.bf16.msra.mxu0 %v2519
        %2533 = vmatpush.bf16.msra.mxu0 %v2518
        %2534 = vmatpush.bf16.msra.mxu0 %v2517
        %2535 = vmatpush.bf16.msra.mxu0 %v2516
        %2536 = vmatpush.bf16.msra.mxu0 %v2515
        %2537 = vmatpush.bf16.msra.mxu0 %v2514
        %2538 = vmatmul.bf16.gmra.mxu0 %v636
        %v2539 = vpop.f32.mrf.mxu0
        %v2540 = vadd.f32 0.0, %v2539
        %v2541 = vpop.f32.mrf.mxu0
        %v2542 = vadd.f32 0.0, %v2541
        %2543 = vmatmul.bf16.gmra.mxu0 %v637
        %v2544 = vpop.f32.mrf.mxu0
        %v2545 = vadd.f32 0.0, %v2544
        %v2546 = vpop.f32.mrf.mxu0
        %v2547 = vadd.f32 0.0, %v2546
        %2548 = vmatmul.bf16.gmra.mxu0 %v638
        %v2549 = vpop.f32.mrf.mxu0
        %v2550 = vadd.f32 0.0, %v2549
        %v2551 = vpop.f32.mrf.mxu0
        %v2552 = vadd.f32 0.0, %v2551
        %2553 = vmatmul.bf16.gmra.mxu0 %v639
        %v2554 = vpop.f32.mrf.mxu0
        %v2555 = vadd.f32 0.0, %v2554
        %v2556 = vpop.f32.mrf.mxu0
        %v2557 = vadd.f32 0.0, %v2556
        %2558 = vmatmul.bf16.gmra.mxu0 %v640
        %v2559 = vpop.f32.mrf.mxu0
        %v2560 = vadd.f32 0.0, %v2559
        %v2561 = vpop.f32.mrf.mxu0
        %v2562 = vadd.f32 0.0, %v2561
        %2563 = vmatmul.bf16.gmra.mxu0 %v641
        %v2564 = vpop.f32.mrf.mxu0
        %v2565 = vadd.f32 0.0, %v2564
        %v2566 = vpop.f32.mrf.mxu0
        %v2567 = vadd.f32 0.0, %v2566
        %2568 = vmatmul.bf16.gmra.mxu0 %v642
        %v2569 = vpop.f32.mrf.mxu0
        %v2570 = vadd.f32 0.0, %v2569
        %v2571 = vpop.f32.mrf.mxu0
        %v2572 = vadd.f32 0.0, %v2571
        %2573 = vmatmul.bf16.gmra.mxu0 %v643
        %v2574 = vpop.f32.mrf.mxu0
        %v2575 = vadd.f32 0.0, %v2574
        %v2576 = vpop.f32.mrf.mxu0
        %v2577 = vadd.f32 0.0, %v2576
        %2578 = vdwg.mxu0
        %v2595 = vunpack.c.l.b16 %v2466
        %v2596 = vunpack.c.l.b16 %v2467
        %v2597 = vunpack.c.l.b16 %v2468
        %v2598 = vunpack.c.l.b16 %v2469
        %v2599 = vunpack.c.l.b16 %v2470
        %v2600 = vunpack.c.l.b16 %v2471
        %v2601 = vunpack.c.l.b16 %v2472
        %v2602 = vunpack.c.l.b16 %v2473
        %v2603 = vunpack.c.l.b16 %v2474
        %v2604 = vunpack.c.l.b16 %v2475
        %v2605 = vunpack.c.l.b16 %v2476
        %v2606 = vunpack.c.l.b16 %v2477
        %v2607 = vunpack.c.l.b16 %v2478
        %v2608 = vunpack.c.l.b16 %v2479
        %v2609 = vunpack.c.l.b16 %v2480
        %v2610 = vunpack.c.l.b16 %v2481
        %v2611 = vpack.c.b16 %v2596, %v2595
        %v2612 = vpack.c.b16 %v2598, %v2597
        %v2613 = vpack.c.b16 %v2600, %v2599
        %v2614 = vpack.c.b16 %v2602, %v2601
        %v2615 = vpack.c.b16 %v2604, %v2603
        %v2616 = vpack.c.b16 %v2606, %v2605
        %v2617 = vpack.c.b16 %v2608, %v2607
        %v2618 = vpack.c.b16 %v2610, %v2609
        %2627 = vmatpush.bf16.msra.mxu0 %v2618
        %2628 = vmatpush.bf16.msra.mxu0 %v2617
        %2629 = vmatpush.bf16.msra.mxu0 %v2616
        %2630 = vmatpush.bf16.msra.mxu0 %v2615
        %2631 = vmatpush.bf16.msra.mxu0 %v2614
        %2632 = vmatpush.bf16.msra.mxu0 %v2613
        %2633 = vmatpush.bf16.msra.mxu0 %v2612
        %2634 = vmatpush.bf16.msra.mxu0 %v2611
        %2635 = vmatmul.bf16.gmra.mxu0 %v798
        %v2636 = vpop.f32.mrf.mxu0
        %v2637 = vadd.f32 0.0, %v2636
        %v2638 = vpop.f32.mrf.mxu0
        %v2639 = vadd.f32 0.0, %v2638
        %2640 = vmatmul.bf16.gmra.mxu0 %v799
        %v2641 = vpop.f32.mrf.mxu0
        %v2642 = vadd.f32 0.0, %v2641
        %v2643 = vpop.f32.mrf.mxu0
        %v2644 = vadd.f32 0.0, %v2643
        %2645 = vmatmul.bf16.gmra.mxu0 %v800
        %v2646 = vpop.f32.mrf.mxu0
        %v2647 = vadd.f32 0.0, %v2646
        %v2648 = vpop.f32.mrf.mxu0
        %v2649 = vadd.f32 0.0, %v2648
        %2650 = vmatmul.bf16.gmra.mxu0 %v801
        %v2651 = vpop.f32.mrf.mxu0
        %v2652 = vadd.f32 0.0, %v2651
        %v2653 = vpop.f32.mrf.mxu0
        %v2654 = vadd.f32 0.0, %v2653
        %2655 = vmatmul.bf16.gmra.mxu0 %v802
        %v2656 = vpop.f32.mrf.mxu0
        %v2657 = vadd.f32 0.0, %v2656
        %v2658 = vpop.f32.mrf.mxu0
        %v2659 = vadd.f32 0.0, %v2658
        %2660 = vmatmul.bf16.gmra.mxu0 %v803
        %v2661 = vpop.f32.mrf.mxu0
        %v2662 = vadd.f32 0.0, %v2661
        %v2663 = vpop.f32.mrf.mxu0
        %v2664 = vadd.f32 0.0, %v2663
        %2665 = vmatmul.bf16.gmra.mxu0 %v804
        %v2666 = vpop.f32.mrf.mxu0
        %v2667 = vadd.f32 0.0, %v2666
        %v2668 = vpop.f32.mrf.mxu0
        %v2669 = vadd.f32 0.0, %v2668
        %2670 = vmatmul.bf16.gmra.mxu0 %v805
        %v2671 = vpop.f32.mrf.mxu0
        %v2672 = vadd.f32 0.0, %v2671
        %v2673 = vpop.f32.mrf.mxu0
        %v2674 = vadd.f32 0.0, %v2673
        %2675 = vdwg.mxu0
        %v2676 = vpack.c.bf16 %v2542, %v2540
        %v2677 = vpack.c.bf16 %v2547, %v2545
        %v2678 = vpack.c.bf16 %v2552, %v2550
        %v2679 = vpack.c.bf16 %v2557, %v2555
        %v2680 = vpack.c.bf16 %v2562, %v2560
        %v2681 = vpack.c.bf16 %v2567, %v2565
        %v2682 = vpack.c.bf16 %v2572, %v2570
        %v2683 = vpack.c.bf16 %v2577, %v2575
        %v2684 = vpack.c.bf16 %v2639, %v2637
        %v2685 = vpack.c.bf16 %v2644, %v2642
        %v2686 = vpack.c.bf16 %v2649, %v2647
        %v2687 = vpack.c.bf16 %v2654, %v2652
        %v2688 = vpack.c.bf16 %v2659, %v2657
        %v2689 = vpack.c.bf16 %v2664, %v2662
        %v2690 = vpack.c.bf16 %v2669, %v2667
        %v2691 = vpack.c.bf16 %v2674, %v2672
        %s2692 = scalar_lea.vmem [#allocation8], 128
        %v2693 = vld [vmem:[%s2692] sm:$0xf]
        %v2694 = vld [vmem:[%s2692 + $0x4] sm:$0xf]
        %v2695 = vld [vmem:[%s2692 + $0x8] sm:$0xf]
        %v2696 = vld [vmem:[%s2692 + $0xc] sm:$0xf]
        %v2697 = vld [vmem:[%s2692 + $0x10] sm:$0xf]
        %v2698 = vld [vmem:[%s2692 + $0x14] sm:$0xf]
        %v2699 = vld [vmem:[%s2692 + $0x18] sm:$0xf]
        %v2700 = vld [vmem:[%s2692 + $0x1c] sm:$0xf]
        %v2701 = vld [vmem:[%s2692 + $0x20] sm:$0xf]
        %v2702 = vld [vmem:[%s2692 + $0x24] sm:$0xf]
        %v2703 = vld [vmem:[%s2692 + $0x28] sm:$0xf]
        %v2704 = vld [vmem:[%s2692 + $0x2c] sm:$0xf]
        %v2705 = vld [vmem:[%s2692 + $0x30] sm:$0xf]
        %v2706 = vld [vmem:[%s2692 + $0x34] sm:$0xf]
        %v2707 = vld [vmem:[%s2692 + $0x38] sm:$0xf]
        %v2708 = vld [vmem:[%s2692 + $0x3c] sm:$0xf]
        %s2709 = scalar_lea.vmem [#allocation10], 128
        %v2710 = vld [vmem:[%s2709] sm:$0xf]
        %v2711 = vld [vmem:[%s2709 + $0x4] sm:$0xf]
        %v2712 = vld [vmem:[%s2709 + $0x8] sm:$0xf]
        %v2713 = vld [vmem:[%s2709 + $0xc] sm:$0xf]
        %v2714 = vld [vmem:[%s2709 + $0x10] sm:$0xf]
        %v2715 = vld [vmem:[%s2709 + $0x14] sm:$0xf]
        %v2716 = vld [vmem:[%s2709 + $0x18] sm:$0xf]
        %v2717 = vld [vmem:[%s2709 + $0x1c] sm:$0xf]
        %v2718 = vld [vmem:[%s2709 + $0x20] sm:$0xf]
        %v2719 = vld [vmem:[%s2709 + $0x24] sm:$0xf]
        %v2720 = vld [vmem:[%s2709 + $0x28] sm:$0xf]
        %v2721 = vld [vmem:[%s2709 + $0x2c] sm:$0xf]
        %v2722 = vld [vmem:[%s2709 + $0x30] sm:$0xf]
        %v2723 = vld [vmem:[%s2709 + $0x34] sm:$0xf]
        %v2724 = vld [vmem:[%s2709 + $0x38] sm:$0xf]
        %v2725 = vld [vmem:[%s2709 + $0x3c] sm:$0xf]
        %v2742 = vunpack.c.l.b16 %v2710
        %v2743 = vunpack.c.l.b16 %v2711
        %v2744 = vunpack.c.l.b16 %v2712
        %v2745 = vunpack.c.l.b16 %v2713
        %v2746 = vunpack.c.l.b16 %v2714
        %v2747 = vunpack.c.l.b16 %v2715
        %v2748 = vunpack.c.l.b16 %v2716
        %v2749 = vunpack.c.l.b16 %v2717
        %v2750 = vunpack.c.l.b16 %v2718
        %v2751 = vunpack.c.l.b16 %v2719
        %v2752 = vunpack.c.l.b16 %v2720
        %v2753 = vunpack.c.l.b16 %v2721
        %v2754 = vunpack.c.l.b16 %v2722
        %v2755 = vunpack.c.l.b16 %v2723
        %v2756 = vunpack.c.l.b16 %v2724
        %v2757 = vunpack.c.l.b16 %v2725
        %v2758 = vpack.c.b16 %v2743, %v2742
        %v2759 = vpack.c.b16 %v2745, %v2744
        %v2760 = vpack.c.b16 %v2747, %v2746
        %v2761 = vpack.c.b16 %v2749, %v2748
        %v2762 = vpack.c.b16 %v2751, %v2750
        %v2763 = vpack.c.b16 %v2753, %v2752
        %v2764 = vpack.c.b16 %v2755, %v2754
        %v2765 = vpack.c.b16 %v2757, %v2756
        %2774 = vmatpush.bf16.msra.mxu0 %v2765
        %2775 = vmatpush.bf16.msra.mxu0 %v2764
        %2776 = vmatpush.bf16.msra.mxu0 %v2763
        %2777 = vmatpush.bf16.msra.mxu0 %v2762
        %2778 = vmatpush.bf16.msra.mxu0 %v2761
        %2779 = vmatpush.bf16.msra.mxu0 %v2760
        %2780 = vmatpush.bf16.msra.mxu0 %v2759
        %2781 = vmatpush.bf16.msra.mxu0 %v2758
        %2782 = vmatmul.bf16.gmra.mxu0 %v1055
        %v2783 = vpop.f32.mrf.mxu0
        %v2784 = vadd.f32 0.0, %v2783
        %v2785 = vpop.f32.mrf.mxu0
        %v2786 = vadd.f32 0.0, %v2785
        %2787 = vmatmul.bf16.gmra.mxu0 %v1056
        %v2788 = vpop.f32.mrf.mxu0
        %v2789 = vadd.f32 0.0, %v2788
        %v2790 = vpop.f32.mrf.mxu0
        %v2791 = vadd.f32 0.0, %v2790
        %2792 = vmatmul.bf16.gmra.mxu0 %v1057
        %v2793 = vpop.f32.mrf.mxu0
        %v2794 = vadd.f32 0.0, %v2793
        %v2795 = vpop.f32.mrf.mxu0
        %v2796 = vadd.f32 0.0, %v2795
        %2797 = vmatmul.bf16.gmra.mxu0 %v1058
        %v2798 = vpop.f32.mrf.mxu0
        %v2799 = vadd.f32 0.0, %v2798
        %v2800 = vpop.f32.mrf.mxu0
        %v2801 = vadd.f32 0.0, %v2800
        %2802 = vmatmul.bf16.gmra.mxu0 %v1059
        %v2803 = vpop.f32.mrf.mxu0
        %v2804 = vadd.f32 0.0, %v2803
        %v2805 = vpop.f32.mrf.mxu0
        %v2806 = vadd.f32 0.0, %v2805
        %2807 = vmatmul.bf16.gmra.mxu0 %v1060
        %v2808 = vpop.f32.mrf.mxu0
        %v2809 = vadd.f32 0.0, %v2808
        %v2810 = vpop.f32.mrf.mxu0
        %v2811 = vadd.f32 0.0, %v2810
        %2812 = vmatmul.bf16.gmra.mxu0 %v1061
        %v2813 = vpop.f32.mrf.mxu0
        %v2814 = vadd.f32 0.0, %v2813
        %v2815 = vpop.f32.mrf.mxu0
        %v2816 = vadd.f32 0.0, %v2815
        %2817 = vmatmul.bf16.gmra.mxu0 %v1062
        %v2818 = vpop.f32.mrf.mxu0
        %v2819 = vadd.f32 0.0, %v2818
        %v2820 = vpop.f32.mrf.mxu0
        %v2821 = vadd.f32 0.0, %v2820
        %2822 = vmatmul.bf16.gmra.mxu0 %v1063
        %v2823 = vpop.f32.mrf.mxu0
        %v2824 = vadd.f32 0.0, %v2823
        %v2825 = vpop.f32.mrf.mxu0
        %v2826 = vadd.f32 0.0, %v2825
        %2827 = vmatmul.bf16.gmra.mxu0 %v1064
        %v2828 = vpop.f32.mrf.mxu0
        %v2829 = vadd.f32 0.0, %v2828
        %v2830 = vpop.f32.mrf.mxu0
        %v2831 = vadd.f32 0.0, %v2830
        %2832 = vmatmul.bf16.gmra.mxu0 %v1065
        %v2833 = vpop.f32.mrf.mxu0
        %v2834 = vadd.f32 0.0, %v2833
        %v2835 = vpop.f32.mrf.mxu0
        %v2836 = vadd.f32 0.0, %v2835
        %2837 = vmatmul.bf16.gmra.mxu0 %v1066
        %v2838 = vpop.f32.mrf.mxu0
        %v2839 = vadd.f32 0.0, %v2838
        %v2840 = vpop.f32.mrf.mxu0
        %v2841 = vadd.f32 0.0, %v2840
        %2842 = vmatmul.bf16.gmra.mxu0 %v1067
        %v2843 = vpop.f32.mrf.mxu0
        %v2844 = vadd.f32 0.0, %v2843
        %v2845 = vpop.f32.mrf.mxu0
        %v2846 = vadd.f32 0.0, %v2845
        %2847 = vmatmul.bf16.gmra.mxu0 %v1068
        %v2848 = vpop.f32.mrf.mxu0
        %v2849 = vadd.f32 0.0, %v2848
        %v2850 = vpop.f32.mrf.mxu0
        %v2851 = vadd.f32 0.0, %v2850
        %2852 = vmatmul.bf16.gmra.mxu0 %v1069
        %v2853 = vpop.f32.mrf.mxu0
        %v2854 = vadd.f32 0.0, %v2853
        %v2855 = vpop.f32.mrf.mxu0
        %v2856 = vadd.f32 0.0, %v2855
        %2857 = vmatmul.bf16.gmra.mxu0 %v1070
        %v2858 = vpop.f32.mrf.mxu0
        %v2859 = vadd.f32 0.0, %v2858
        %v2860 = vpop.f32.mrf.mxu0
        %v2861 = vadd.f32 0.0, %v2860
        %2862 = vdwg.mxu0
        %v2879 = vunpack.c.l.b16 %v2693
        %v2880 = vunpack.c.l.b16 %v2694
        %v2881 = vunpack.c.l.b16 %v2695
        %v2882 = vunpack.c.l.b16 %v2696
        %v2883 = vunpack.c.l.b16 %v2697
        %v2884 = vunpack.c.l.b16 %v2698
        %v2885 = vunpack.c.l.b16 %v2699
        %v2886 = vunpack.c.l.b16 %v2700
        %v2887 = vunpack.c.l.b16 %v2701
        %v2888 = vunpack.c.l.b16 %v2702
        %v2889 = vunpack.c.l.b16 %v2703
        %v2890 = vunpack.c.l.b16 %v2704
        %v2891 = vunpack.c.l.b16 %v2705
        %v2892 = vunpack.c.l.b16 %v2706
        %v2893 = vunpack.c.l.b16 %v2707
        %v2894 = vunpack.c.l.b16 %v2708
        %v2895 = vpack.c.b16 %v2880, %v2879
        %v2896 = vpack.c.b16 %v2882, %v2881
        %v2897 = vpack.c.b16 %v2884, %v2883
        %v2898 = vpack.c.b16 %v2886, %v2885
        %v2899 = vpack.c.b16 %v2888, %v2887
        %v2900 = vpack.c.b16 %v2890, %v2889
        %v2901 = vpack.c.b16 %v2892, %v2891
        %v2902 = vpack.c.b16 %v2894, %v2893
        %2911 = vmatpush.bf16.msra.mxu0 %v2902
        %2912 = vmatpush.bf16.msra.mxu0 %v2901
        %2913 = vmatpush.bf16.msra.mxu0 %v2900
        %2914 = vmatpush.bf16.msra.mxu0 %v2899
        %2915 = vmatpush.bf16.msra.mxu0 %v2898
        %2916 = vmatpush.bf16.msra.mxu0 %v2897
        %2917 = vmatpush.bf16.msra.mxu0 %v2896
        %2918 = vmatpush.bf16.msra.mxu0 %v2895
        %2919 = vmatmul.bf16.gmra.mxu0 %v2676
        %v2920 = vpop.f32.mrf.mxu0
        %v2921 = vadd.f32 %v2784, %v2920
        %v2922 = vpop.f32.mrf.mxu0
        %v2923 = vadd.f32 %v2786, %v2922
        %2924 = vmatmul.bf16.gmra.mxu0 %v2677
        %v2925 = vpop.f32.mrf.mxu0
        %v2926 = vadd.f32 %v2789, %v2925
        %v2927 = vpop.f32.mrf.mxu0
        %v2928 = vadd.f32 %v2791, %v2927
        %2929 = vmatmul.bf16.gmra.mxu0 %v2678
        %v2930 = vpop.f32.mrf.mxu0
        %v2931 = vadd.f32 %v2794, %v2930
        %v2932 = vpop.f32.mrf.mxu0
        %v2933 = vadd.f32 %v2796, %v2932
        %2934 = vmatmul.bf16.gmra.mxu0 %v2679
        %v2935 = vpop.f32.mrf.mxu0
        %v2936 = vadd.f32 %v2799, %v2935
        %v2937 = vpop.f32.mrf.mxu0
        %v2938 = vadd.f32 %v2801, %v2937
        %2939 = vmatmul.bf16.gmra.mxu0 %v2680
        %v2940 = vpop.f32.mrf.mxu0
        %v2941 = vadd.f32 %v2804, %v2940
        %v2942 = vpop.f32.mrf.mxu0
        %v2943 = vadd.f32 %v2806, %v2942
        %2944 = vmatmul.bf16.gmra.mxu0 %v2681
        %v2945 = vpop.f32.mrf.mxu0
        %v2946 = vadd.f32 %v2809, %v2945
        %v2947 = vpop.f32.mrf.mxu0
        %v2948 = vadd.f32 %v2811, %v2947
        %2949 = vmatmul.bf16.gmra.mxu0 %v2682
        %v2950 = vpop.f32.mrf.mxu0
        %v2951 = vadd.f32 %v2814, %v2950
        %v2952 = vpop.f32.mrf.mxu0
        %v2953 = vadd.f32 %v2816, %v2952
        %2954 = vmatmul.bf16.gmra.mxu0 %v2683
        %v2955 = vpop.f32.mrf.mxu0
        %v2956 = vadd.f32 %v2819, %v2955
        %v2957 = vpop.f32.mrf.mxu0
        %v2958 = vadd.f32 %v2821, %v2957
        %2959 = vmatmul.bf16.gmra.mxu0 %v2684
        %v2960 = vpop.f32.mrf.mxu0
        %v2961 = vadd.f32 %v2824, %v2960
        %v2962 = vpop.f32.mrf.mxu0
        %v2963 = vadd.f32 %v2826, %v2962
        %2964 = vmatmul.bf16.gmra.mxu0 %v2685
        %v2965 = vpop.f32.mrf.mxu0
        %v2966 = vadd.f32 %v2829, %v2965
        %v2967 = vpop.f32.mrf.mxu0
        %v2968 = vadd.f32 %v2831, %v2967
        %2969 = vmatmul.bf16.gmra.mxu0 %v2686
        %v2970 = vpop.f32.mrf.mxu0
        %v2971 = vadd.f32 %v2834, %v2970
        %v2972 = vpop.f32.mrf.mxu0
        %v2973 = vadd.f32 %v2836, %v2972
        %2974 = vmatmul.bf16.gmra.mxu0 %v2687
        %v2975 = vpop.f32.mrf.mxu0
        %v2976 = vadd.f32 %v2839, %v2975
        %v2977 = vpop.f32.mrf.mxu0
        %v2978 = vadd.f32 %v2841, %v2977
        %2979 = vmatmul.bf16.gmra.mxu0 %v2688
        %v2980 = vpop.f32.mrf.mxu0
        %v2981 = vadd.f32 %v2844, %v2980
        %v2982 = vpop.f32.mrf.mxu0
        %v2983 = vadd.f32 %v2846, %v2982
        %2984 = vmatmul.bf16.gmra.mxu0 %v2689
        %v2985 = vpop.f32.mrf.mxu0
        %v2986 = vadd.f32 %v2849, %v2985
        %v2987 = vpop.f32.mrf.mxu0
        %v2988 = vadd.f32 %v2851, %v2987
        %2989 = vmatmul.bf16.gmra.mxu0 %v2690
        %v2990 = vpop.f32.mrf.mxu0
        %v2991 = vadd.f32 %v2854, %v2990
        %v2992 = vpop.f32.mrf.mxu0
        %v2993 = vadd.f32 %v2856, %v2992
        %2994 = vmatmul.bf16.gmra.mxu0 %v2691
        %v2995 = vpop.f32.mrf.mxu0
        %v2996 = vadd.f32 %v2859, %v2995
        %v2997 = vpop.f32.mrf.mxu0
        %v2998 = vadd.f32 %v2861, %v2997
        %2999 = vdwg.mxu0
        %v3000 = vld [vmem:[#allocation13 + $0x2] sm:$0x1]
        %v3001 = vperm.slane %v3000, 0
        %v3002 = vadd.f32 %v2921, %v3001
        %v3003 = vadd.f32 %v2923, %v3001
        %v3004 = vadd.f32 %v2926, %v3001
        %v3005 = vadd.f32 %v2928, %v3001
        %v3006 = vadd.f32 %v2931, %v3001
        %v3007 = vadd.f32 %v2933, %v3001
        %v3008 = vadd.f32 %v2936, %v3001
        %v3009 = vadd.f32 %v2938, %v3001
        %v3010 = vadd.f32 %v2941, %v3001
        %v3011 = vadd.f32 %v2943, %v3001
        %v3012 = vadd.f32 %v2946, %v3001
        %v3013 = vadd.f32 %v2948, %v3001
        %v3014 = vadd.f32 %v2951, %v3001
        %v3015 = vadd.f32 %v2953, %v3001
        %v3016 = vadd.f32 %v2956, %v3001
        %v3017 = vadd.f32 %v2958, %v3001
        %v3018 = vadd.f32 %v2961, %v3001
        %v3019 = vadd.f32 %v2963, %v3001
        %v3020 = vadd.f32 %v2966, %v3001
        %v3021 = vadd.f32 %v2968, %v3001
        %v3022 = vadd.f32 %v2971, %v3001
        %v3023 = vadd.f32 %v2973, %v3001
        %v3024 = vadd.f32 %v2976, %v3001
        %v3025 = vadd.f32 %v2978, %v3001
        %v3026 = vadd.f32 %v2981, %v3001
        %v3027 = vadd.f32 %v2983, %v3001
        %v3028 = vadd.f32 %v2986, %v3001
        %v3029 = vadd.f32 %v2988, %v3001
        %v3030 = vadd.f32 %v2991, %v3001
        %v3031 = vadd.f32 %v2993, %v3001
        %v3032 = vadd.f32 %v2996, %v3001
        %v3033 = vadd.f32 %v2998, %v3001
        %v3034 = vmax.f32 %v3002, 0.0
        %v3035 = vmax.f32 %v3003, 0.0
        %v3036 = vmax.f32 %v3004, 0.0
        %v3037 = vmax.f32 %v3005, 0.0
        %v3038 = vmax.f32 %v3006, 0.0
        %v3039 = vmax.f32 %v3007, 0.0
        %v3040 = vmax.f32 %v3008, 0.0
        %v3041 = vmax.f32 %v3009, 0.0
        %v3042 = vmax.f32 %v3010, 0.0
        %v3043 = vmax.f32 %v3011, 0.0
        %v3044 = vmax.f32 %v3012, 0.0
        %v3045 = vmax.f32 %v3013, 0.0
        %v3046 = vmax.f32 %v3014, 0.0
        %v3047 = vmax.f32 %v3015, 0.0
        %v3048 = vmax.f32 %v3016, 0.0
        %v3049 = vmax.f32 %v3017, 0.0
        %v3050 = vmax.f32 %v3018, 0.0
        %v3051 = vmax.f32 %v3019, 0.0
        %v3052 = vmax.f32 %v3020, 0.0
        %v3053 = vmax.f32 %v3021, 0.0
        %v3054 = vmax.f32 %v3022, 0.0
        %v3055 = vmax.f32 %v3023, 0.0
        %v3056 = vmax.f32 %v3024, 0.0
        %v3057 = vmax.f32 %v3025, 0.0
        %v3058 = vmax.f32 %v3026, 0.0
        %v3059 = vmax.f32 %v3027, 0.0
        %v3060 = vmax.f32 %v3028, 0.0
        %v3061 = vmax.f32 %v3029, 0.0
        %v3062 = vmax.f32 %v3030, 0.0
        %v3063 = vmax.f32 %v3031, 0.0
        %v3064 = vmax.f32 %v3032, 0.0
        %v3065 = vmax.f32 %v3033, 0.0
        %v3066 = vpack.c.bf16 %v3035, %v3034
        %v3067 = vpack.c.bf16 %v3037, %v3036
        %v3068 = vpack.c.bf16 %v3039, %v3038
        %v3069 = vpack.c.bf16 %v3041, %v3040
        %v3070 = vpack.c.bf16 %v3043, %v3042
        %v3071 = vpack.c.bf16 %v3045, %v3044
        %v3072 = vpack.c.bf16 %v3047, %v3046
        %v3073 = vpack.c.bf16 %v3049, %v3048
        %v3074 = vpack.c.bf16 %v3051, %v3050
        %v3075 = vpack.c.bf16 %v3053, %v3052
        %v3076 = vpack.c.bf16 %v3055, %v3054
        %v3077 = vpack.c.bf16 %v3057, %v3056
        %v3078 = vpack.c.bf16 %v3059, %v3058
        %v3079 = vpack.c.bf16 %v3061, %v3060
        %v3080 = vpack.c.bf16 %v3063, %v3062
        %v3081 = vpack.c.bf16 %v3065, %v3064
        %s3082 = scalar_lea.vmem [#allocation11], 128
        %v3083 = vld [vmem:[%s3082] sm:$0xf]
        %v3084 = vld [vmem:[%s3082 + $0x4] sm:$0xf]
        %v3085 = vld [vmem:[%s3082 + $0x8] sm:$0xf]
        %v3086 = vld [vmem:[%s3082 + $0xc] sm:$0xf]
        %v3087 = vld [vmem:[%s3082 + $0x10] sm:$0xf]
        %v3088 = vld [vmem:[%s3082 + $0x14] sm:$0xf]
        %v3089 = vld [vmem:[%s3082 + $0x18] sm:$0xf]
        %v3090 = vld [vmem:[%s3082 + $0x1c] sm:$0xf]
        %v3091 = vld [vmem:[%s3082 + $0x20] sm:$0xf]
        %v3092 = vld [vmem:[%s3082 + $0x24] sm:$0xf]
        %v3093 = vld [vmem:[%s3082 + $0x28] sm:$0xf]
        %v3094 = vld [vmem:[%s3082 + $0x2c] sm:$0xf]
        %v3095 = vld [vmem:[%s3082 + $0x30] sm:$0xf]
        %v3096 = vld [vmem:[%s3082 + $0x34] sm:$0xf]
        %v3097 = vld [vmem:[%s3082 + $0x38] sm:$0xf]
        %v3098 = vld [vmem:[%s3082 + $0x3c] sm:$0xf]
        %v3099 = vld [vmem:[#allocation13 + $0x5] sm:$0x1]
        %v3100 = vperm.slane %v3099, 0
        %v3117 = vunpack.c.l.b16 %v3083
        %v3118 = vunpack.c.l.b16 %v3084
        %v3119 = vunpack.c.l.b16 %v3085
        %v3120 = vunpack.c.l.b16 %v3086
        %v3121 = vunpack.c.l.b16 %v3087
        %v3122 = vunpack.c.l.b16 %v3088
        %v3123 = vunpack.c.l.b16 %v3089
        %v3124 = vunpack.c.l.b16 %v3090
        %v3125 = vunpack.c.l.b16 %v3091
        %v3126 = vunpack.c.l.b16 %v3092
        %v3127 = vunpack.c.l.b16 %v3093
        %v3128 = vunpack.c.l.b16 %v3094
        %v3129 = vunpack.c.l.b16 %v3095
        %v3130 = vunpack.c.l.b16 %v3096
        %v3131 = vunpack.c.l.b16 %v3097
        %v3132 = vunpack.c.l.b16 %v3098
        %v3133 = vpack.c.b16 %v3118, %v3117
        %v3134 = vpack.c.b16 %v3120, %v3119
        %v3135 = vpack.c.b16 %v3122, %v3121
        %v3136 = vpack.c.b16 %v3124, %v3123
        %v3137 = vpack.c.b16 %v3126, %v3125
        %v3138 = vpack.c.b16 %v3128, %v3127
        %v3139 = vpack.c.b16 %v3130, %v3129
        %v3140 = vpack.c.b16 %v3132, %v3131
        %3149 = vmatpush.bf16.msra.mxu0 %v3140
        %3150 = vmatpush.bf16.msra.mxu0 %v3139
        %3151 = vmatpush.bf16.msra.mxu0 %v3138
        %3152 = vmatpush.bf16.msra.mxu0 %v3137
        %3153 = vmatpush.bf16.msra.mxu0 %v3136
        %3154 = vmatpush.bf16.msra.mxu0 %v3135
        %3155 = vmatpush.bf16.msra.mxu0 %v3134
        %3156 = vmatpush.bf16.msra.mxu0 %v3133
        %3157 = vmatmul.bf16.gmra.mxu0 %v3066
        %v3158 = vpop.f32.mrf.mxu0
        %v3159 = vadd.f32 %v3100, %v3158
        %v3160 = vpop.f32.mrf.mxu0
        %v3161 = vadd.f32 %v3100, %v3160
        %3162 = vmatmul.bf16.gmra.mxu0 %v3067
        %v3163 = vpop.f32.mrf.mxu0
        %v3164 = vadd.f32 %v3100, %v3163
        %v3165 = vpop.f32.mrf.mxu0
        %v3166 = vadd.f32 %v3100, %v3165
        %3167 = vmatmul.bf16.gmra.mxu0 %v3068
        %v3168 = vpop.f32.mrf.mxu0
        %v3169 = vadd.f32 %v3100, %v3168
        %v3170 = vpop.f32.mrf.mxu0
        %v3171 = vadd.f32 %v3100, %v3170
        %3172 = vmatmul.bf16.gmra.mxu0 %v3069
        %v3173 = vpop.f32.mrf.mxu0
        %v3174 = vadd.f32 %v3100, %v3173
        %v3175 = vpop.f32.mrf.mxu0
        %v3176 = vadd.f32 %v3100, %v3175
        %3177 = vmatmul.bf16.gmra.mxu0 %v3070
        %v3178 = vpop.f32.mrf.mxu0
        %v3179 = vadd.f32 %v3100, %v3178
        %v3180 = vpop.f32.mrf.mxu0
        %v3181 = vadd.f32 %v3100, %v3180
        %3182 = vmatmul.bf16.gmra.mxu0 %v3071
        %v3183 = vpop.f32.mrf.mxu0
        %v3184 = vadd.f32 %v3100, %v3183
        %v3185 = vpop.f32.mrf.mxu0
        %v3186 = vadd.f32 %v3100, %v3185
        %3187 = vmatmul.bf16.gmra.mxu0 %v3072
        %v3188 = vpop.f32.mrf.mxu0
        %v3189 = vadd.f32 %v3100, %v3188
        %v3190 = vpop.f32.mrf.mxu0
        %v3191 = vadd.f32 %v3100, %v3190
        %3192 = vmatmul.bf16.gmra.mxu0 %v3073
        %v3193 = vpop.f32.mrf.mxu0
        %v3194 = vadd.f32 %v3100, %v3193
        %v3195 = vpop.f32.mrf.mxu0
        %v3196 = vadd.f32 %v3100, %v3195
        %3197 = vmatmul.bf16.gmra.mxu0 %v3074
        %v3198 = vpop.f32.mrf.mxu0
        %v3199 = vadd.f32 %v3100, %v3198
        %v3200 = vpop.f32.mrf.mxu0
        %v3201 = vadd.f32 %v3100, %v3200
        %3202 = vmatmul.bf16.gmra.mxu0 %v3075
        %v3203 = vpop.f32.mrf.mxu0
        %v3204 = vadd.f32 %v3100, %v3203
        %v3205 = vpop.f32.mrf.mxu0
        %v3206 = vadd.f32 %v3100, %v3205
        %3207 = vmatmul.bf16.gmra.mxu0 %v3076
        %v3208 = vpop.f32.mrf.mxu0
        %v3209 = vadd.f32 %v3100, %v3208
        %v3210 = vpop.f32.mrf.mxu0
        %v3211 = vadd.f32 %v3100, %v3210
        %3212 = vmatmul.bf16.gmra.mxu0 %v3077
        %v3213 = vpop.f32.mrf.mxu0
        %v3214 = vadd.f32 %v3100, %v3213
        %v3215 = vpop.f32.mrf.mxu0
        %v3216 = vadd.f32 %v3100, %v3215
        %3217 = vmatmul.bf16.gmra.mxu0 %v3078
        %v3218 = vpop.f32.mrf.mxu0
        %v3219 = vadd.f32 %v3100, %v3218
        %v3220 = vpop.f32.mrf.mxu0
        %v3221 = vadd.f32 %v3100, %v3220
        %3222 = vmatmul.bf16.gmra.mxu0 %v3079
        %v3223 = vpop.f32.mrf.mxu0
        %v3224 = vadd.f32 %v3100, %v3223
        %v3225 = vpop.f32.mrf.mxu0
        %v3226 = vadd.f32 %v3100, %v3225
        %3227 = vmatmul.bf16.gmra.mxu0 %v3080
        %v3228 = vpop.f32.mrf.mxu0
        %v3229 = vadd.f32 %v3100, %v3228
        %v3230 = vpop.f32.mrf.mxu0
        %v3231 = vadd.f32 %v3100, %v3230
        %3232 = vmatmul.bf16.gmra.mxu0 %v3081
        %v3233 = vpop.f32.mrf.mxu0
        %v3234 = vadd.f32 %v3100, %v3233
        %v3235 = vpop.f32.mrf.mxu0
        %v3236 = vadd.f32 %v3100, %v3235
        %3237 = vdwg.mxu0
        %v3238 = vld [vmem:[%s500] sm:$0xff]
        %v3239 = vld [vmem:[%s500 + $0x8] sm:$0xff]
        %v3240 = vpack.c.bf16 %v3161, %v3159
        %v3241 = vpack.c.bf16 %v3166, %v3164
        %v3242 = vpack.c.bf16 %v3171, %v3169
        %v3243 = vpack.c.bf16 %v3176, %v3174
        %v3244 = vpack.c.bf16 %v3181, %v3179
        %v3245 = vpack.c.bf16 %v3186, %v3184
        %v3246 = vpack.c.bf16 %v3191, %v3189
        %v3247 = vpack.c.bf16 %v3196, %v3194
        %v3248 = vpack.c.bf16 %v3201, %v3199
        %v3249 = vpack.c.bf16 %v3206, %v3204
        %v3250 = vpack.c.bf16 %v3211, %v3209
        %v3251 = vpack.c.bf16 %v3216, %v3214
        %v3252 = vpack.c.bf16 %v3221, %v3219
        %v3253 = vpack.c.bf16 %v3226, %v3224
        %v3254 = vpack.c.bf16 %v3231, %v3229
        %v3255 = vpack.c.bf16 %v3236, %v3234
        %v3258 = vunpack.c.l.b16 %v3238
        %v3259 = vunpack.c.h.b16 %v3238
        %v3260 = vunpack.c.l.b16 %v3239
        %v3261 = vunpack.c.h.b16 %v3239
        %v3262 = vpack.c.b16 %v3260, %v3258
        %v3263 = vpack.c.b16 %v3261, %v3259
        %3266 = vmatpush.bf16.msra.mxu0 %v3247
        %3267 = vmatpush.bf16.msra.mxu0 %v3246
        %3268 = vmatpush.bf16.msra.mxu0 %v3245
        %3269 = vmatpush.bf16.msra.mxu0 %v3244
        %3270 = vmatpush.bf16.msra.mxu0 %v3243
        %3271 = vmatpush.bf16.msra.mxu0 %v3242
        %3272 = vmatpush.bf16.msra.mxu0 %v3241
        %3273 = vmatpush.bf16.msra.mxu0 %v3240
        %3274 = vmatmul.bf16.gmra.mxu0 %v3262
        %v3275 = vpop.f32.mrf.mxu0
        %v3276 = vadd.f32 0.0, %v3275
        %v3277 = vpop.f32.mrf.mxu0
        %v3278 = vadd.f32 0.0, %v3277
        %3279 = vdwg.mxu0
        %3280 = vmatpush.bf16.msra.mxu0 %v3255
        %3281 = vmatpush.bf16.msra.mxu0 %v3254
        %3282 = vmatpush.bf16.msra.mxu0 %v3253
        %3283 = vmatpush.bf16.msra.mxu0 %v3252
        %3284 = vmatpush.bf16.msra.mxu0 %v3251
        %3285 = vmatpush.bf16.msra.mxu0 %v3250
        %3286 = vmatpush.bf16.msra.mxu0 %v3249
        %3287 = vmatpush.bf16.msra.mxu0 %v3248
        %3288 = vmatmul.bf16.gmra.mxu0 %v3263
        %v3289 = vpop.f32.mrf.mxu0
        %v3290 = vadd.f32 %v3276, %v3289
        %v3291 = vpop.f32.mrf.mxu0
        %v3292 = vadd.f32 %v3278, %v3291
        %3293 = vdwg.mxu0
        %v3294 = vpack.c.bf16 %v3292, %v3290
        %v3295 = vld [vmem:[#allocation16] sm:$0xf]
        %v3296 = vld [vmem:[#allocation16 + $0x4] sm:$0xf]
        %v3297 = vld [vmem:[#allocation16 + $0x8] sm:$0xf]
        %v3298 = vld [vmem:[#allocation16 + $0xc] sm:$0xf]
        %v3299 = vld [vmem:[#allocation16 + $0x10] sm:$0xf]
        %v3300 = vld [vmem:[#allocation16 + $0x14] sm:$0xf]
        %v3301 = vld [vmem:[#allocation16 + $0x18] sm:$0xf]
        %v3302 = vld [vmem:[#allocation16 + $0x1c] sm:$0xf]
        %v3303 = vld [vmem:[#allocation16 + $0x20] sm:$0xf]
        %v3304 = vld [vmem:[#allocation16 + $0x24] sm:$0xf]
        %v3305 = vld [vmem:[#allocation16 + $0x28] sm:$0xf]
        %v3306 = vld [vmem:[#allocation16 + $0x2c] sm:$0xf]
        %v3307 = vld [vmem:[#allocation16 + $0x30] sm:$0xf]
        %v3308 = vld [vmem:[#allocation16 + $0x34] sm:$0xf]
        %v3309 = vld [vmem:[#allocation16 + $0x38] sm:$0xf]
        %v3310 = vld [vmem:[#allocation16 + $0x3c] sm:$0xf]
        %v3311 = vld [vmem:[#allocation13 + $0x6] sm:$0x1]
        %v3312 = vperm.slane %v3311, 0
        %v3329 = vunpack.c.l.b16 %v3295
        %v3330 = vunpack.c.l.b16 %v3296
        %v3331 = vunpack.c.l.b16 %v3297
        %v3332 = vunpack.c.l.b16 %v3298
        %v3333 = vunpack.c.l.b16 %v3299
        %v3334 = vunpack.c.l.b16 %v3300
        %v3335 = vunpack.c.l.b16 %v3301
        %v3336 = vunpack.c.l.b16 %v3302
        %v3337 = vunpack.c.l.b16 %v3303
        %v3338 = vunpack.c.l.b16 %v3304
        %v3339 = vunpack.c.l.b16 %v3305
        %v3340 = vunpack.c.l.b16 %v3306
        %v3341 = vunpack.c.l.b16 %v3307
        %v3342 = vunpack.c.l.b16 %v3308
        %v3343 = vunpack.c.l.b16 %v3309
        %v3344 = vunpack.c.l.b16 %v3310
        %v3345 = vpack.c.b16 %v3330, %v3329
        %v3346 = vpack.c.b16 %v3332, %v3331
        %v3347 = vpack.c.b16 %v3334, %v3333
        %v3348 = vpack.c.b16 %v3336, %v3335
        %v3349 = vpack.c.b16 %v3338, %v3337
        %v3350 = vpack.c.b16 %v3340, %v3339
        %v3351 = vpack.c.b16 %v3342, %v3341
        %v3352 = vpack.c.b16 %v3344, %v3343
        %3361 = vmatpush.bf16.msra.mxu0 %v3352
        %3362 = vmatpush.bf16.msra.mxu0 %v3351
        %3363 = vmatpush.bf16.msra.mxu0 %v3350
        %3364 = vmatpush.bf16.msra.mxu0 %v3349
        %3365 = vmatpush.bf16.msra.mxu0 %v3348
        %3366 = vmatpush.bf16.msra.mxu0 %v3347
        %3367 = vmatpush.bf16.msra.mxu0 %v3346
        %3368 = vmatpush.bf16.msra.mxu0 %v3345
        %3369 = vmatmul.bf16.gmra.mxu0 %v3294
        %v3370 = vpop.f32.mrf.mxu0
        %v3371 = vadd.f32 %v3312, %v3370
        %v3372 = vpop.f32.mrf.mxu0
        %v3373 = vadd.f32 %v3312, %v3372
        %3374 = vdwg.mxu0
        %3375 = vst [vmem:[%s555] sm:$0xff] %v3371
        %3376 = vst [vmem:[%s555 + $0x8] sm:$0xff] %v3373
        %s3377 = sand.u32 %s251, 1
        %s3378 = scalar_lea.sflag [#allocation4], %s3377
        %s3379 = sand.u32 %s251, 1
        %s3380 = smul.addr %s3379, 16
        %s3381 = scalar_lea.vmem [#allocation17], %s3380
        // Predicated region
        $region93: #{tpu_custom_call.1} parent=55 // pred_check
          %p3382 = pneg %p261
        $region94: #{tpu_custom_call.1} parent=55 // pred_check_branch
          %3384 = sbr.rel (%p3382) target = $region96
        $region95: #{tpu_custom_call.1} parent=55 // pred_region
          %3386 = vsyncadd %s3378, 0
          %s3387 = smul.addr %s34, 2
          %s3388 = smul.addr %s3387, 8
          %s3389 = scalar_lea.hbm %s9, %s3388
          %s3390 = sshll.u32 %s3381, 4
          %s3391 = int_to_ptr.vmem [resolvable:$true] %s3390
          %s3392 = sshll.u32 %s3389, 4
          %s3393 = int_to_ptr.hbm [resolvable:$true] %s3392
          %3398 = dma.vmem_to_hbm [thread:$0]  %s3391, 256, %s3393, %s3378, 128, 128, 8
        $region96: #{tpu_custom_call.1} parent=55 // pred_fallthru
          _
      $region56: #{tpu_custom_call.1} parent=5 // pred_fallthru
        _
      %p3399 = scmp.le.s32.totalorder 2, %s29
      // Predicated region
      $region97: #{tpu_custom_call.1} parent=5 // pred_check
        %p3400 = pneg %p3399
      $region98: #{tpu_custom_call.1} parent=5 // pred_check_branch
        %3402 = sbr.rel (%p3400) target = $region100
      $region99: #{tpu_custom_call.1} parent=5 // pred_region
        %s3403 = ssub.s32 %s29, 2
        // Predicated region
        $region101: #{tpu_custom_call.1} parent=99 // pred_check
          %p3404 = pneg %p267
        $region102: #{tpu_custom_call.1} parent=99 // pred_check_branch
          %3406 = sbr.rel (%p3404) target = $region104
        $region103: #{tpu_custom_call.1} parent=99 // pred_region
          %s3407 = sand.u32 %s252, 1
          %s3408 = scalar_lea.sflag [#allocation4], %s3407
          %s3409 = sand.u32 %s252, 1
          %s3410 = smul.addr %s3409, 16
          %s3411 = scalar_lea.vmem [#allocation17], %s3410
          %3413 = dma.done %s3408, 256
        $region104: #{tpu_custom_call.1} parent=99 // pred_fallthru
          _
      $region100: #{tpu_custom_call.1} parent=5 // pred_fallthru
        _
    $region6: #{tpu_custom_call.1} parent=1 // loop_footer
      %s33 = sadd.s32 1, %s29
    $region7: #{tpu_custom_call.1} parent=1 // loop_footer_branch
      %28 = sbr.rel target = $region3
    $region8: #{tpu_custom_call.1} parent=1 // loop_exit
      _
    %3414 = vsyncpa [#allocation3], 1
    %s3415 = scalar_lea.sflag [#allocation3], 1
    %3416 = vsyncpa %s3415, 1
    %3417 = vsyncpa [#allocation6], 1
    %s3418 = scalar_lea.sflag [#allocation6], 1
    %3419 = vsyncpa %s3418, 1
    %3420 = vsyncpa [#allocation9], 1
    %3421 = vsyncpa [#allocation12], 1
    %3422 = vsyncpa [#allocation15], 1
    %s3423 = scalar_lea.sflag [#allocation15], 1
    %3424 = vsyncpa %s3423, 1
    %3425 = vsyncpa [#allocation4], 1
    %s3426 = scalar_lea.sflag [#allocation4], 1
    %3427 = vsyncpa %s3426, 1

</llo_original>
